<compile_context>
chip_gen: v7x
topology: tpu7x:2x2x1
jax: 0.10.0
libtpu: 0.0.40
codegen_flags: <defaults>
</compile_context>

<pallas_src>
import math
from functools import partial

import jax
import jax.numpy as jnp
from jax import lax
from jax.experimental import pallas as pl
from jax.experimental.pallas import tpu as pltpu

_NEG_INF = -1.0e30
_LN_EPS = 1e-5


# ----------------------------------------------------------------------------
# helpers
# ----------------------------------------------------------------------------
def _round_up(x, m):
    return ((x + m - 1) // m) * m


def _pad2(a, rows, cols):
    r, c = a.shape
    if r == rows and c == cols:
        return a
    return jnp.pad(a, ((0, rows - r), (0, cols - c)))


def _vmem_capacity_bytes():
    try:
        return int(pltpu.get_tpu_info().vmem_capacity_bytes)
    except Exception:
        return 64 * 1024 * 1024          # conservative: v7x per-core VMEM


def _vmem_limit(working_set_bytes):
    cap = _vmem_capacity_bytes()
    return int(min(max(2 * working_set_bytes, 32 * 1024 * 1024),
                   (3 * cap) // 4))


# ----------------------------------------------------------------------------
# Tiled matmul (+ bias + optional activation) kernel
# ----------------------------------------------------------------------------
def _matmul_kernel(x_ref, w_ref, b_ref, o_ref, acc_ref, *, activation):
    @pl.when(pl.program_id(2) == 0)
    def _init():
        acc_ref[...] = jnp.zeros_like(acc_ref)

    acc_ref[...] += jnp.dot(x_ref[...], w_ref[...],
                            preferred_element_type=jnp.float32)

    @pl.when(pl.program_id(2) == pl.num_programs(2) - 1)
    def _store():
        out = acc_ref[...] + b_ref[...]
        if activation == "gelu":
            out = jax.nn.gelu(out, approximate=True)
        elif activation == "relu":
            out = jnp.maximum(out, 0.0)
        o_ref[...] = out.astype(o_ref.dtype)


def linear_pallas(x2d, w, b, activation=None, *, out_dtype=jnp.float32,
                  mxu_dtype=jnp.bfloat16, tm=512, tk=512, tn=512):
    """out = act(x2d @ w + b).  MXU operands cast to mxu_dtype on the host,
    f32 accumulation, bias/activation fused in the epilogue."""
    M, K = x2d.shape
    _, N = w.shape
    if mxu_dtype is not None:
        x2d = x2d.astype(mxu_dtype)
        w = w.astype(mxu_dtype)
    TM = tm if M > tm else _round_up(M, 8)
    TK = tk if K > tk else K          # full-extent K block: no padding to 128
    TN = tn if N > tn else N          # full-extent N block: no padding to 128
    Mp, Kp, Np = _round_up(M, TM), _round_up(K, TK), _round_up(N, TN)
    xp = _pad2(x2d, Mp, Kp)
    wp = _pad2(w, Kp, Np)
    bp = _pad2(b.reshape(1, N).astype(jnp.float32), 1, Np)
    grid = (Mp // TM, Np // TN, Kp // TK)

    bx = xp.dtype.itemsize
    bo = jnp.dtype(out_dtype).itemsize
    ws = 2 * (TM * TK * bx + TK * TN * bx + TN * 4 + TM * TN * bo) + TM * TN * 4

    out = pl.pallas_call(
        partial(_matmul_kernel, activation=activation),
        out_shape=jax.ShapeDtypeStruct((Mp, Np), out_dtype),
        grid=grid,
        in_specs=[
            pl.BlockSpec((TM, TK), lambda i, j, k: (i, k)),
            pl.BlockSpec((TK, TN), lambda i, j, k: (k, j)),
            pl.BlockSpec((1, TN), lambda i, j, k: (0, j)),
        ],
        out_specs=pl.BlockSpec((TM, TN), lambda i, j, k: (i, j)),
        scratch_shapes=[pltpu.VMEM((TM, TN), jnp.float32)],
        compiler_params=pltpu.CompilerParams(
            dimension_semantics=("parallel", "parallel", "arbitrary"),
            vmem_limit_bytes=_vmem_limit(ws)),
        cost_estimate=pl.CostEstimate(
            flops=2 * Mp * Kp * Np,
            transcendentals=Mp * Np if activation == "gelu" else 0,
            bytes_accessed=bx * (Mp * Kp + Kp * Np) + bo * Mp * Np),
    )(xp, wp, bp)
    if (Mp, Np) != (M, N):
        out = out[:M, :N]
    return out


# ----------------------------------------------------------------------------
# Tiled matmul with residual-add + LayerNorm fused into the epilogue
# (requires the N axis to be a single full-extent block)
# ----------------------------------------------------------------------------
def _matmul_res_ln_kernel(x_ref, w_ref, b_ref, r_ref, g_ref, be_ref,
                          o_ref, acc_ref, *, eps):
    @pl.when(pl.program_id(1) == 0)
    def _init():
        acc_ref[...] = jnp.zeros_like(acc_ref)

    acc_ref[...] += jnp.dot(x_ref[...], w_ref[...],
                            preferred_element_type=jnp.float32)

    @pl.when(pl.program_id(1) == pl.num_programs(1) - 1)
    def _store():
        h = acc_ref[...] + b_ref[...] + r_ref[...]
        mean = jnp.mean(h, axis=-1, keepdims=True)
        c = h - mean
        var = jnp.mean(c * c, axis=-1, keepdims=True)
        out = c * lax.rsqrt(var + eps) * g_ref[...] + be_ref[...]
        o_ref[...] = out.astype(o_ref.dtype)


def linear_residual_ln_pallas(x2d, w, b, res2d, gamma, beta, *, eps=_LN_EPS,
                              out_dtype=jnp.float32, mxu_dtype=jnp.bfloat16,
                              tm=512, tk=512):
    """out = LayerNorm(res2d + x2d @ w + b), all fused into one kernel."""
    M, K = x2d.shape
    _, N = w.shape
    if mxu_dtype is not None:
        x2d = x2d.astype(mxu_dtype)
        w = w.astype(mxu_dtype)
    TM = tm if M > tm else _round_up(M, 8)
    TK = tk if K > tk else K
    Mp, Kp = _round_up(M, TM), _round_up(K, TK)
    xp = _pad2(x2d, Mp, Kp)
    wp = _pad2(w, Kp, N)
    rp = _pad2(res2d.astype(jnp.float32), Mp, N)
    b2 = b.reshape(1, N).astype(jnp.float32)
    g2 = gamma.reshape(1, N).astype(jnp.float32)
    be2 = beta.reshape(1, N).astype(jnp.float32)
    grid = (Mp // TM, Kp // TK)

    bx = xp.dtype.itemsize
    bo = jnp.dtype(out_dtype).itemsize
    ws = 2 * (TM * TK * bx + TK * N * bx + TM * N * 4 + 3 * N * 4
              + TM * N * bo) + TM * N * 4

    out = pl.pallas_call(
        partial(_matmul_res_ln_kernel, eps=eps),
        out_shape=jax.ShapeDtypeStruct((Mp, N), out_dtype),
        grid=grid,
        in_specs=[
            pl.BlockSpec((TM, TK), lambda i, k: (i, k)),
            pl.BlockSpec((TK, N), lambda i, k: (k, 0)),
            pl.BlockSpec((1, N), lambda i, k: (0, 0)),
            pl.BlockSpec((TM, N), lambda i, k: (i, 0)),
            pl.BlockSpec((1, N), lambda i, k: (0, 0)),
            pl.BlockSpec((1, N), lambda i, k: (0, 0)),
        ],
        out_specs=pl.BlockSpec((TM, N), lambda i, k: (i, 0)),
        scratch_shapes=[pltpu.VMEM((TM, N), jnp.float32)],
        compiler_params=pltpu.CompilerParams(
            dimension_semantics=("parallel", "arbitrary"),
            vmem_limit_bytes=_vmem_limit(ws)),
        cost_estimate=pl.CostEstimate(
            flops=2 * Mp * Kp * N + 8 * Mp * N,
            transcendentals=Mp,
            bytes_accessed=bx * (Mp * Kp + Kp * N) + 4 * 2 * Mp * N),
    )(xp, wp, b2, rp, g2, be2)
    if Mp != M:
        out = out[:M]
    return out


# ----------------------------------------------------------------------------
# Flash-style multi-head attention (no mask, dropout=0), no host transpose
# ----------------------------------------------------------------------------
def _flash_attention_kernel(q_ref, kv_ref, o_ref, m_sc, l_sc, acc_sc, *,
                            n_heads, d_head, scale, t_actual, kv_tile,
                            need_mask):
    kv_idx = pl.program_id(2)
    d_model = n_heads * d_head

    @pl.when(kv_idx == 0)
    def _init():
        m_sc[...] = jnp.full(m_sc.shape, _NEG_INF, jnp.float32)
        l_sc[...] = jnp.zeros_like(l_sc)
        acc_sc[...] = jnp.zeros_like(acc_sc)

    if need_mask:
        col = (lax.broadcasted_iota(jnp.int32, (1, kv_tile), 1)
               + kv_idx * kv_tile)
        col_ok = col < t_actual

    # Static unroll over heads; every operand is a 2-D lane slice of the
    # (rows, 3*d_model) q / kv blocks -> plain MXU matmuls, no transposes.
    for h in range(n_heads):
        off = h * d_head
        q_h = q_ref[0, :, off:off + d_head]                            # (tL, dh)
        k_h = kv_ref[0, :, d_model + off:d_model + off + d_head]       # (tS, dh)
        v_h = kv_ref[0, :, 2 * d_model + off:2 * d_model + off + d_head]

        s = lax.dot_general(q_h, k_h, (((1,), (1,)), ((), ())),
                            preferred_element_type=jnp.float32) * scale
        if need_mask:
            s = jnp.where(col_ok, s, _NEG_INF)

        m_prev = m_sc[:, h:h + 1]
        m_new = jnp.maximum(m_prev, jnp.max(s, axis=-1, keepdims=True))
        alpha = jnp.exp(m_prev - m_new)
        p = jnp.exp(s - m_new)
        l_sc[:, h:h + 1] = (alpha * l_sc[:, h:h + 1]
                            + jnp.sum(p, axis=-1, keepdims=True))
        acc_sc[:, off:off + d_head] = (
            alpha * acc_sc[:, off:off + d_head]
            + jnp.dot(p.astype(v_h.dtype), v_h,          # bf16 PV matmul
                      preferred_element_type=jnp.float32))
        m_sc[:, h:h + 1] = m_new

    @pl.when(kv_idx == pl.num_programs(2) - 1)
    def _finalize():
        inv = pl.reciprocal(l_sc[...], approx=True)      # (tL, H) on the EUP
        for h in range(n_heads):
            off = h * d_head
            o_ref[0, :, off:off + d_head] = (
                acc_sc[:, off:off + d_head] * inv[:, h:h + 1]
            ).astype(o_ref.dtype)


def _pick_attention_tile(T, d_model, n_heads):
    budget = min(20 * 1024 * 1024, (2 * _vmem_capacity_bytes()) // 5)
    tile = min(512, _round_up(T, 8))
    while tile > 64:
        ws = (4 * tile * 3 * d_model * 2      # double-buffered q & kv blocks
              + 2 * tile * d_model * 2        # double-buffered output block
              + tile * d_model * 4            # acc scratch
              + 2 * tile * n_heads * 4        # m / l scratch
              + 4 * tile * tile * 4)          # live s / p intermediates
        if ws <= budget:
            break
        tile = max(64, _round_up(tile // 2, 8))
    return tile


def flash_attention(qkv, n_heads, *, out_dtype=jnp.bfloat16, kv_buffers=2):
    """qkv: (B, T, 3*d_model) with columns [q heads | k heads | v heads].
    Returns the context in lane-dense (B, T, d_model) layout."""
    B, T, three_d = qkv.shape
    d_model = three_d // 3
    d_head = d_model // n_heads
    scale = 1.0 / math.sqrt(d_head)

    tile = _pick_attention_tile(T, d_model, n_heads)
    Tp = _round_up(T, tile)
    if Tp != T:                                   # padded KV masked in-kernel
        qkv = jnp.pad(qkv, ((0, 0), (0, Tp - T), (0, 0)))
    n_blocks = Tp // tile
    grid = (B, n_blocks, n_blocks)

    if kv_buffers > 2:          # deeper KV prefetch (e.g. v6e, exposed DMA)
        kv_spec = pl.BlockSpec((1, tile, three_d),
                               lambda b, ql, kv: (b, kv, 0),
                               pipeline_mode=pl.Buffered(kv_buffers))
    else:
        kv_spec = pl.BlockSpec((1, tile, three_d),
                               lambda b, ql, kv: (b, kv, 0))

    ws = (4 * tile * three_d * qkv.dtype.itemsize
          + 2 * tile * d_model * jnp.dtype(out_dtype).itemsize
          + tile * d_model * 4 + 2 * tile * n_heads * 4
          + 4 * tile * tile * 4)

    out = pl.pallas_call(
        partial(_flash_attention_kernel, n_heads=n_heads, d_head=d_head,
                scale=scale, t_actual=T, kv_tile=tile, need_mask=(Tp != T)),
        out_shape=jax.ShapeDtypeStruct((B, Tp, d_model), out_dtype),
        grid=grid,
        in_specs=[
            pl.BlockSpec((1, tile, three_d), lambda b, ql, kv: (b, ql, 0)),
            kv_spec,
        ],
        out_specs=pl.BlockSpec((1, tile, d_model),
                               lambda b, ql, kv: (b, ql, 0)),
        scratch_shapes=[
            pltpu.VMEM((tile, n_heads), jnp.float32),   # running max
            pltpu.VMEM((tile, n_heads), jnp.float32),   # running denom
            pltpu.VMEM((tile, d_model), jnp.float32),   # running numerator
        ],
        compiler_params=pltpu.CompilerParams(
            dimension_semantics=("parallel", "parallel", "arbitrary"),
            vmem_limit_bytes=_vmem_limit(ws)),
        cost_estimate=pl.CostEstimate(
            flops=4 * B * n_heads * Tp * Tp * d_head,
            transcendentals=B * n_heads * Tp * Tp,
            bytes_accessed=(qkv.dtype.itemsize * 2 * B * Tp * three_d
                            + jnp.dtype(out_dtype).itemsize * B * Tp * d_model)),
    )(qkv, qkv)
    if Tp != T:
        out = out[:, :T]
    return out


# ----------------------------------------------------------------------------
# Standalone LayerNorm (only for the final Encoder norm)
# ----------------------------------------------------------------------------
def _layer_norm_kernel(x_ref, g_ref, b_ref, o_ref, *, eps):
    h = x_ref[...].astype(jnp.float32)
    mean = jnp.mean(h, axis=-1, keepdims=True)
    c = h - mean
    var = jnp.mean(c * c, axis=-1, keepdims=True)
    o_ref[...] = (c * lax.rsqrt(var + eps) * g_ref[...] + b_ref[...]
                  ).astype(o_ref.dtype)


def layer_norm(x, gamma, beta, *, eps=_LN_EPS, tr=512):
    shape = x.shape
    D = shape[-1]
    x2 = x.reshape(-1, D)
    R = x2.shape[0]
    TR = tr if R > tr else _round_up(R, 8)
    Rp = _round_up(R, TR)
    xp = _pad2(x2, Rp, D)
    g2 = gamma.reshape(1, D).astype(jnp.float32)
    b2 = beta.reshape(1, D).astype(jnp.float32)
    out = pl.pallas_call(
        partial(_layer_norm_kernel, eps=eps),
        out_shape=jax.ShapeDtypeStruct((Rp, D), jnp.float32),
        grid=(Rp // TR,),
        in_specs=[pl.BlockSpec((TR, D), lambda i: (i, 0)),
                  pl.BlockSpec((1, D), lambda i: (0, 0)),
                  pl.BlockSpec((1, D), lambda i: (0, 0))],
        out_specs=pl.BlockSpec((TR, D), lambda i: (i, 0)),
        compiler_params=pltpu.CompilerParams(
            dimension_semantics=("parallel",)),
    )(xp, g2, b2)
    return out[:R].reshape(shape)


# ----------------------------------------------------------------------------
# Module forward passes
# ----------------------------------------------------------------------------
def encoder_layer_forward(p, x, *, mxu_dtype=jnp.bfloat16):
    B, T, D = x.shape
    H = p["n_heads"]
    act_dtype = jnp.float32 if mxu_dtype is None else mxu_dtype
    x2d = x.reshape(B * T, D)

    # Fused QKV projection; output dtype/layout is exactly what the attention
    # kernel consumes (no host transpose, no extra cast pass).
    qkv = linear_pallas(x2d, p["w_qkv"], p["b_qkv"], out_dtype=act_dtype,
                        mxu_dtype=mxu_dtype)
    ctx = flash_attention(qkv.reshape(B, T, -1), H, out_dtype=act_dtype)

    # Attention out-projection + residual + norm1 fused in one kernel.
    x1 = linear_residual_ln_pallas(ctx.reshape(B * T, -1), p["w_out"],
                                   p["b_out"], x2d, p["ln1_g"], p["ln1_b"],
                                   mxu_dtype=mxu_dtype)
    # FFN conv1 (k=1) + GELU.
    hf = linear_pallas(x1, p["w_ff1"], p["b_ff1"], activation="gelu",
                       out_dtype=act_dtype, mxu_dtype=mxu_dtype)
    # FFN conv2 (k=1) + residual + norm2 fused.
    x2 = linear_residual_ln_pallas(hf, p["w_ff2"], p["b_ff2"], x1,
                                   p["ln2_g"], p["ln2_b"], mxu_dtype=mxu_dtype)
    return x2.reshape(B, T, D)


def transformer_forward(params, x, *, mxu_dtype=jnp.bfloat16):
    B, L, C = x.shape
    d_model = params["d_model"]
    # DataEmbedding: circular Conv1d(k=3, bias=False) as one matmul over
    # [x_{t-1}, x_t, x_{t+1}], plus the fixed sinusoidal positional table.
    x_cat = jnp.concatenate(
        [jnp.roll(x, 1, axis=1), x, jnp.roll(x, -1, axis=1)], axis=-1)
    tok = linear_pallas(x_cat.reshape(B * L, 3 * C), params["w_tok"],
                        params["b_tok"], out_dtype=jnp.float32,
                        mxu_dtype=mxu_dtype).reshape(B, L, d_model)
    h = tok + params["pe"][:L][None, :, :]
    cls = jnp.broadcast_to(params["cls_token"], (B, 1, d_model))
    h = jnp.concatenate([cls, h], axis=1)                        # (B, L+1, D)
    for lp in params["layers"]:
        h = encoder_layer_forward(lp, h, mxu_dtype=mxu_dtype)
    h = layer_norm(h, params["ln_f_g"], params["ln_f_b"])        # Encoder.norm
    cls_out = h[:, 0, :]
    # Final projection kept with f32 MXU operands for output parity.
    enc_out = linear_pallas(h[:, 1:, :].reshape(B * L, d_model),
                            params["w_proj"], params["b_proj"],
                            out_dtype=jnp.float32, mxu_dtype=None
                            ).reshape(B, L, params["c_out"])
    return cls_out, enc_out


# ----------------------------------------------------------------------------
# Parameter init (deterministic) and pure-JAX f32 reference
# ----------------------------------------------------------------------------
def init_params(key, enc_in, c_out, d_model, n_heads, d_ff, e_layers,
                max_len=5000):
    dh = d_model // n_heads
    keys = iter(jax.random.split(key, 8 * e_layers + 8))

    def uniform(k, shape, fan_in):
        bound = 1.0 / math.sqrt(fan_in)
        return jax.random.uniform(k, shape, jnp.float32, -bound, bound)

    params = {"d_model": d_model, "c_out": c_out}
    params["w_tok"] = (jax.random.normal(next(keys), (3 * enc_in, d_model),
                                         jnp.float32)
                       * math.sqrt(2.0 / (3 * enc_in)))
    params["b_tok"] = jnp.zeros((d_model,), jnp.float32)   # Conv1d(bias=False)

    pos = jnp.arange(max_len, dtype=jnp.float32)[:, None]
    div = jnp.exp(jnp.arange(0, d_model, 2, dtype=jnp.float32)
                  * (-math.log(10000.0) / d_model))
    pe = jnp.zeros((max_len, d_model), jnp.float32)
    pe = pe.at[:, 0::2].set(jnp.sin(pos * div))
    pe = pe.at[:, 1::2].set(jnp.cos(pos * div))
    params["pe"] = pe
    params["cls_token"] = jax.random.normal(next(keys), (1, 1, d_model),
                                            jnp.float32)

    layers = []
    for _ in range(e_layers):
        p = {"n_heads": n_heads, "d_head": dh}
        p["w_qkv"] = uniform(next(keys), (d_model, 3 * n_heads * dh), d_model)
        p["b_qkv"] = uniform(next(keys), (3 * n_heads * dh,), d_model)
        p["w_out"] = uniform(next(keys), (n_heads * dh, d_model), n_heads * dh)
        p["b_out"] = uniform(next(keys), (d_model,), n_heads * dh)
        p["w_ff1"] = uniform(next(keys), (d_model, d_ff), d_model)
        p["b_ff1"] = uniform(next(keys), (d_ff,), d_model)
        p["w_ff2"] = uniform(next(keys), (d_ff, d_model), d_ff)
        p["b_ff2"] = uniform(next(keys), (d_model,), d_ff)
        p["ln1_g"] = jnp.ones((d_model,), jnp.float32)
        p["ln1_b"] = jnp.zeros((d_model,), jnp.float32)
        p["ln2_g"] = jnp.ones((d_model,), jnp.float32)
        p["ln2_b"] = jnp.zeros((d_model,), jnp.float32)
        layers.append(p)
    params["layers"] = layers
    params["ln_f_g"] = jnp.ones((d_model,), jnp.float32)
    params["ln_f_b"] = jnp.zeros((d_model,), jnp.float32)
    params["w_proj"] = uniform(next(keys), (d_model, c_out), d_model)
    params["b_proj"] = uniform(next(keys), (c_out,), d_model)
    return params


def reference_forward(params, x):
    B, L, _ = x.shape
    d_model = params["d_model"]
    x_cat = jnp.concatenate(
        [jnp.roll(x, 1, axis=1), x, jnp.roll(x, -1, axis=1)], axis=-1)
    tok = x_cat @ params["w_tok"]
    h = tok + params["pe"][:L][None, :, :]
    h = jnp.concatenate(
        [jnp.broadcast_to(params["cls_token"], (B, 1, d_model)), h], axis=1)

    def ln(z, g, b, eps=_LN_EPS):
        mu = jnp.mean(z, axis=-1, keepdims=True)
        var = jnp.mean((z - mu) ** 2, axis=-1, keepdims=True)
        return (z - mu) / jnp.sqrt(var + eps) * g + b

    for p in params["layers"]:
        T = h.shape[1]
        H, dh = p["n_heads"], p["d_head"]
        qkv = (h.reshape(B * T, d_model) @ p["w_qkv"] + p["b_qkv"]
               ).reshape(B, T, 3, H, dh)
        q, k, v = qkv[:, :, 0], qkv[:, :, 1], qkv[:, :, 2]
        s = jnp.einsum("blhe,bshe->bhls", q, k) / math.sqrt(dh)
        a = jax.nn.softmax(s, axis=-1)
        ctx = jnp.einsum("bhls,bshd->blhd", a, v).reshape(B, T, H * dh)
        attn_out = ctx @ p["w_out"] + p["b_out"]
        x1 = ln(h + attn_out, p["ln1_g"], p["ln1_b"])
        y = jax.nn.gelu(x1 @ p["w_ff1"] + p["b_ff1"], approximate=True)
        y = y @ p["w_ff2"] + p["b_ff2"]
        h = ln(x1 + y, p["ln2_g"], p["ln2_b"])
    h = ln(h, params["ln_f_g"], params["ln_f_b"])
    return h[:, 0, :], h[:, 1:, :] @ params["w_proj"] + params["b_proj"]


# ----------------------------------------------------------------------------
if __name__ == "__main__":
    B, win_size, enc_in, c_out = 2, 16, 4, 4
    d_model, n_heads, d_ff, e_layers = 32, 4, 64, 2

    root = jax.random.PRNGKey(0)
    k_x, k_p = jax.random.split(root)
    x = jax.random.normal(k_x, (B, win_size, enc_in), jnp.float32)
    params = init_params(k_p, enc_in, c_out, d_model, n_heads, d_ff, e_layers)

    fwd = jax.jit(lambda inp: transformer_forward(params, inp))
    cls_out, enc_out = fwd(x)
    cls_out = jax.block_until_ready(cls_out)
    enc_out = jax.block_until_ready(enc_out)

    ref_cls, ref_enc = reference_forward(params, x)
    assert cls_out.shape == (B, d_model)
    assert enc_out.shape == (B, win_size, c_out)
    err = max(float(jnp.max(jnp.abs(cls_out - ref_cls))),
              float(jnp.max(jnp.abs(enc_out - ref_enc))))
    # bf16 MXU operands + approx softmax reciprocal give ~1e-2-level deviation
    # from the pure-f32 reference at these shapes.
    assert err < 1e-1, f"max abs error vs reference: {err}"
    print("KERNEL_OK")
</pallas_src>

<mosaic_0001>
module attributes {stable_mosaic.version = 11 : i64} {
  func.func @_matmul_kernel(%arg0: i32, %arg1: i32, %arg2: i32, %arg3: memref<32x12xbf16, #tpu.memory_space<vmem>>, %arg4: memref<12x32xbf16, #tpu.memory_space<vmem>>, %arg5: memref<1x32xf32, #tpu.memory_space<vmem>>, %arg6: memref<32x32xf32, #tpu.memory_space<vmem>>, %arg7: memref<32x32xf32, #tpu.memory_space<vmem>>) attributes {dimension_semantics = [#tpu.dimension_semantics<parallel>, #tpu.dimension_semantics<parallel>, #tpu.dimension_semantics<arbitrary>], iteration_bounds = array<i64: 1, 1, 1>, scalar_prefetch = 0 : i64, scratch_operands = 1 : i64, tpu.core_type = #tpu.core_type<tc>, window_params = [{transform_indices = @transform_0, window_bounds = array<i64: 32, 12>}, {transform_indices = @transform_1, window_bounds = array<i64: 12, 32>}, {transform_indices = @transform_2, window_bounds = array<i64: 1, 32>}, {transform_indices = @transform_3, window_bounds = array<i64: 32, 32>}]} {
    %c0_i32 = arith.constant 0 : i32
    %0 = arith.cmpi eq, %arg2, %c0_i32 : i32
    %1 = arith.extui %0 : i1 to i32
    %c0_i32_0 = arith.constant 0 : i32
    %2 = arith.cmpi ne, %1, %c0_i32_0 : i32
    scf.if %2 {
      %cst_10 = arith.constant 0.000000e+00 : f32
      %12 = vector.broadcast %cst_10 : f32 to vector<32x32xf32>
      %c0_11 = arith.constant 0 : index
      %c0_12 = arith.constant 0 : index
      %13 = vector.load %arg7[%c0_11, %c0_12] : memref<32x32xf32, #tpu.memory_space<vmem>>, vector<32x32xf32>
      tpu.vector_store %arg7[%c0_11, %c0_12], %12 {strides = array<i32>} : memref<32x32xf32, #tpu.memory_space<vmem>>, vector<32x32xf32>,
    } else {
    }
    %c0 = arith.constant 0 : index
    %c0_1 = arith.constant 0 : index
    %3 = vector.load %arg7[%c0, %c0_1] : memref<32x32xf32, #tpu.memory_space<vmem>>, vector<32x32xf32>
    %c0_2 = arith.constant 0 : index
    %c0_3 = arith.constant 0 : index
    %4 = vector.load %arg3[%c0_2, %c0_3] : memref<32x12xbf16, #tpu.memory_space<vmem>>, vector<32x12xbf16>
    %c0_4 = arith.constant 0 : index
    %c0_5 = arith.constant 0 : index
    %5 = vector.load %arg4[%c0_4, %c0_5] : memref<12x32xbf16, #tpu.memory_space<vmem>>, vector<12x32xbf16>
    %cst = arith.constant dense<0.000000e+00> : vector<32x32xf32>
    %6 = tpu.matmul %4, %5, %cst {dimension_numbers = #tpu.dot_dimension_numbers<[1], [0], [0], [1], [0, 0, 1, 1], [], []>} : vector<32x12xbf16>, vector<12x32xbf16>, vector<32x32xf32> -> vector<32x32xf32>
    %7 = arith.addf %3, %6 : vector<32x32xf32>
    %c0_6 = arith.constant 0 : index
    %c0_7 = arith.constant 0 : index
    %8 = vector.load %arg7[%c0_6, %c0_7] : memref<32x32xf32, #tpu.memory_space<vmem>>, vector<32x32xf32>
    tpu.vector_store %arg7[%c0_6, %c0_7], %7 {strides = array<i32>} : memref<32x32xf32, #tpu.memory_space<vmem>>, vector<32x32xf32>,
    %c0_i32_8 = arith.constant 0 : i32
    %9 = arith.cmpi eq, %arg2, %c0_i32_8 : i32
    %10 = arith.extui %9 : i1 to i32
    %c0_i32_9 = arith.constant 0 : i32
    %11 = arith.cmpi ne, %10, %c0_i32_9 : i32
    scf.if %11 {
      %c0_10 = arith.constant 0 : index
      %c0_11 = arith.constant 0 : index
      %12 = vector.load %arg7[%c0_10, %c0_11] : memref<32x32xf32, #tpu.memory_space<vmem>>, vector<32x32xf32>
      %c0_12 = arith.constant 0 : index
      %c0_13 = arith.constant 0 : index
      %13 = vector.load %arg5[%c0_12, %c0_13] : memref<1x32xf32, #tpu.memory_space<vmem>>, vector<1x32xf32>
      %14 = vector.broadcast %13 : vector<1x32xf32> to vector<32x32xf32>
      %15 = arith.addf %12, %14 : vector<32x32xf32>
      %c0_14 = arith.constant 0 : index
      %c0_15 = arith.constant 0 : index
      %16 = vector.load %arg6[%c0_14, %c0_15] : memref<32x32xf32, #tpu.memory_space<vmem>>, vector<32x32xf32>
      tpu.vector_store %arg6[%c0_14, %c0_15], %15 {strides = array<i32>} : memref<32x32xf32, #tpu.memory_space<vmem>>, vector<32x32xf32>,
    } else {
    }
    return
  }
  func.func @transform_0(%arg0: i32, %arg1: i32, %arg2: i32) -> (i32, i32) {
    %c0_i32 = arith.constant 0 : i32
    return %arg0, %arg2 : i32, i32
  }
  func.func @transform_1(%arg0: i32, %arg1: i32, %arg2: i32) -> (i32, i32) {
    %c0_i32 = arith.constant 0 : i32
    return %arg2, %arg1 : i32, i32
  }
  func.func @transform_2(%arg0: i32, %arg1: i32, %arg2: i32) -> (i32, i32) {
    %c0_i32 = arith.constant 0 : i32
    %c0_i32_0 = arith.constant 0 : i32
    return %c0_i32, %arg1 : i32, i32
  }
  func.func @transform_3(%arg0: i32, %arg1: i32, %arg2: i32) -> (i32, i32) {
    %c0_i32 = arith.constant 0 : i32
    return %arg0, %arg1 : i32, i32
  }
}

module attributes {stable_mosaic.version = 11 : i64} {
  func.func @_matmul_kernel(%arg0: i32, %arg1: i32, %arg2: i32, %arg3: memref<40x32xbf16, #tpu.memory_space<vmem>>, %arg4: memref<32x96xbf16, #tpu.memory_space<vmem>>, %arg5: memref<1x96xf32, #tpu.memory_space<vmem>>, %arg6: memref<40x96xbf16, #tpu.memory_space<vmem>>, %arg7: memref<40x96xf32, #tpu.memory_space<vmem>>) attributes {dimension_semantics = [#tpu.dimension_semantics<parallel>, #tpu.dimension_semantics<parallel>, #tpu.dimension_semantics<arbitrary>], iteration_bounds = array<i64: 1, 1, 1>, scalar_prefetch = 0 : i64, scratch_operands = 1 : i64, tpu.core_type = #tpu.core_type<tc>, window_params = [{transform_indices = @transform_0, window_bounds = array<i64: 40, 32>}, {transform_indices = @transform_1, window_bounds = array<i64: 32, 96>}, {transform_indices = @transform_2, window_bounds = array<i64: 1, 96>}, {transform_indices = @transform_3, window_bounds = array<i64: 40, 96>}]} {
    %c0_i32 = arith.constant 0 : i32
    %0 = arith.cmpi eq, %arg2, %c0_i32 : i32
    %1 = arith.extui %0 : i1 to i32
    %c0_i32_0 = arith.constant 0 : i32
    %2 = arith.cmpi ne, %1, %c0_i32_0 : i32
    scf.if %2 {
      %cst_10 = arith.constant 0.000000e+00 : f32
      %12 = vector.broadcast %cst_10 : f32 to vector<40x96xf32>
      %c0_11 = arith.constant 0 : index
      %c0_12 = arith.constant 0 : index
      %13 = vector.load %arg7[%c0_11, %c0_12] : memref<40x96xf32, #tpu.memory_space<vmem>>, vector<40x96xf32>
      tpu.vector_store %arg7[%c0_11, %c0_12], %12 {strides = array<i32>} : memref<40x96xf32, #tpu.memory_space<vmem>>, vector<40x96xf32>,
    } else {
    }
    %c0 = arith.constant 0 : index
    %c0_1 = arith.constant 0 : index
    %3 = vector.load %arg7[%c0, %c0_1] : memref<40x96xf32, #tpu.memory_space<vmem>>, vector<40x96xf32>
    %c0_2 = arith.constant 0 : index
    %c0_3 = arith.constant 0 : index
    %4 = vector.load %arg3[%c0_2, %c0_3] : memref<40x32xbf16, #tpu.memory_space<vmem>>, vector<40x32xbf16>
    %c0_4 = arith.constant 0 : index
    %c0_5 = arith.constant 0 : index
    %5 = vector.load %arg4[%c0_4, %c0_5] : memref<32x96xbf16, #tpu.memory_space<vmem>>, vector<32x96xbf16>
    %cst = arith.constant dense<0.000000e+00> : vector<40x96xf32>
    %6 = tpu.matmul %4, %5, %cst {dimension_numbers = #tpu.dot_dimension_numbers<[1], [0], [0], [1], [0, 0, 1, 1], [], []>} : vector<40x32xbf16>, vector<32x96xbf16>, vector<40x96xf32> -> vector<40x96xf32>
    %7 = arith.addf %3, %6 : vector<40x96xf32>
    %c0_6 = arith.constant 0 : index
    %c0_7 = arith.constant 0 : index
    %8 = vector.load %arg7[%c0_6, %c0_7] : memref<40x96xf32, #tpu.memory_space<vmem>>, vector<40x96xf32>
    tpu.vector_store %arg7[%c0_6, %c0_7], %7 {strides = array<i32>} : memref<40x96xf32, #tpu.memory_space<vmem>>, vector<40x96xf32>,
    %c0_i32_8 = arith.constant 0 : i32
    %9 = arith.cmpi eq, %arg2, %c0_i32_8 : i32
    %10 = arith.extui %9 : i1 to i32
    %c0_i32_9 = arith.constant 0 : i32
    %11 = arith.cmpi ne, %10, %c0_i32_9 : i32
    scf.if %11 {
      %c0_10 = arith.constant 0 : index
      %c0_11 = arith.constant 0 : index
      %12 = vector.load %arg7[%c0_10, %c0_11] : memref<40x96xf32, #tpu.memory_space<vmem>>, vector<40x96xf32>
      %c0_12 = arith.constant 0 : index
      %c0_13 = arith.constant 0 : index
      %13 = vector.load %arg5[%c0_12, %c0_13] : memref<1x96xf32, #tpu.memory_space<vmem>>, vector<1x96xf32>
      %14 = vector.broadcast %13 : vector<1x96xf32> to vector<40x96xf32>
      %15 = arith.addf %12, %14 : vector<40x96xf32>
      %16 = arith.truncf %15 : vector<40x96xf32> to vector<40x96xbf16>
      %c0_14 = arith.constant 0 : index
      %c0_15 = arith.constant 0 : index
      %17 = vector.load %arg6[%c0_14, %c0_15] : memref<40x96xbf16, #tpu.memory_space<vmem>>, vector<40x96xbf16>
      tpu.vector_store %arg6[%c0_14, %c0_15], %16 {strides = array<i32>} : memref<40x96xbf16, #tpu.memory_space<vmem>>, vector<40x96xbf16>,
    } else {
    }
    return
  }
  func.func @transform_0(%arg0: i32, %arg1: i32, %arg2: i32) -> (i32, i32) {
    %c0_i32 = arith.constant 0 : i32
    return %arg0, %arg2 : i32, i32
  }
  func.func @transform_1(%arg0: i32, %arg1: i32, %arg2: i32) -> (i32, i32) {
    %c0_i32 = arith.constant 0 : i32
    return %arg2, %arg1 : i32, i32
  }
  func.func @transform_2(%arg0: i32, %arg1: i32, %arg2: i32) -> (i32, i32) {
    %c0_i32 = arith.constant 0 : i32
    %c0_i32_0 = arith.constant 0 : i32
    return %c0_i32, %arg1 : i32, i32
  }
  func.func @transform_3(%arg0: i32, %arg1: i32, %arg2: i32) -> (i32, i32) {
    %c0_i32 = arith.constant 0 : i32
    return %arg0, %arg1 : i32, i32
  }
}

module attributes {stable_mosaic.version = 11 : i64} {
  func.func @_flash_attention_kernel(%arg0: i32, %arg1: i32, %arg2: i32, %arg3: memref<1x24x96xbf16, #tpu.memory_space<vmem>>, %arg4: memref<1x24x96xbf16, #tpu.memory_space<vmem>>, %arg5: memref<1x24x32xbf16, #tpu.memory_space<vmem>>, %arg6: memref<24x4xf32, #tpu.memory_space<vmem>>, %arg7: memref<24x4xf32, #tpu.memory_space<vmem>>, %arg8: memref<24x32xf32, #tpu.memory_space<vmem>>) attributes {dimension_semantics = [#tpu.dimension_semantics<parallel>, #tpu.dimension_semantics<parallel>, #tpu.dimension_semantics<arbitrary>], iteration_bounds = array<i64: 2, 1, 1>, scalar_prefetch = 0 : i64, scratch_operands = 3 : i64, tpu.core_type = #tpu.core_type<tc>, window_params = [{transform_indices = @transform_0, window_bounds = array<i64: 1, 24, 96>}, {transform_indices = @transform_1, window_bounds = array<i64: 1, 24, 96>}, {transform_indices = @transform_2, window_bounds = array<i64: 1, 24, 32>}]} {
    %c0_i32 = arith.constant 0 : i32
    %0 = arith.cmpi eq, %arg2, %c0_i32 : i32
    %1 = arith.extui %0 : i1 to i32
    %c0_i32_0 = arith.constant 0 : i32
    %2 = arith.cmpi ne, %1, %c0_i32_0 : i32
    scf.if %2 {
      %cst_95 = arith.constant -1.000000e+30 : f32
      %156 = vector.broadcast %cst_95 : f32 to vector<24x4xf32>
      %c0_96 = arith.constant 0 : index
      %c0_97 = arith.constant 0 : index
      %157 = vector.load %arg6[%c0_96, %c0_97] : memref<24x4xf32, #tpu.memory_space<vmem>>, vector<24x4xf32>
      tpu.vector_store %arg6[%c0_96, %c0_97], %156 {strides = array<i32>} : memref<24x4xf32, #tpu.memory_space<vmem>>, vector<24x4xf32>,
      %cst_98 = arith.constant 0.000000e+00 : f32
      %158 = vector.broadcast %cst_98 : f32 to vector<24x4xf32>
      %c0_99 = arith.constant 0 : index
      %c0_100 = arith.constant 0 : index
      %159 = vector.load %arg7[%c0_99, %c0_100] : memref<24x4xf32, #tpu.memory_space<vmem>>, vector<24x4xf32>
      tpu.vector_store %arg7[%c0_99, %c0_100], %158 {strides = array<i32>} : memref<24x4xf32, #tpu.memory_space<vmem>>, vector<24x4xf32>,
      %cst_101 = arith.constant 0.000000e+00 : f32
      %160 = vector.broadcast %cst_101 : f32 to vector<24x32xf32>
      %c0_102 = arith.constant 0 : index
      %c0_103 = arith.constant 0 : index
      %161 = vector.load %arg8[%c0_102, %c0_103] : memref<24x32xf32, #tpu.memory_space<vmem>>, vector<24x32xf32>
      tpu.vector_store %arg8[%c0_102, %c0_103], %160 {strides = array<i32>} : memref<24x32xf32, #tpu.memory_space<vmem>>, vector<24x32xf32>,
    } else {
    }
    %3 = tpu.iota {dimensions = array<i32: 1>} : vector<1x24xi32>
    %c24_i32 = arith.constant 24 : i32
    %4 = arith.muli %arg2, %c24_i32 : i32
    %5 = vector.broadcast %4 : i32 to vector<1x24xi32>
    %6 = arith.addi %3, %5 : vector<1x24xi32>
    %c17_i32 = arith.constant 17 : i32
    %7 = vector.broadcast %c17_i32 : i32 to vector<1x24xi32>
    %8 = arith.cmpi slt, %6, %7 : vector<1x24xi32>
    %c0 = arith.constant 0 : index
    %c0_1 = arith.constant 0 : index
    %c0_2 = arith.constant 0 : index
    %9 = vector.load %arg3[%c0, %c0_1, %c0_2] : memref<1x24x96xbf16, #tpu.memory_space<vmem>>, vector<1x24x8xbf16>
    %10 = vector.shape_cast %9 : vector<1x24x8xbf16> to vector<24x8xbf16>
    %c0_3 = arith.constant 0 : index
    %c0_4 = arith.constant 0 : index
    %c32 = arith.constant 32 : index
    %11 = vector.load %arg4[%c0_3, %c0_4, %c32] : memref<1x24x96xbf16, #tpu.memory_space<vmem>>, vector<1x24x8xbf16>
    %12 = vector.shape_cast %11 : vector<1x24x8xbf16> to vector<24x8xbf16>
    %c0_5 = arith.constant 0 : index
    %c0_6 = arith.constant 0 : index
    %c64 = arith.constant 64 : index
    %13 = vector.load %arg4[%c0_5, %c0_6, %c64] : memref<1x24x96xbf16, #tpu.memory_space<vmem>>, vector<1x24x8xbf16>
    %14 = vector.shape_cast %13 : vector<1x24x8xbf16> to vector<24x8xbf16>
    %cst = arith.constant dense<0.000000e+00> : vector<24x24xf32>
    %15 = tpu.matmul %10, %12, %cst {dimension_numbers = #tpu.dot_dimension_numbers<[1], [1], [0], [0], [0, 0, 1, 0], [], []>} : vector<24x8xbf16>, vector<24x8xbf16>, vector<24x24xf32> -> vector<24x24xf32>
    %cst_7 = arith.constant 0.353553385 : f32
    %16 = vector.broadcast %cst_7 : f32 to vector<24x24xf32>
    %17 = arith.mulf %15, %16 : vector<24x24xf32>
    %cst_8 = arith.constant -1.000000e+30 : f32
    %18 = vector.shape_cast %8 : vector<1x24xi1> to vector<1x24xi1>
    %19 = vector.broadcast %18 : vector<1x24xi1> to vector<24x24xi1>
    %20 = vector.broadcast %cst_8 : f32 to vector<24x24xf32>
    %21 = arith.select %19, %17, %20 : vector<24x24xi1>, vector<24x24xf32>
    %c0_9 = arith.constant 0 : index
    %c0_10 = arith.constant 0 : index
    %22 = vector.load %arg6[%c0_9, %c0_10] : memref<24x4xf32, #tpu.memory_space<vmem>>, vector<24x1xf32>
    %cst_11 = arith.constant dense<0xFF800000> : vector<24xf32>
    %23 = vector.multi_reduction <maximumf>, %21, %cst_11 [1] : vector<24x24xf32> to vector<24xf32>
    %24 = vector.shape_cast %23 : vector<24xf32> to vector<24x1xf32>
    %25 = arith.maximumf %22, %24 : vector<24x1xf32>
    %26 = arith.subf %22, %25 : vector<24x1xf32>
    %27 = math.exp %26 : vector<24x1xf32>
    %28 = vector.broadcast %25 : vector<24x1xf32> to vector<24x24xf32>
    %29 = arith.subf %21, %28 : vector<24x24xf32>
    %30 = math.exp %29 : vector<24x24xf32>
    %c0_12 = arith.constant 0 : index
    %c0_13 = arith.constant 0 : index
    %31 = vector.load %arg7[%c0_12, %c0_13] : memref<24x4xf32, #tpu.memory_space<vmem>>, vector<24x1xf32>
    %32 = arith.mulf %27, %31 : vector<24x1xf32>
    %cst_14 = arith.constant dense<0.000000e+00> : vector<24xf32>
    %33 = vector.multi_reduction <add>, %30, %cst_14 [1] : vector<24x24xf32> to vector<24xf32>
    %34 = vector.shape_cast %33 : vector<24xf32> to vector<24x1xf32>
    %35 = arith.addf %32, %34 : vector<24x1xf32>
    %c0_15 = arith.constant 0 : index
    %c0_16 = arith.constant 0 : index
    %36 = vector.load %arg7[%c0_15, %c0_16] : memref<24x4xf32, #tpu.memory_space<vmem>>, vector<24x1xf32>
    tpu.vector_store %arg7[%c0_15, %c0_16], %35 {strides = array<i32>} : memref<24x4xf32, #tpu.memory_space<vmem>>, vector<24x1xf32>,
    %c0_17 = arith.constant 0 : index
    %c0_18 = arith.constant 0 : index
    %37 = vector.load %arg8[%c0_17, %c0_18] : memref<24x32xf32, #tpu.memory_space<vmem>>, vector<24x8xf32>
    %38 = vector.broadcast %27 : vector<24x1xf32> to vector<24x8xf32>
    %39 = arith.mulf %38, %37 : vector<24x8xf32>
    %40 = arith.truncf %30 : vector<24x24xf32> to vector<24x24xbf16>
    %cst_19 = arith.constant dense<0.000000e+00> : vector<24x8xf32>
    %41 = tpu.matmul %40, %14, %cst_19 {dimension_numbers = #tpu.dot_dimension_numbers<[1], [0], [0], [1], [0, 0, 1, 1], [], []>} : vector<24x24xbf16>, vector<24x8xbf16>, vector<24x8xf32> -> vector<24x8xf32>
    %42 = arith.addf %39, %41 : vector<24x8xf32>
    %c0_20 = arith.constant 0 : index
    %c0_21 = arith.constant 0 : index
    %43 = vector.load %arg8[%c0_20, %c0_21] : memref<24x32xf32, #tpu.memory_space<vmem>>, vector<24x8xf32>
    tpu.vector_store %arg8[%c0_20, %c0_21], %42 {strides = array<i32>} : memref<24x32xf32, #tpu.memory_space<vmem>>, vector<24x8xf32>,
    %c0_22 = arith.constant 0 : index
    %c0_23 = arith.constant 0 : index
    %44 = vector.load %arg6[%c0_22, %c0_23] : memref<24x4xf32, #tpu.memory_space<vmem>>, vector<24x1xf32>
    tpu.vector_store %arg6[%c0_22, %c0_23], %25 {strides = array<i32>} : memref<24x4xf32, #tpu.memory_space<vmem>>, vector<24x1xf32>,
    %c0_24 = arith.constant 0 : index
    %c0_25 = arith.constant 0 : index
    %c8 = arith.constant 8 : index
    %45 = vector.load %arg3[%c0_24, %c0_25, %c8] : memref<1x24x96xbf16, #tpu.memory_space<vmem>>, vector<1x24x8xbf16>
    %46 = vector.shape_cast %45 : vector<1x24x8xbf16> to vector<24x8xbf16>
    %c0_26 = arith.constant 0 : index
    %c0_27 = arith.constant 0 : index
    %c40 = arith.constant 40 : index
    %47 = vector.load %arg4[%c0_26, %c0_27, %c40] : memref<1x24x96xbf16, #tpu.memory_space<vmem>>, vector<1x24x8xbf16>
    %48 = vector.shape_cast %47 : vector<1x24x8xbf16> to vector<24x8xbf16>
    %c0_28 = arith.constant 0 : index
    %c0_29 = arith.constant 0 : index
    %c72 = arith.constant 72 : index
    %49 = vector.load %arg4[%c0_28, %c0_29, %c72] : memref<1x24x96xbf16, #tpu.memory_space<vmem>>, vector<1x24x8xbf16>
    %50 = vector.shape_cast %49 : vector<1x24x8xbf16> to vector<24x8xbf16>
    %cst_30 = arith.constant dense<0.000000e+00> : vector<24x24xf32>
    %51 = tpu.matmul %46, %48, %cst_30 {dimension_numbers = #tpu.dot_dimension_numbers<[1], [1], [0], [0], [0, 0, 1, 0], [], []>} : vector<24x8xbf16>, vector<24x8xbf16>, vector<24x24xf32> -> vector<24x24xf32>
    %cst_31 = arith.constant 0.353553385 : f32
    %52 = vector.broadcast %cst_31 : f32 to vector<24x24xf32>
    %53 = arith.mulf %51, %52 : vector<24x24xf32>
    %cst_32 = arith.constant -1.000000e+30 : f32
    %54 = vector.shape_cast %8 : vector<1x24xi1> to vector<1x24xi1>
    %55 = vector.broadcast %54 : vector<1x24xi1> to vector<24x24xi1>
    %56 = vector.broadcast %cst_32 : f32 to vector<24x24xf32>
    %57 = arith.select %55, %53, %56 : vector<24x24xi1>, vector<24x24xf32>
    %c0_33 = arith.constant 0 : index
    %c1 = arith.constant 1 : index
    %58 = vector.load %arg6[%c0_33, %c1] : memref<24x4xf32, #tpu.memory_space<vmem>>, vector<24x1xf32>
    %cst_34 = arith.constant dense<0xFF800000> : vector<24xf32>
    %59 = vector.multi_reduction <maximumf>, %57, %cst_34 [1] : vector<24x24xf32> to vector<24xf32>
    %60 = vector.shape_cast %59 : vector<24xf32> to vector<24x1xf32>
    %61 = arith.maximumf %58, %60 : vector<24x1xf32>
    %62 = arith.subf %58, %61 : vector<24x1xf32>
    %63 = math.exp %62 : vector<24x1xf32>
    %64 = vector.broadcast %61 : vector<24x1xf32> to vector<24x24xf32>
    %65 = arith.subf %57, %64 : vector<24x24xf32>
    %66 = math.exp %65 : vector<24x24xf32>
    %c0_35 = arith.constant 0 : index
    %c1_36 = arith.constant 1 : index
    %67 = vector.load %arg7[%c0_35, %c1_36] : memref<24x4xf32, #tpu.memory_space<vmem>>, vector<24x1xf32>
    %68 = arith.mulf %63, %67 : vector<24x1xf32>
    %cst_37 = arith.constant dense<0.000000e+00> : vector<24xf32>
    %69 = vector.multi_reduction <add>, %66, %cst_37 [1] : vector<24x24xf32> to vector<24xf32>
    %70 = vector.shape_cast %69 : vector<24xf32> to vector<24x1xf32>
    %71 = arith.addf %68, %70 : vector<24x1xf32>
    %c0_38 = arith.constant 0 : index
    %c1_39 = arith.constant 1 : index
    %72 = vector.load %arg7[%c0_38, %c1_39] : memref<24x4xf32, #tpu.memory_space<vmem>>, vector<24x1xf32>
    tpu.vector_store %arg7[%c0_38, %c1_39], %71 {strides = array<i32>} : memref<24x4xf32, #tpu.memory_space<vmem>>, vector<24x1xf32>,
    %c0_40 = arith.constant 0 : index
    %c8_41 = arith.constant 8 : index
    %73 = vector.load %arg8[%c0_40, %c8_41] : memref<24x32xf32, #tpu.memory_space<vmem>>, vector<24x8xf32>
    %74 = vector.broadcast %63 : vector<24x1xf32> to vector<24x8xf32>
    %75 = arith.mulf %74, %73 : vector<24x8xf32>
    %76 = arith.truncf %66 : vector<24x24xf32> to vector<24x24xbf16>
    %cst_42 = arith.constant dense<0.000000e+00> : vector<24x8xf32>
    %77 = tpu.matmul %76, %50, %cst_42 {dimension_numbers = #tpu.dot_dimension_numbers<[1], [0], [0], [1], [0, 0, 1, 1], [], []>} : vector<24x24xbf16>, vector<24x8xbf16>, vector<24x8xf32> -> vector<24x8xf32>
    %78 = arith.addf %75, %77 : vector<24x8xf32>
    %c0_43 = arith.constant 0 : index
    %c8_44 = arith.constant 8 : index
    %79 = vector.load %arg8[%c0_43, %c8_44] : memref<24x32xf32, #tpu.memory_space<vmem>>, vector<24x8xf32>
    tpu.vector_store %arg8[%c0_43, %c8_44], %78 {strides = array<i32>} : memref<24x32xf32, #tpu.memory_space<vmem>>, vector<24x8xf32>,
    %c0_45 = arith.constant 0 : index
    %c1_46 = arith.constant 1 : index
    %80 = vector.load %arg6[%c0_45, %c1_46] : memref<24x4xf32, #tpu.memory_space<vmem>>, vector<24x1xf32>
    tpu.vector_store %arg6[%c0_45, %c1_46], %61 {strides = array<i32>} : memref<24x4xf32, #tpu.memory_space<vmem>>, vector<24x1xf32>,
    %c0_47 = arith.constant 0 : index
    %c0_48 = arith.constant 0 : index
    %c16 = arith.constant 16 : index
    %81 = vector.load %arg3[%c0_47, %c0_48, %c16] : memref<1x24x96xbf16, #tpu.memory_space<vmem>>, vector<1x24x8xbf16>
    %82 = vector.shape_cast %81 : vector<1x24x8xbf16> to vector<24x8xbf16>
    %c0_49 = arith.constant 0 : index
    %c0_50 = arith.constant 0 : index
    %c48 = arith.constant 48 : index
    %83 = vector.load %arg4[%c0_49, %c0_50, %c48] : memref<1x24x96xbf16, #tpu.memory_space<vmem>>, vector<1x24x8xbf16>
    %84 = vector.shape_cast %83 : vector<1x24x8xbf16> to vector<24x8xbf16>
    %c0_51 = arith.constant 0 : index
    %c0_52 = arith.constant 0 : index
    %c80 = arith.constant 80 : index
    %85 = vector.load %arg4[%c0_51, %c0_52, %c80] : memref<1x24x96xbf16, #tpu.memory_space<vmem>>, vector<1x24x8xbf16>
    %86 = vector.shape_cast %85 : vector<1x24x8xbf16> to vector<24x8xbf16>
    %cst_53 = arith.constant dense<0.000000e+00> : vector<24x24xf32>
    %87 = tpu.matmul %82, %84, %cst_53 {dimension_numbers = #tpu.dot_dimension_numbers<[1], [1], [0], [0], [0, 0, 1, 0], [], []>} : vector<24x8xbf16>, vector<24x8xbf16>, vector<24x24xf32> -> vector<24x24xf32>
    %cst_54 = arith.constant 0.353553385 : f32
    %88 = vector.broadcast %cst_54 : f32 to vector<24x24xf32>
    %89 = arith.mulf %87, %88 : vector<24x24xf32>
    %cst_55 = arith.constant -1.000000e+30 : f32
    %90 = vector.shape_cast %8 : vector<1x24xi1> to vector<1x24xi1>
    %91 = vector.broadcast %90 : vector<1x24xi1> to vector<24x24xi1>
    %92 = vector.broadcast %cst_55 : f32 to vector<24x24xf32>
    %93 = arith.select %91, %89, %92 : vector<24x24xi1>, vector<24x24xf32>
    %c0_56 = arith.constant 0 : index
    %c2 = arith.constant 2 : index
    %94 = vector.load %arg6[%c0_56, %c2] : memref<24x4xf32, #tpu.memory_space<vmem>>, vector<24x1xf32>
    %cst_57 = arith.constant dense<0xFF800000> : vector<24xf32>
    %95 = vector.multi_reduction <maximumf>, %93, %cst_57 [1] : vector<24x24xf32> to vector<24xf32>
    %96 = vector.shape_cast %95 : vector<24xf32> to vector<24x1xf32>
    %97 = arith.maximumf %94, %96 : vector<24x1xf32>
    %98 = arith.subf %94, %97 : vector<24x1xf32>
    %99 = math.exp %98 : vector<24x1xf32>
    %100 = vector.broadcast %97 : vector<24x1xf32> to vector<24x24xf32>
    %101 = arith.subf %93, %100 : vector<24x24xf32>
    %102 = math.exp %101 : vector<24x24xf32>
    %c0_58 = arith.constant 0 : index
    %c2_59 = arith.constant 2 : index
    %103 = vector.load %arg7[%c0_58, %c2_59] : memref<24x4xf32, #tpu.memory_space<vmem>>, vector<24x1xf32>
    %104 = arith.mulf %99, %103 : vector<24x1xf32>
    %cst_60 = arith.constant dense<0.000000e+00> : vector<24xf32>
    %105 = vector.multi_reduction <add>, %102, %cst_60 [1] : vector<24x24xf32> to vector<24xf32>
    %106 = vector.shape_cast %105 : vector<24xf32> to vector<24x1xf32>
    %107 = arith.addf %104, %106 : vector<24x1xf32>
    %c0_61 = arith.constant 0 : index
    %c2_62 = arith.constant 2 : index
    %108 = vector.load %arg7[%c0_61, %c2_62] : memref<24x4xf32, #tpu.memory_space<vmem>>, vector<24x1xf32>
    tpu.vector_store %arg7[%c0_61, %c2_62], %107 {strides = array<i32>} : memref<24x4xf32, #tpu.memory_space<vmem>>, vector<24x1xf32>,
    %c0_63 = arith.constant 0 : index
    %c16_64 = arith.constant 16 : index
    %109 = vector.load %arg8[%c0_63, %c16_64] : memref<24x32xf32, #tpu.memory_space<vmem>>, vector<24x8xf32>
    %110 = vector.broadcast %99 : vector<24x1xf32> to vector<24x8xf32>
    %111 = arith.mulf %110, %109 : vector<24x8xf32>
    %112 = arith.truncf %102 : vector<24x24xf32> to vector<24x24xbf16>
    %cst_65 = arith.constant dense<0.000000e+00> : vector<24x8xf32>
    %113 = tpu.matmul %112, %86, %cst_65 {dimension_numbers = #tpu.dot_dimension_numbers<[1], [0], [0], [1], [0, 0, 1, 1], [], []>} : vector<24x24xbf16>, vector<24x8xbf16>, vector<24x8xf32> -> vector<24x8xf32>
    %114 = arith.addf %111, %113 : vector<24x8xf32>
    %c0_66 = arith.constant 0 : index
    %c16_67 = arith.constant 16 : index
    %115 = vector.load %arg8[%c0_66, %c16_67] : memref<24x32xf32, #tpu.memory_space<vmem>>, vector<24x8xf32>
    tpu.vector_store %arg8[%c0_66, %c16_67], %114 {strides = array<i32>} : memref<24x32xf32, #tpu.memory_space<vmem>>, vector<24x8xf32>,
    %c0_68 = arith.constant 0 : index
    %c2_69 = arith.constant 2 : index
    %116 = vector.load %arg6[%c0_68, %c2_69] : memref<24x4xf32, #tpu.memory_space<vmem>>, vector<24x1xf32>
    tpu.vector_store %arg6[%c0_68, %c2_69], %97 {strides = array<i32>} : memref<24x4xf32, #tpu.memory_space<vmem>>, vector<24x1xf32>,
    %c0_70 = arith.constant 0 : index
    %c0_71 = arith.constant 0 : index
    %c24 = arith.constant 24 : index
    %117 = vector.load %arg3[%c0_70, %c0_71, %c24] : memref<1x24x96xbf16, #tpu.memory_space<vmem>>, vector<1x24x8xbf16>
    %118 = vector.shape_cast %117 : vector<1x24x8xbf16> to vector<24x8xbf16>
    %c0_72 = arith.constant 0 : index
    %c0_73 = arith.constant 0 : index
    %c56 = arith.constant 56 : index
    %119 = vector.load %arg4[%c0_72, %c0_73, %c56] : memref<1x24x96xbf16, #tpu.memory_space<vmem>>, vector<1x24x8xbf16>
    %120 = vector.shape_cast %119 : vector<1x24x8xbf16> to vector<24x8xbf16>
    %c0_74 = arith.constant 0 : index
    %c0_75 = arith.constant 0 : index
    %c88 = arith.constant 88 : index
    %121 = vector.load %arg4[%c0_74, %c0_75, %c88] : memref<1x24x96xbf16, #tpu.memory_space<vmem>>, vector<1x24x8xbf16>
    %122 = vector.shape_cast %121 : vector<1x24x8xbf16> to vector<24x8xbf16>
    %cst_76 = arith.constant dense<0.000000e+00> : vector<24x24xf32>
    %123 = tpu.matmul %118, %120, %cst_76 {dimension_numbers = #tpu.dot_dimension_numbers<[1], [1], [0], [0], [0, 0, 1, 0], [], []>} : vector<24x8xbf16>, vector<24x8xbf16>, vector<24x24xf32> -> vector<24x24xf32>
    %cst_77 = arith.constant 0.353553385 : f32
    %124 = vector.broadcast %cst_77 : f32 to vector<24x24xf32>
    %125 = arith.mulf %123, %124 : vector<24x24xf32>
    %cst_78 = arith.constant -1.000000e+30 : f32
    %126 = vector.shape_cast %8 : vector<1x24xi1> to vector<1x24xi1>
    %127 = vector.broadcast %126 : vector<1x24xi1> to vector<24x24xi1>
    %128 = vector.broadcast %cst_78 : f32 to vector<24x24xf32>
    %129 = arith.select %127, %125, %128 : vector<24x24xi1>, vector<24x24xf32>
    %c0_79 = arith.constant 0 : index
    %c3 = arith.constant 3 : index
    %130 = vector.load %arg6[%c0_79, %c3] : memref<24x4xf32, #tpu.memory_space<vmem>>, vector<24x1xf32>
    %cst_80 = arith.constant dense<0xFF800000> : vector<24xf32>
    %131 = vector.multi_reduction <maximumf>, %129, %cst_80 [1] : vector<24x24xf32> to vector<24xf32>
    %132 = vector.shape_cast %131 : vector<24xf32> to vector<24x1xf32>
    %133 = arith.maximumf %130, %132 : vector<24x1xf32>
    %134 = arith.subf %130, %133 : vector<24x1xf32>
    %135 = math.exp %134 : vector<24x1xf32>
    %136 = vector.broadcast %133 : vector<24x1xf32> to vector<24x24xf32>
    %137 = arith.subf %129, %136 : vector<24x24xf32>
    %138 = math.exp %137 : vector<24x24xf32>
    %c0_81 = arith.constant 0 : index
    %c3_82 = arith.constant 3 : index
    %139 = vector.load %arg7[%c0_81, %c3_82] : memref<24x4xf32, #tpu.memory_space<vmem>>, vector<24x1xf32>
    %140 = arith.mulf %135, %139 : vector<24x1xf32>
    %cst_83 = arith.constant dense<0.000000e+00> : vector<24xf32>
    %141 = vector.multi_reduction <add>, %138, %cst_83 [1] : vector<24x24xf32> to vector<24xf32>
    %142 = vector.shape_cast %141 : vector<24xf32> to vector<24x1xf32>
    %143 = arith.addf %140, %142 : vector<24x1xf32>
    %c0_84 = arith.constant 0 : index
    %c3_85 = arith.constant 3 : index
    %144 = vector.load %arg7[%c0_84, %c3_85] : memref<24x4xf32, #tpu.memory_space<vmem>>, vector<24x1xf32>
    tpu.vector_store %arg7[%c0_84, %c3_85], %143 {strides = array<i32>} : memref<24x4xf32, #tpu.memory_space<vmem>>, vector<24x1xf32>,
    %c0_86 = arith.constant 0 : index
    %c24_87 = arith.constant 24 : index
    %145 = vector.load %arg8[%c0_86, %c24_87] : memref<24x32xf32, #tpu.memory_space<vmem>>, vector<24x8xf32>
    %146 = vector.broadcast %135 : vector<24x1xf32> to vector<24x8xf32>
    %147 = arith.mulf %146, %145 : vector<24x8xf32>
    %148 = arith.truncf %138 : vector<24x24xf32> to vector<24x24xbf16>
    %cst_88 = arith.constant dense<0.000000e+00> : vector<24x8xf32>
    %149 = tpu.matmul %148, %122, %cst_88 {dimension_numbers = #tpu.dot_dimension_numbers<[1], [0], [0], [1], [0, 0, 1, 1], [], []>} : vector<24x24xbf16>, vector<24x8xbf16>, vector<24x8xf32> -> vector<24x8xf32>
    %150 = arith.addf %147, %149 : vector<24x8xf32>
    %c0_89 = arith.constant 0 : index
    %c24_90 = arith.constant 24 : index
    %151 = vector.load %arg8[%c0_89, %c24_90] : memref<24x32xf32, #tpu.memory_space<vmem>>, vector<24x8xf32>
    tpu.vector_store %arg8[%c0_89, %c24_90], %150 {strides = array<i32>} : memref<24x32xf32, #tpu.memory_space<vmem>>, vector<24x8xf32>,
    %c0_91 = arith.constant 0 : index
    %c3_92 = arith.constant 3 : index
    %152 = vector.load %arg6[%c0_91, %c3_92] : memref<24x4xf32, #tpu.memory_space<vmem>>, vector<24x1xf32>
    tpu.vector_store %arg6[%c0_91, %c3_92], %133 {strides = array<i32>} : memref<24x4xf32, #tpu.memory_space<vmem>>, vector<24x1xf32>,
    %c0_i32_93 = arith.constant 0 : i32
    %153 = arith.cmpi eq, %arg2, %c0_i32_93 : i32
    %154 = arith.extui %153 : i1 to i32
    %c0_i32_94 = arith.constant 0 : i32
    %155 = arith.cmpi ne, %154, %c0_i32_94 : i32
    scf.if %155 {
      %c0_95 = arith.constant 0 : index
      %c0_96 = arith.constant 0 : index
      %156 = vector.load %arg7[%c0_95, %c0_96] : memref<24x4xf32, #tpu.memory_space<vmem>>, vector<24x4xf32>
      %157 = tpu.reciprocal %156 {approx = true} : vector<24x4xf32> -> vector<24x4xf32>
      %c0_97 = arith.constant 0 : index
      %c0_98 = arith.constant 0 : index
      %158 = vector.load %arg8[%c0_97, %c0_98] : memref<24x32xf32, #tpu.memory_space<vmem>>, vector<24x8xf32>
      %159 = vector.extract_strided_slice %157 {offsets = [0, 0], sizes = [24, 1], strides = [1, 1]} : vector<24x4xf32> to vector<24x1xf32>
      %160 = vector.broadcast %159 : vector<24x1xf32> to vector<24x8xf32>
      %161 = arith.mulf %158, %160 : vector<24x8xf32>
      %162 = arith.truncf %161 : vector<24x8xf32> to vector<24x8xbf16>
      %c0_99 = arith.constant 0 : index
      %c0_100 = arith.constant 0 : index
      %c0_101 = arith.constant 0 : index
      %163 = vector.load %arg5[%c0_99, %c0_100, %c0_101] : memref<1x24x32xbf16, #tpu.memory_space<vmem>>, vector<1x24x8xbf16>
      %164 = vector.shape_cast %163 : vector<1x24x8xbf16> to vector<24x8xbf16>
      %165 = vector.shape_cast %162 : vector<24x8xbf16> to vector<1x24x8xbf16>
      tpu.vector_store %arg5[%c0_99, %c0_100, %c0_101], %165 {strides = array<i32>} : memref<1x24x32xbf16, #tpu.memory_space<vmem>>, vector<1x24x8xbf16>,
      %c0_102 = arith.constant 0 : index
      %c8_103 = arith.constant 8 : index
      %166 = vector.load %arg8[%c0_102, %c8_103] : memref<24x32xf32, #tpu.memory_space<vmem>>, vector<24x8xf32>
      %167 = vector.extract_strided_slice %157 {offsets = [0, 1], sizes = [24, 1], strides = [1, 1]} : vector<24x4xf32> to vector<24x1xf32>
      %168 = vector.broadcast %167 : vector<24x1xf32> to vector<24x8xf32>
      %169 = arith.mulf %166, %168 : vector<24x8xf32>
      %170 = arith.truncf %169 : vector<24x8xf32> to vector<24x8xbf16>
      %c0_104 = arith.constant 0 : index
      %c0_105 = arith.constant 0 : index
      %c8_106 = arith.constant 8 : index
      %171 = vector.load %arg5[%c0_104, %c0_105, %c8_106] : memref<1x24x32xbf16, #tpu.memory_space<vmem>>, vector<1x24x8xbf16>
      %172 = vector.shape_cast %171 : vector<1x24x8xbf16> to vector<24x8xbf16>
      %173 = vector.shape_cast %170 : vector<24x8xbf16> to vector<1x24x8xbf16>
      tpu.vector_store %arg5[%c0_104, %c0_105, %c8_106], %173 {strides = array<i32>} : memref<1x24x32xbf16, #tpu.memory_space<vmem>>, vector<1x24x8xbf16>,
      %c0_107 = arith.constant 0 : index
      %c16_108 = arith.constant 16 : index
      %174 = vector.load %arg8[%c0_107, %c16_108] : memref<24x32xf32, #tpu.memory_space<vmem>>, vector<24x8xf32>
      %175 = vector.extract_strided_slice %157 {offsets = [0, 2], sizes = [24, 1], strides = [1, 1]} : vector<24x4xf32> to vector<24x1xf32>
      %176 = vector.broadcast %175 : vector<24x1xf32> to vector<24x8xf32>
      %177 = arith.mulf %174, %176 : vector<24x8xf32>
      %178 = arith.truncf %177 : vector<24x8xf32> to vector<24x8xbf16>
      %c0_109 = arith.constant 0 : index
      %c0_110 = arith.constant 0 : index
      %c16_111 = arith.constant 16 : index
      %179 = vector.load %arg5[%c0_109, %c0_110, %c16_111] : memref<1x24x32xbf16, #tpu.memory_space<vmem>>, vector<1x24x8xbf16>
      %180 = vector.shape_cast %179 : vector<1x24x8xbf16> to vector<24x8xbf16>
      %181 = vector.shape_cast %178 : vector<24x8xbf16> to vector<1x24x8xbf16>
      tpu.vector_store %arg5[%c0_109, %c0_110, %c16_111], %181 {strides = array<i32>} : memref<1x24x32xbf16, #tpu.memory_space<vmem>>, vector<1x24x8xbf16>,
      %c0_112 = arith.constant 0 : index
      %c24_113 = arith.constant 24 : index
      %182 = vector.load %arg8[%c0_112, %c24_113] : memref<24x32xf32, #tpu.memory_space<vmem>>, vector<24x8xf32>
      %183 = vector.extract_strided_slice %157 {offsets = [0, 3], sizes = [24, 1], strides = [1, 1]} : vector<24x4xf32> to vector<24x1xf32>
      %184 = vector.broadcast %183 : vector<24x1xf32> to vector<24x8xf32>
      %185 = arith.mulf %182, %184 : vector<24x8xf32>
      %186 = arith.truncf %185 : vector<24x8xf32> to vector<24x8xbf16>
      %c0_114 = arith.constant 0 : index
      %c0_115 = arith.constant 0 : index
      %c24_116 = arith.constant 24 : index
      %187 = vector.load %arg5[%c0_114, %c0_115, %c24_116] : memref<1x24x32xbf16, #tpu.memory_space<vmem>>, vector<1x24x8xbf16>
      %188 = vector.shape_cast %187 : vector<1x24x8xbf16> to vector<24x8xbf16>
      %189 = vector.shape_cast %186 : vector<24x8xbf16> to vector<1x24x8xbf16>
      tpu.vector_store %arg5[%c0_114, %c0_115, %c24_116], %189 {strides = array<i32>} : memref<1x24x32xbf16, #tpu.memory_space<vmem>>, vector<1x24x8xbf16>,
    } else {
    }
    return
  }
  func.func @transform_0(%arg0: i32, %arg1: i32, %arg2: i32) -> (i32, i32, i32) {
    %c0_i32 = arith.constant 0 : i32
    %c0_i32_0 = arith.constant 0 : i32
    return %arg0, %arg1, %c0_i32 : i32, i32, i32
  }
  func.func @transform_1(%arg0: i32, %arg1: i32, %arg2: i32) -> (i32, i32, i32) {
    %c0_i32 = arith.constant 0 : i32
    %c0_i32_0 = arith.constant 0 : i32
    return %arg0, %arg2, %c0_i32 : i32, i32, i32
  }
  func.func @transform_2(%arg0: i32, %arg1: i32, %arg2: i32) -> (i32, i32, i32) {
    %c0_i32 = arith.constant 0 : i32
    %c0_i32_0 = arith.constant 0 : i32
    return %arg0, %arg1, %c0_i32 : i32, i32, i32
  }
}

module attributes {stable_mosaic.version = 11 : i64} {
  func.func @_matmul_res_ln_kernel(%arg0: i32, %arg1: i32, %arg2: memref<40x32xbf16, #tpu.memory_space<vmem>>, %arg3: memref<32x32xbf16, #tpu.memory_space<vmem>>, %arg4: memref<1x32xf32, #tpu.memory_space<vmem>>, %arg5: memref<40x32xf32, #tpu.memory_space<vmem>>, %arg6: memref<1x32xf32, #tpu.memory_space<vmem>>, %arg7: memref<1x32xf32, #tpu.memory_space<vmem>>, %arg8: memref<40x32xf32, #tpu.memory_space<vmem>>, %arg9: memref<40x32xf32, #tpu.memory_space<vmem>>) attributes {dimension_semantics = [#tpu.dimension_semantics<parallel>, #tpu.dimension_semantics<arbitrary>], iteration_bounds = array<i64: 1, 1>, scalar_prefetch = 0 : i64, scratch_operands = 1 : i64, tpu.core_type = #tpu.core_type<tc>, window_params = [{transform_indices = @transform_0, window_bounds = array<i64: 40, 32>}, {transform_indices = @transform_1, window_bounds = array<i64: 32, 32>}, {pipeline_mode = #tpu.pipeline_mode<synchronous>, transform_indices = @transform_2, window_bounds = array<i64: 1, 32>}, {transform_indices = @transform_3, window_bounds = array<i64: 40, 32>}, {pipeline_mode = #tpu.pipeline_mode<synchronous>, transform_indices = @transform_4, window_bounds = array<i64: 1, 32>}, {pipeline_mode = #tpu.pipeline_mode<synchronous>, transform_indices = @transform_5, window_bounds = array<i64: 1, 32>}, {transform_indices = @transform_6, window_bounds = array<i64: 40, 32>}]} {
    %c0_i32 = arith.constant 0 : i32
    %0 = arith.cmpi eq, %arg1, %c0_i32 : i32
    %1 = arith.extui %0 : i1 to i32
    %c0_i32_0 = arith.constant 0 : i32
    %2 = arith.cmpi ne, %1, %c0_i32_0 : i32
    scf.if %2 {
      %cst_10 = arith.constant 0.000000e+00 : f32
      %12 = vector.broadcast %cst_10 : f32 to vector<40x32xf32>
      %c0_11 = arith.constant 0 : index
      %c0_12 = arith.constant 0 : index
      %13 = vector.load %arg9[%c0_11, %c0_12] : memref<40x32xf32, #tpu.memory_space<vmem>>, vector<40x32xf32>
      tpu.vector_store %arg9[%c0_11, %c0_12], %12 {strides = array<i32>} : memref<40x32xf32, #tpu.memory_space<vmem>>, vector<40x32xf32>,
    } else {
    }
    %c0 = arith.constant 0 : index
    %c0_1 = arith.constant 0 : index
    %3 = vector.load %arg9[%c0, %c0_1] : memref<40x32xf32, #tpu.memory_space<vmem>>, vector<40x32xf32>
    %c0_2 = arith.constant 0 : index
    %c0_3 = arith.constant 0 : index
    %4 = vector.load %arg2[%c0_2, %c0_3] : memref<40x32xbf16, #tpu.memory_space<vmem>>, vector<40x32xbf16>
    %c0_4 = arith.constant 0 : index
    %c0_5 = arith.constant 0 : index
    %5 = vector.load %arg3[%c0_4, %c0_5] : memref<32x32xbf16, #tpu.memory_space<vmem>>, vector<32x32xbf16>
    %cst = arith.constant dense<0.000000e+00> : vector<40x32xf32>
    %6 = tpu.matmul %4, %5, %cst {dimension_numbers = #tpu.dot_dimension_numbers<[1], [0], [0], [1], [0, 0, 1, 1], [], []>} : vector<40x32xbf16>, vector<32x32xbf16>, vector<40x32xf32> -> vector<40x32xf32>
    %7 = arith.addf %3, %6 : vector<40x32xf32>
    %c0_6 = arith.constant 0 : index
    %c0_7 = arith.constant 0 : index
    %8 = vector.load %arg9[%c0_6, %c0_7] : memref<40x32xf32, #tpu.memory_space<vmem>>, vector<40x32xf32>
    tpu.vector_store %arg9[%c0_6, %c0_7], %7 {strides = array<i32>} : memref<40x32xf32, #tpu.memory_space<vmem>>, vector<40x32xf32>,
    %c0_i32_8 = arith.constant 0 : i32
    %9 = arith.cmpi eq, %arg1, %c0_i32_8 : i32
    %10 = arith.extui %9 : i1 to i32
    %c0_i32_9 = arith.constant 0 : i32
    %11 = arith.cmpi ne, %10, %c0_i32_9 : i32
    scf.if %11 {
      %c0_10 = arith.constant 0 : index
      %c0_11 = arith.constant 0 : index
      %12 = vector.load %arg9[%c0_10, %c0_11] : memref<40x32xf32, #tpu.memory_space<vmem>>, vector<40x32xf32>
      %c0_12 = arith.constant 0 : index
      %c0_13 = arith.constant 0 : index
      %13 = vector.load %arg4[%c0_12, %c0_13] : memref<1x32xf32, #tpu.memory_space<vmem>>, vector<1x32xf32>
      %14 = vector.broadcast %13 : vector<1x32xf32> to vector<40x32xf32>
      %15 = arith.addf %12, %14 : vector<40x32xf32>
      %c0_14 = arith.constant 0 : index
      %c0_15 = arith.constant 0 : index
      %16 = vector.load %arg5[%c0_14, %c0_15] : memref<40x32xf32, #tpu.memory_space<vmem>>, vector<40x32xf32>
      %17 = arith.addf %15, %16 : vector<40x32xf32>
      %cst_16 = arith.constant dense<0.000000e+00> : vector<40xf32>
      %18 = vector.multi_reduction <add>, %17, %cst_16 [1] : vector<40x32xf32> to vector<40xf32>
      %19 = vector.shape_cast %18 : vector<40xf32> to vector<40x1xf32>
      %cst_17 = arith.constant 3.200000e+01 : f32
      %20 = vector.broadcast %cst_17 : f32 to vector<40x1xf32>
      %21 = arith.divf %19, %20 : vector<40x1xf32>
      %22 = vector.broadcast %21 : vector<40x1xf32> to vector<40x32xf32>
      %23 = arith.subf %17, %22 : vector<40x32xf32>
      %24 = arith.mulf %23, %23 : vector<40x32xf32>
      %cst_18 = arith.constant dense<0.000000e+00> : vector<40xf32>
      %25 = vector.multi_reduction <add>, %24, %cst_18 [1] : vector<40x32xf32> to vector<40xf32>
      %26 = vector.shape_cast %25 : vector<40xf32> to vector<40x1xf32>
      %cst_19 = arith.constant 3.200000e+01 : f32
      %27 = vector.broadcast %cst_19 : f32 to vector<40x1xf32>
      %28 = arith.divf %26, %27 : vector<40x1xf32>
      %cst_20 = arith.constant 9.99999974E-6 : f32
      %29 = vector.broadcast %cst_20 : f32 to vector<40x1xf32>
      %30 = arith.addf %28, %29 : vector<40x1xf32>
      %31 = math.rsqrt %30 : vector<40x1xf32>
      %32 = vector.broadcast %31 : vector<40x1xf32> to vector<40x32xf32>
      %33 = arith.mulf %23, %32 : vector<40x32xf32>
      %c0_21 = arith.constant 0 : index
      %c0_22 = arith.constant 0 : index
      %34 = vector.load %arg6[%c0_21, %c0_22] : memref<1x32xf32, #tpu.memory_space<vmem>>, vector<1x32xf32>
      %35 = vector.broadcast %34 : vector<1x32xf32> to vector<40x32xf32>
      %36 = arith.mulf %33, %35 : vector<40x32xf32>
      %c0_23 = arith.constant 0 : index
      %c0_24 = arith.constant 0 : index
      %37 = vector.load %arg7[%c0_23, %c0_24] : memref<1x32xf32, #tpu.memory_space<vmem>>, vector<1x32xf32>
      %38 = vector.broadcast %37 : vector<1x32xf32> to vector<40x32xf32>
      %39 = arith.addf %36, %38 : vector<40x32xf32>
      %c0_25 = arith.constant 0 : index
      %c0_26 = arith.constant 0 : index
      %40 = vector.load %arg8[%c0_25, %c0_26] : memref<40x32xf32, #tpu.memory_space<vmem>>, vector<40x32xf32>
      tpu.vector_store %arg8[%c0_25, %c0_26], %39 {strides = array<i32>} : memref<40x32xf32, #tpu.memory_space<vmem>>, vector<40x32xf32>,
    } else {
    }
    return
  }
  func.func @transform_0(%arg0: i32, %arg1: i32) -> (i32, i32) {
    %c0_i32 = arith.constant 0 : i32
    return %arg0, %arg1 : i32, i32
  }
  func.func @transform_1(%arg0: i32, %arg1: i32) -> (i32, i32) {
    %c0_i32 = arith.constant 0 : i32
    %c0_i32_0 = arith.constant 0 : i32
    return %arg1, %c0_i32 : i32, i32
  }
  func.func @transform_2(%arg0: i32, %arg1: i32) -> (i32, i32) {
    %c0_i32 = arith.constant 0 : i32
    %c0_i32_0 = arith.constant 0 : i32
    %c0_i32_1 = arith.constant 0 : i32
    return %c0_i32, %c0_i32_0 : i32, i32
  }
  func.func @transform_3(%arg0: i32, %arg1: i32) -> (i32, i32) {
    %c0_i32 = arith.constant 0 : i32
    %c0_i32_0 = arith.constant 0 : i32
    return %arg0, %c0_i32 : i32, i32
  }
  func.func @transform_4(%arg0: i32, %arg1: i32) -> (i32, i32) {
    %c0_i32 = arith.constant 0 : i32
    %c0_i32_0 = arith.constant 0 : i32
    %c0_i32_1 = arith.constant 0 : i32
    return %c0_i32, %c0_i32_0 : i32, i32
  }
  func.func @transform_5(%arg0: i32, %arg1: i32) -> (i32, i32) {
    %c0_i32 = arith.constant 0 : i32
    %c0_i32_0 = arith.constant 0 : i32
    %c0_i32_1 = arith.constant 0 : i32
    return %c0_i32, %c0_i32_0 : i32, i32
  }
  func.func @transform_6(%arg0: i32, %arg1: i32) -> (i32, i32) {
    %c0_i32 = arith.constant 0 : i32
    %c0_i32_0 = arith.constant 0 : i32
    return %arg0, %c0_i32 : i32, i32
  }
}

module attributes {stable_mosaic.version = 11 : i64} {
  func.func @_matmul_kernel(%arg0: i32, %arg1: i32, %arg2: i32, %arg3: memref<40x32xbf16, #tpu.memory_space<vmem>>, %arg4: memref<32x64xbf16, #tpu.memory_space<vmem>>, %arg5: memref<1x64xf32, #tpu.memory_space<vmem>>, %arg6: memref<40x64xbf16, #tpu.memory_space<vmem>>, %arg7: memref<40x64xf32, #tpu.memory_space<vmem>>) attributes {dimension_semantics = [#tpu.dimension_semantics<parallel>, #tpu.dimension_semantics<parallel>, #tpu.dimension_semantics<arbitrary>], iteration_bounds = array<i64: 1, 1, 1>, scalar_prefetch = 0 : i64, scratch_operands = 1 : i64, tpu.core_type = #tpu.core_type<tc>, window_params = [{transform_indices = @transform_0, window_bounds = array<i64: 40, 32>}, {transform_indices = @transform_1, window_bounds = array<i64: 32, 64>}, {transform_indices = @transform_2, window_bounds = array<i64: 1, 64>}, {transform_indices = @transform_3, window_bounds = array<i64: 40, 64>}]} {
    %c0_i32 = arith.constant 0 : i32
    %0 = arith.cmpi eq, %arg2, %c0_i32 : i32
    %1 = arith.extui %0 : i1 to i32
    %c0_i32_0 = arith.constant 0 : i32
    %2 = arith.cmpi ne, %1, %c0_i32_0 : i32
    scf.if %2 {
      %cst_10 = arith.constant 0.000000e+00 : f32
      %12 = vector.broadcast %cst_10 : f32 to vector<40x64xf32>
      %c0_11 = arith.constant 0 : index
      %c0_12 = arith.constant 0 : index
      %13 = vector.load %arg7[%c0_11, %c0_12] : memref<40x64xf32, #tpu.memory_space<vmem>>, vector<40x64xf32>
      tpu.vector_store %arg7[%c0_11, %c0_12], %12 {strides = array<i32>} : memref<40x64xf32, #tpu.memory_space<vmem>>, vector<40x64xf32>,
    } else {
    }
    %c0 = arith.constant 0 : index
    %c0_1 = arith.constant 0 : index
    %3 = vector.load %arg7[%c0, %c0_1] : memref<40x64xf32, #tpu.memory_space<vmem>>, vector<40x64xf32>
    %c0_2 = arith.constant 0 : index
    %c0_3 = arith.constant 0 : index
    %4 = vector.load %arg3[%c0_2, %c0_3] : memref<40x32xbf16, #tpu.memory_space<vmem>>, vector<40x32xbf16>
    %c0_4 = arith.constant 0 : index
    %c0_5 = arith.constant 0 : index
    %5 = vector.load %arg4[%c0_4, %c0_5] : memref<32x64xbf16, #tpu.memory_space<vmem>>, vector<32x64xbf16>
    %cst = arith.constant dense<0.000000e+00> : vector<40x64xf32>
    %6 = tpu.matmul %4, %5, %cst {dimension_numbers = #tpu.dot_dimension_numbers<[1], [0], [0], [1], [0, 0, 1, 1], [], []>} : vector<40x32xbf16>, vector<32x64xbf16>, vector<40x64xf32> -> vector<40x64xf32>
    %7 = arith.addf %3, %6 : vector<40x64xf32>
    %c0_6 = arith.constant 0 : index
    %c0_7 = arith.constant 0 : index
    %8 = vector.load %arg7[%c0_6, %c0_7] : memref<40x64xf32, #tpu.memory_space<vmem>>, vector<40x64xf32>
    tpu.vector_store %arg7[%c0_6, %c0_7], %7 {strides = array<i32>} : memref<40x64xf32, #tpu.memory_space<vmem>>, vector<40x64xf32>,
    %c0_i32_8 = arith.constant 0 : i32
    %9 = arith.cmpi eq, %arg2, %c0_i32_8 : i32
    %10 = arith.extui %9 : i1 to i32
    %c0_i32_9 = arith.constant 0 : i32
    %11 = arith.cmpi ne, %10, %c0_i32_9 : i32
    scf.if %11 {
      %c0_10 = arith.constant 0 : index
      %c0_11 = arith.constant 0 : index
      %12 = vector.load %arg7[%c0_10, %c0_11] : memref<40x64xf32, #tpu.memory_space<vmem>>, vector<40x64xf32>
      %c0_12 = arith.constant 0 : index
      %c0_13 = arith.constant 0 : index
      %13 = vector.load %arg5[%c0_12, %c0_13] : memref<1x64xf32, #tpu.memory_space<vmem>>, vector<1x64xf32>
      %14 = vector.broadcast %13 : vector<1x64xf32> to vector<40x64xf32>
      %15 = arith.addf %12, %14 : vector<40x64xf32>
      %16 = arith.mulf %15, %15 : vector<40x64xf32>
      %17 = arith.mulf %15, %16 : vector<40x64xf32>
      %cst_14 = arith.constant 4.471500e-02 : f32
      %18 = vector.broadcast %cst_14 : f32 to vector<40x64xf32>
      %19 = arith.mulf %18, %17 : vector<40x64xf32>
      %20 = arith.addf %15, %19 : vector<40x64xf32>
      %cst_15 = arith.constant 0.797884583 : f32
      %21 = vector.broadcast %cst_15 : f32 to vector<40x64xf32>
      %22 = arith.mulf %21, %20 : vector<40x64xf32>
      %23 = math.tanh %22 : vector<40x64xf32>
      %cst_16 = arith.constant 1.000000e+00 : f32
      %24 = vector.broadcast %cst_16 : f32 to vector<40x64xf32>
      %25 = arith.addf %24, %23 : vector<40x64xf32>
      %cst_17 = arith.constant 5.000000e-01 : f32
      %26 = vector.broadcast %cst_17 : f32 to vector<40x64xf32>
      %27 = arith.mulf %26, %25 : vector<40x64xf32>
      %28 = arith.mulf %15, %27 : vector<40x64xf32>
      %29 = arith.truncf %28 : vector<40x64xf32> to vector<40x64xbf16>
      %c0_18 = arith.constant 0 : index
      %c0_19 = arith.constant 0 : index
      %30 = vector.load %arg6[%c0_18, %c0_19] : memref<40x64xbf16, #tpu.memory_space<vmem>>, vector<40x64xbf16>
      tpu.vector_store %arg6[%c0_18, %c0_19], %29 {strides = array<i32>} : memref<40x64xbf16, #tpu.memory_space<vmem>>, vector<40x64xbf16>,
    } else {
    }
    return
  }
  func.func @transform_0(%arg0: i32, %arg1: i32, %arg2: i32) -> (i32, i32) {
    %c0_i32 = arith.constant 0 : i32
    return %arg0, %arg2 : i32, i32
  }
  func.func @transform_1(%arg0: i32, %arg1: i32, %arg2: i32) -> (i32, i32) {
    %c0_i32 = arith.constant 0 : i32
    return %arg2, %arg1 : i32, i32
  }
  func.func @transform_2(%arg0: i32, %arg1: i32, %arg2: i32) -> (i32, i32) {
    %c0_i32 = arith.constant 0 : i32
    %c0_i32_0 = arith.constant 0 : i32
    return %c0_i32, %arg1 : i32, i32
  }
  func.func @transform_3(%arg0: i32, %arg1: i32, %arg2: i32) -> (i32, i32) {
    %c0_i32 = arith.constant 0 : i32
    return %arg0, %arg1 : i32, i32
  }
}

module attributes {stable_mosaic.version = 11 : i64} {
  func.func @_matmul_res_ln_kernel(%arg0: i32, %arg1: i32, %arg2: memref<40x64xbf16, #tpu.memory_space<vmem>>, %arg3: memref<64x32xbf16, #tpu.memory_space<vmem>>, %arg4: memref<1x32xf32, #tpu.memory_space<vmem>>, %arg5: memref<40x32xf32, #tpu.memory_space<vmem>>, %arg6: memref<1x32xf32, #tpu.memory_space<vmem>>, %arg7: memref<1x32xf32, #tpu.memory_space<vmem>>, %arg8: memref<40x32xf32, #tpu.memory_space<vmem>>, %arg9: memref<40x32xf32, #tpu.memory_space<vmem>>) attributes {dimension_semantics = [#tpu.dimension_semantics<parallel>, #tpu.dimension_semantics<arbitrary>], iteration_bounds = array<i64: 1, 1>, scalar_prefetch = 0 : i64, scratch_operands = 1 : i64, tpu.core_type = #tpu.core_type<tc>, window_params = [{transform_indices = @transform_0, window_bounds = array<i64: 40, 64>}, {transform_indices = @transform_1, window_bounds = array<i64: 64, 32>}, {pipeline_mode = #tpu.pipeline_mode<synchronous>, transform_indices = @transform_2, window_bounds = array<i64: 1, 32>}, {transform_indices = @transform_3, window_bounds = array<i64: 40, 32>}, {pipeline_mode = #tpu.pipeline_mode<synchronous>, transform_indices = @transform_4, window_bounds = array<i64: 1, 32>}, {pipeline_mode = #tpu.pipeline_mode<synchronous>, transform_indices = @transform_5, window_bounds = array<i64: 1, 32>}, {transform_indices = @transform_6, window_bounds = array<i64: 40, 32>}]} {
    %c0_i32 = arith.constant 0 : i32
    %0 = arith.cmpi eq, %arg1, %c0_i32 : i32
    %1 = arith.extui %0 : i1 to i32
    %c0_i32_0 = arith.constant 0 : i32
    %2 = arith.cmpi ne, %1, %c0_i32_0 : i32
    scf.if %2 {
      %cst_10 = arith.constant 0.000000e+00 : f32
      %12 = vector.broadcast %cst_10 : f32 to vector<40x32xf32>
      %c0_11 = arith.constant 0 : index
      %c0_12 = arith.constant 0 : index
      %13 = vector.load %arg9[%c0_11, %c0_12] : memref<40x32xf32, #tpu.memory_space<vmem>>, vector<40x32xf32>
      tpu.vector_store %arg9[%c0_11, %c0_12], %12 {strides = array<i32>} : memref<40x32xf32, #tpu.memory_space<vmem>>, vector<40x32xf32>,
    } else {
    }
    %c0 = arith.constant 0 : index
    %c0_1 = arith.constant 0 : index
    %3 = vector.load %arg9[%c0, %c0_1] : memref<40x32xf32, #tpu.memory_space<vmem>>, vector<40x32xf32>
    %c0_2 = arith.constant 0 : index
    %c0_3 = arith.constant 0 : index
    %4 = vector.load %arg2[%c0_2, %c0_3] : memref<40x64xbf16, #tpu.memory_space<vmem>>, vector<40x64xbf16>
    %c0_4 = arith.constant 0 : index
    %c0_5 = arith.constant 0 : index
    %5 = vector.load %arg3[%c0_4, %c0_5] : memref<64x32xbf16, #tpu.memory_space<vmem>>, vector<64x32xbf16>
    %cst = arith.constant dense<0.000000e+00> : vector<40x32xf32>
    %6 = tpu.matmul %4, %5, %cst {dimension_numbers = #tpu.dot_dimension_numbers<[1], [0], [0], [1], [0, 0, 1, 1], [], []>} : vector<40x64xbf16>, vector<64x32xbf16>, vector<40x32xf32> -> vector<40x32xf32>
    %7 = arith.addf %3, %6 : vector<40x32xf32>
    %c0_6 = arith.constant 0 : index
    %c0_7 = arith.constant 0 : index
    %8 = vector.load %arg9[%c0_6, %c0_7] : memref<40x32xf32, #tpu.memory_space<vmem>>, vector<40x32xf32>
    tpu.vector_store %arg9[%c0_6, %c0_7], %7 {strides = array<i32>} : memref<40x32xf32, #tpu.memory_space<vmem>>, vector<40x32xf32>,
    %c0_i32_8 = arith.constant 0 : i32
    %9 = arith.cmpi eq, %arg1, %c0_i32_8 : i32
    %10 = arith.extui %9 : i1 to i32
    %c0_i32_9 = arith.constant 0 : i32
    %11 = arith.cmpi ne, %10, %c0_i32_9 : i32
    scf.if %11 {
      %c0_10 = arith.constant 0 : index
      %c0_11 = arith.constant 0 : index
      %12 = vector.load %arg9[%c0_10, %c0_11] : memref<40x32xf32, #tpu.memory_space<vmem>>, vector<40x32xf32>
      %c0_12 = arith.constant 0 : index
      %c0_13 = arith.constant 0 : index
      %13 = vector.load %arg4[%c0_12, %c0_13] : memref<1x32xf32, #tpu.memory_space<vmem>>, vector<1x32xf32>
      %14 = vector.broadcast %13 : vector<1x32xf32> to vector<40x32xf32>
      %15 = arith.addf %12, %14 : vector<40x32xf32>
      %c0_14 = arith.constant 0 : index
      %c0_15 = arith.constant 0 : index
      %16 = vector.load %arg5[%c0_14, %c0_15] : memref<40x32xf32, #tpu.memory_space<vmem>>, vector<40x32xf32>
      %17 = arith.addf %15, %16 : vector<40x32xf32>
      %cst_16 = arith.constant dense<0.000000e+00> : vector<40xf32>
      %18 = vector.multi_reduction <add>, %17, %cst_16 [1] : vector<40x32xf32> to vector<40xf32>
      %19 = vector.shape_cast %18 : vector<40xf32> to vector<40x1xf32>
      %cst_17 = arith.constant 3.200000e+01 : f32
      %20 = vector.broadcast %cst_17 : f32 to vector<40x1xf32>
      %21 = arith.divf %19, %20 : vector<40x1xf32>
      %22 = vector.broadcast %21 : vector<40x1xf32> to vector<40x32xf32>
      %23 = arith.subf %17, %22 : vector<40x32xf32>
      %24 = arith.mulf %23, %23 : vector<40x32xf32>
      %cst_18 = arith.constant dense<0.000000e+00> : vector<40xf32>
      %25 = vector.multi_reduction <add>, %24, %cst_18 [1] : vector<40x32xf32> to vector<40xf32>
      %26 = vector.shape_cast %25 : vector<40xf32> to vector<40x1xf32>
      %cst_19 = arith.constant 3.200000e+01 : f32
      %27 = vector.broadcast %cst_19 : f32 to vector<40x1xf32>
      %28 = arith.divf %26, %27 : vector<40x1xf32>
      %cst_20 = arith.constant 9.99999974E-6 : f32
      %29 = vector.broadcast %cst_20 : f32 to vector<40x1xf32>
      %30 = arith.addf %28, %29 : vector<40x1xf32>
      %31 = math.rsqrt %30 : vector<40x1xf32>
      %32 = vector.broadcast %31 : vector<40x1xf32> to vector<40x32xf32>
      %33 = arith.mulf %23, %32 : vector<40x32xf32>
      %c0_21 = arith.constant 0 : index
      %c0_22 = arith.constant 0 : index
      %34 = vector.load %arg6[%c0_21, %c0_22] : memref<1x32xf32, #tpu.memory_space<vmem>>, vector<1x32xf32>
      %35 = vector.broadcast %34 : vector<1x32xf32> to vector<40x32xf32>
      %36 = arith.mulf %33, %35 : vector<40x32xf32>
      %c0_23 = arith.constant 0 : index
      %c0_24 = arith.constant 0 : index
      %37 = vector.load %arg7[%c0_23, %c0_24] : memref<1x32xf32, #tpu.memory_space<vmem>>, vector<1x32xf32>
      %38 = vector.broadcast %37 : vector<1x32xf32> to vector<40x32xf32>
      %39 = arith.addf %36, %38 : vector<40x32xf32>
      %c0_25 = arith.constant 0 : index
      %c0_26 = arith.constant 0 : index
      %40 = vector.load %arg8[%c0_25, %c0_26] : memref<40x32xf32, #tpu.memory_space<vmem>>, vector<40x32xf32>
      tpu.vector_store %arg8[%c0_25, %c0_26], %39 {strides = array<i32>} : memref<40x32xf32, #tpu.memory_space<vmem>>, vector<40x32xf32>,
    } else {
    }
    return
  }
  func.func @transform_0(%arg0: i32, %arg1: i32) -> (i32, i32) {
    %c0_i32 = arith.constant 0 : i32
    return %arg0, %arg1 : i32, i32
  }
  func.func @transform_1(%arg0: i32, %arg1: i32) -> (i32, i32) {
    %c0_i32 = arith.constant 0 : i32
    %c0_i32_0 = arith.constant 0 : i32
    return %arg1, %c0_i32 : i32, i32
  }
  func.func @transform_2(%arg0: i32, %arg1: i32) -> (i32, i32) {
    %c0_i32 = arith.constant 0 : i32
    %c0_i32_0 = arith.constant 0 : i32
    %c0_i32_1 = arith.constant 0 : i32
    return %c0_i32, %c0_i32_0 : i32, i32
  }
  func.func @transform_3(%arg0: i32, %arg1: i32) -> (i32, i32) {
    %c0_i32 = arith.constant 0 : i32
    %c0_i32_0 = arith.constant 0 : i32
    return %arg0, %c0_i32 : i32, i32
  }
  func.func @transform_4(%arg0: i32, %arg1: i32) -> (i32, i32) {
    %c0_i32 = arith.constant 0 : i32
    %c0_i32_0 = arith.constant 0 : i32
    %c0_i32_1 = arith.constant 0 : i32
    return %c0_i32, %c0_i32_0 : i32, i32
  }
  func.func @transform_5(%arg0: i32, %arg1: i32) -> (i32, i32) {
    %c0_i32 = arith.constant 0 : i32
    %c0_i32_0 = arith.constant 0 : i32
    %c0_i32_1 = arith.constant 0 : i32
    return %c0_i32, %c0_i32_0 : i32, i32
  }
  func.func @transform_6(%arg0: i32, %arg1: i32) -> (i32, i32) {
    %c0_i32 = arith.constant 0 : i32
    %c0_i32_0 = arith.constant 0 : i32
    return %arg0, %c0_i32 : i32, i32
  }
}

module attributes {stable_mosaic.version = 11 : i64} {
  func.func @_layer_norm_kernel(%arg0: i32, %arg1: memref<40x32xf32, #tpu.memory_space<vmem>>, %arg2: memref<1x32xf32, #tpu.memory_space<vmem>>, %arg3: memref<1x32xf32, #tpu.memory_space<vmem>>, %arg4: memref<40x32xf32, #tpu.memory_space<vmem>>) attributes {dimension_semantics = [#tpu.dimension_semantics<parallel>], iteration_bounds = array<i64: 1>, scalar_prefetch = 0 : i64, scratch_operands = 0 : i64, tpu.core_type = #tpu.core_type<tc>, window_params = [{transform_indices = @transform_0, window_bounds = array<i64: 40, 32>}, {pipeline_mode = #tpu.pipeline_mode<synchronous>, transform_indices = @transform_1, window_bounds = array<i64: 1, 32>}, {pipeline_mode = #tpu.pipeline_mode<synchronous>, transform_indices = @transform_2, window_bounds = array<i64: 1, 32>}, {transform_indices = @transform_3, window_bounds = array<i64: 40, 32>}]} {
    %c0 = arith.constant 0 : index
    %c0_0 = arith.constant 0 : index
    %0 = vector.load %arg1[%c0, %c0_0] : memref<40x32xf32, #tpu.memory_space<vmem>>, vector<40x32xf32>
    %cst = arith.constant dense<0.000000e+00> : vector<40xf32>
    %1 = vector.multi_reduction <add>, %0, %cst [1] : vector<40x32xf32> to vector<40xf32>
    %2 = vector.shape_cast %1 : vector<40xf32> to vector<40x1xf32>
    %cst_1 = arith.constant 3.200000e+01 : f32
    %3 = vector.broadcast %cst_1 : f32 to vector<40x1xf32>
    %4 = arith.divf %2, %3 : vector<40x1xf32>
    %5 = vector.broadcast %4 : vector<40x1xf32> to vector<40x32xf32>
    %6 = arith.subf %0, %5 : vector<40x32xf32>
    %7 = arith.mulf %6, %6 : vector<40x32xf32>
    %cst_2 = arith.constant dense<0.000000e+00> : vector<40xf32>
    %8 = vector.multi_reduction <add>, %7, %cst_2 [1] : vector<40x32xf32> to vector<40xf32>
    %9 = vector.shape_cast %8 : vector<40xf32> to vector<40x1xf32>
    %cst_3 = arith.constant 3.200000e+01 : f32
    %10 = vector.broadcast %cst_3 : f32 to vector<40x1xf32>
    %11 = arith.divf %9, %10 : vector<40x1xf32>
    %cst_4 = arith.constant 9.99999974E-6 : f32
    %12 = vector.broadcast %cst_4 : f32 to vector<40x1xf32>
    %13 = arith.addf %11, %12 : vector<40x1xf32>
    %14 = math.rsqrt %13 : vector<40x1xf32>
    %15 = vector.broadcast %14 : vector<40x1xf32> to vector<40x32xf32>
    %16 = arith.mulf %6, %15 : vector<40x32xf32>
    %c0_5 = arith.constant 0 : index
    %c0_6 = arith.constant 0 : index
    %17 = vector.load %arg2[%c0_5, %c0_6] : memref<1x32xf32, #tpu.memory_space<vmem>>, vector<1x32xf32>
    %18 = vector.broadcast %17 : vector<1x32xf32> to vector<40x32xf32>
    %19 = arith.mulf %16, %18 : vector<40x32xf32>
    %c0_7 = arith.constant 0 : index
    %c0_8 = arith.constant 0 : index
    %20 = vector.load %arg3[%c0_7, %c0_8] : memref<1x32xf32, #tpu.memory_space<vmem>>, vector<1x32xf32>
    %21 = vector.broadcast %20 : vector<1x32xf32> to vector<40x32xf32>
    %22 = arith.addf %19, %21 : vector<40x32xf32>
    %c0_9 = arith.constant 0 : index
    %c0_10 = arith.constant 0 : index
    %23 = vector.load %arg4[%c0_9, %c0_10] : memref<40x32xf32, #tpu.memory_space<vmem>>, vector<40x32xf32>
    tpu.vector_store %arg4[%c0_9, %c0_10], %22 {strides = array<i32>} : memref<40x32xf32, #tpu.memory_space<vmem>>, vector<40x32xf32>,
    return
  }
  func.func @transform_0(%arg0: i32) -> (i32, i32) {
    %c0_i32 = arith.constant 0 : i32
    %c0_i32_0 = arith.constant 0 : i32
    return %arg0, %c0_i32 : i32, i32
  }
  func.func @transform_1(%arg0: i32) -> (i32, i32) {
    %c0_i32 = arith.constant 0 : i32
    %c0_i32_0 = arith.constant 0 : i32
    %c0_i32_1 = arith.constant 0 : i32
    return %c0_i32, %c0_i32_0 : i32, i32
  }
  func.func @transform_2(%arg0: i32) -> (i32, i32) {
    %c0_i32 = arith.constant 0 : i32
    %c0_i32_0 = arith.constant 0 : i32
    %c0_i32_1 = arith.constant 0 : i32
    return %c0_i32, %c0_i32_0 : i32, i32
  }
  func.func @transform_3(%arg0: i32) -> (i32, i32) {
    %c0_i32 = arith.constant 0 : i32
    %c0_i32_0 = arith.constant 0 : i32
    return %arg0, %c0_i32 : i32, i32
  }
}

module attributes {stable_mosaic.version = 11 : i64} {
  func.func @_matmul_kernel(%arg0: i32, %arg1: i32, %arg2: i32, %arg3: memref<32x32xf32, #tpu.memory_space<vmem>>, %arg4: memref<32x4xf32, #tpu.memory_space<vmem>>, %arg5: memref<1x4xf32, #tpu.memory_space<vmem>>, %arg6: memref<32x4xf32, #tpu.memory_space<vmem>>, %arg7: memref<32x4xf32, #tpu.memory_space<vmem>>) attributes {dimension_semantics = [#tpu.dimension_semantics<parallel>, #tpu.dimension_semantics<parallel>, #tpu.dimension_semantics<arbitrary>], iteration_bounds = array<i64: 1, 1, 1>, scalar_prefetch = 0 : i64, scratch_operands = 1 : i64, tpu.core_type = #tpu.core_type<tc>, window_params = [{transform_indices = @transform_0, window_bounds = array<i64: 32, 32>}, {transform_indices = @transform_1, window_bounds = array<i64: 32, 4>}, {transform_indices = @transform_2, window_bounds = array<i64: 1, 4>}, {transform_indices = @transform_3, window_bounds = array<i64: 32, 4>}]} {
    %c0_i32 = arith.constant 0 : i32
    %0 = arith.cmpi eq, %arg2, %c0_i32 : i32
    %1 = arith.extui %0 : i1 to i32
    %c0_i32_0 = arith.constant 0 : i32
    %2 = arith.cmpi ne, %1, %c0_i32_0 : i32
    scf.if %2 {
      %cst_10 = arith.constant 0.000000e+00 : f32
      %12 = vector.broadcast %cst_10 : f32 to vector<32x4xf32>
      %c0_11 = arith.constant 0 : index
      %c0_12 = arith.constant 0 : index
      %13 = vector.load %arg7[%c0_11, %c0_12] : memref<32x4xf32, #tpu.memory_space<vmem>>, vector<32x4xf32>
      tpu.vector_store %arg7[%c0_11, %c0_12], %12 {strides = array<i32>} : memref<32x4xf32, #tpu.memory_space<vmem>>, vector<32x4xf32>,
    } else {
    }
    %c0 = arith.constant 0 : index
    %c0_1 = arith.constant 0 : index
    %3 = vector.load %arg7[%c0, %c0_1] : memref<32x4xf32, #tpu.memory_space<vmem>>, vector<32x4xf32>
    %c0_2 = arith.constant 0 : index
    %c0_3 = arith.constant 0 : index
    %4 = vector.load %arg3[%c0_2, %c0_3] : memref<32x32xf32, #tpu.memory_space<vmem>>, vector<32x32xf32>
    %c0_4 = arith.constant 0 : index
    %c0_5 = arith.constant 0 : index
    %5 = vector.load %arg4[%c0_4, %c0_5] : memref<32x4xf32, #tpu.memory_space<vmem>>, vector<32x4xf32>
    %cst = arith.constant dense<0.000000e+00> : vector<32x4xf32>
    %6 = tpu.matmul %4, %5, %cst {dimension_numbers = #tpu.dot_dimension_numbers<[1], [0], [0], [1], [0, 0, 1, 1], [], []>} : vector<32x32xf32>, vector<32x4xf32>, vector<32x4xf32> -> vector<32x4xf32>
    %7 = arith.addf %3, %6 : vector<32x4xf32>
    %c0_6 = arith.constant 0 : index
    %c0_7 = arith.constant 0 : index
    %8 = vector.load %arg7[%c0_6, %c0_7] : memref<32x4xf32, #tpu.memory_space<vmem>>, vector<32x4xf32>
    tpu.vector_store %arg7[%c0_6, %c0_7], %7 {strides = array<i32>} : memref<32x4xf32, #tpu.memory_space<vmem>>, vector<32x4xf32>,
    %c0_i32_8 = arith.constant 0 : i32
    %9 = arith.cmpi eq, %arg2, %c0_i32_8 : i32
    %10 = arith.extui %9 : i1 to i32
    %c0_i32_9 = arith.constant 0 : i32
    %11 = arith.cmpi ne, %10, %c0_i32_9 : i32
    scf.if %11 {
      %c0_10 = arith.constant 0 : index
      %c0_11 = arith.constant 0 : index
      %12 = vector.load %arg7[%c0_10, %c0_11] : memref<32x4xf32, #tpu.memory_space<vmem>>, vector<32x4xf32>
      %c0_12 = arith.constant 0 : index
      %c0_13 = arith.constant 0 : index
      %13 = vector.load %arg5[%c0_12, %c0_13] : memref<1x4xf32, #tpu.memory_space<vmem>>, vector<1x4xf32>
      %14 = vector.broadcast %13 : vector<1x4xf32> to vector<32x4xf32>
      %15 = arith.addf %12, %14 : vector<32x4xf32>
      %c0_14 = arith.constant 0 : index
      %c0_15 = arith.constant 0 : index
      %16 = vector.load %arg6[%c0_14, %c0_15] : memref<32x4xf32, #tpu.memory_space<vmem>>, vector<32x4xf32>
      tpu.vector_store %arg6[%c0_14, %c0_15], %15 {strides = array<i32>} : memref<32x4xf32, #tpu.memory_space<vmem>>, vector<32x4xf32>,
    } else {
    }
    return
  }
  func.func @transform_0(%arg0: i32, %arg1: i32, %arg2: i32) -> (i32, i32) {
    %c0_i32 = arith.constant 0 : i32
    return %arg0, %arg2 : i32, i32
  }
  func.func @transform_1(%arg0: i32, %arg1: i32, %arg2: i32) -> (i32, i32) {
    %c0_i32 = arith.constant 0 : i32
    return %arg2, %arg1 : i32, i32
  }
  func.func @transform_2(%arg0: i32, %arg1: i32, %arg2: i32) -> (i32, i32) {
    %c0_i32 = arith.constant 0 : i32
    %c0_i32_0 = arith.constant 0 : i32
    return %c0_i32, %arg1 : i32, i32
  }
  func.func @transform_3(%arg0: i32, %arg1: i32, %arg2: i32) -> (i32, i32) {
    %c0_i32 = arith.constant 0 : i32
    return %arg0, %arg1 : i32, i32
  }
}

</mosaic_0001>

<llo_original>
// kernel: _lambda_.14
$region0: #{_lambda_.14}
  #allocation0 [shape = 'u32[]', space=smem, size = 0x4, offset = 0x4, fixed_abs, tag = 'smem constant byte address 0x4 - core index']
  #allocation1 [shape = 'u32[144,128]{1,0:T(1,128)}', space=vmem, size = 0x12000, scoped, tag = 'internal scratch']
  #allocation2 [shape = 'f32[40,96]{1,0:T(8,128)}', space=vmem, size = 0x5000, scoped, tag = 'scratch operand']
  %s0 = inlined_call_operand.vmem [shape: bf16[40,32], index: 0, kind: input, shape index: {}]
  %s1 = inlined_call_operand.vmem [shape: bf16[32,96], index: 1, kind: input, shape index: {}]
  %s2 = inlined_call_operand.vmem [shape: f32[1,96], index: 2, kind: input, shape index: {}]
  %s3 = inlined_call_operand.vmem [shape: bf16[40,96], index: 3, kind: output, shape index: {}]
  %s4 = sld [smem:[#allocation0]]
  $region30: #{_lambda_.14} parent=0
    _
  %s6 = ssub.s32 1, %s4
  %s7 = scalar_select 0, %s6, %s4
  // Predicated region
  $region2: #{_lambda_.14} parent=0 // pred_check
    _
  $region3: #{_lambda_.14} parent=0 // pred_check_branch
    %9 = sbr.rel (0) target = $region5
  $region4: #{_lambda_.14} parent=0 // pred_region
    _
  $region5: #{_lambda_.14} parent=0 // pred_fallthru
    _
  // Predicated region
  $region6: #{_lambda_.14} parent=0 // pred_check
    _
  $region7: #{_lambda_.14} parent=0 // pred_check_branch
    %11 = sbr.rel (0) target = $region9
  $region8: #{_lambda_.14} parent=0 // pred_region
    _
  $region9: #{_lambda_.14} parent=0 // pred_fallthru
    _
  // Predicated region
  $region10: #{_lambda_.14} parent=0 // pred_check
    _
  $region11: #{_lambda_.14} parent=0 // pred_check_branch
    %13 = sbr.rel (0) target = $region13
  $region12: #{_lambda_.14} parent=0 // pred_region
    _
  $region13: #{_lambda_.14} parent=0 // pred_fallthru
    _
  %p15 = scmp.eq.s32.totalorder 0, 0
  // Predicated region
  $region14: #{_lambda_.14} parent=0 // pred_check
    %p16 = pneg %p15
  $region15: #{_lambda_.14} parent=0 // pred_check_branch
    %18 = sbr.rel (%p16) target = $region17
  $region16: #{_lambda_.14} parent=0 // pred_region
    %vm19 = vcmask 785408
    %20 = vst.msk [vmem:[#allocation2] sm:$0xff] %vm19, 0.0
    %21 = vst.msk [vmem:[#allocation2 + $0x8] sm:$0xff] %vm19, 0.0
    %22 = vst.msk [vmem:[#allocation2 + $0x10] sm:$0xff] %vm19, 0.0
    %23 = vst.msk [vmem:[#allocation2 + $0x18] sm:$0xff] %vm19, 0.0
    %24 = vst.msk [vmem:[#allocation2 + $0x20] sm:$0xff] %vm19, 0.0
  $region17: #{_lambda_.14} parent=0 // pred_fallthru
    _
  %v25 = vld [vmem:[#allocation2] sm:$0xff]
  %v26 = vld [vmem:[#allocation2 + $0x8] sm:$0xff]
  %v27 = vld [vmem:[#allocation2 + $0x10] sm:$0xff]
  %v28 = vld [vmem:[#allocation2 + $0x18] sm:$0xff]
  %v29 = vld [vmem:[#allocation2 + $0x20] sm:$0xff]
  %v30 = vld [vmem:[%s0] sm:$0xf]
  %v31 = vld [vmem:[%s0 + $0x4] sm:$0xf]
  %v32 = vld [vmem:[%s0 + $0x8] sm:$0xf]
  %v33 = vld [vmem:[%s0 + $0xc] sm:$0xf]
  %v34 = vld [vmem:[%s0 + $0x10] sm:$0xf]
  %v35 = vld [vmem:[%s1] sm:$0xf]
  %v36 = vld [vmem:[%s1 + $0x4] sm:$0xf]
  %v37 = vld [vmem:[%s1 + $0x8] sm:$0xf]
  %v38 = vld [vmem:[%s1 + $0xc] sm:$0xf]
  %v44 = vunpack.c.l.b16 %v30
  %v45 = vunpack.c.l.b16 %v31
  %v46 = vunpack.c.l.b16 %v32
  %v47 = vunpack.c.l.b16 %v33
  %v48 = vunpack.c.l.b16 %v34
  %v49 = vpack.c.b16 %v45, %v44
  %v50 = vpack.c.b16 %v47, %v46
  %v51 = vpack.c.b16 %v48, %v48
  %v56 = vunpack.c.l.b16 %v35
  %v57 = vunpack.c.l.b16 %v36
  %v58 = vunpack.c.l.b16 %v37
  %v59 = vunpack.c.l.b16 %v38
  %v60 = vpack.c.b16 %v57, %v56
  %v61 = vpack.c.b16 %v59, %v58
  %vm64 = vcmask 261120
  %v66 = vsel %vm64, %v49, 0
  %v69 = vsel %vm64, %v50, 0
  %v72 = vsel %vm64, %v51, 0
  %74 = vmatprep.subr.bf16.mxu0 0
  %75 = vmatpush1.bf16.msra.mxu0 %v60
  %76 = vmatprep.subr.bf16.mxu0 0
  %77 = vmatpush1.bf16.msra.mxu0 %v61
  %78 = vmatprep.subr.bf16.mxu0 0
  %79 = vmatpush1.bf16.msra.mxu0 0
  %80 = vmatprep.subr.bf16.mxu0 0
  %81 = vmatpush1.bf16.msra.mxu0 0
  %82 = vmatprep.subr.bf16.mxu0 0
  %83 = vmatpush1.bf16.msra.mxu0 0
  %84 = vmatprep.subr.bf16.mxu0 0
  %85 = vmatpush1.bf16.msra.mxu0 0
  %86 = vmatprep.subr.bf16.mxu0 0
  %87 = vmatpush1.bf16.msra.mxu0 0
  %88 = vmatprep.subr.bf16.mxu0 0
  %89 = vmatpush1.bf16.msra.mxu0 0
  %90 = vmatprep.subr.bf16.mxu0 0
  %91 = vmatpush1.bf16.msra.mxu0 0
  %92 = vmatprep.subr.bf16.mxu0 0
  %93 = vmatpush1.bf16.msra.mxu0 0
  %94 = vmatprep.subr.bf16.mxu0 0
  %95 = vmatpush1.bf16.msra.mxu0 0
  %96 = vmatprep.subr.bf16.mxu0 0
  %97 = vmatpush1.bf16.msra.mxu0 0
  %98 = vmatprep.subr.bf16.mxu0 0
  %99 = vmatpush1.bf16.msra.mxu0 0
  %100 = vmatprep.subr.bf16.mxu0 0
  %101 = vmatpush1.bf16.msra.mxu0 0
  %102 = vmatprep.subr.bf16.mxu0 0
  %103 = vmatpush1.bf16.msra.mxu0 0
  %104 = vmatprep.subr.bf16.mxu0 0
  %105 = vmatpush1.bf16.msra.mxu0 0
  %106 = vmatprep.mubr.bf16.mxu0 0
  %107 = vmatmul.mubr.bf16.gmra.mrb[0].mxu0 %v66
  %v108 = vpop.f32.mrb[0].mxu0
  %v109 = vadd.f32 0.0, %v108
  %v110 = vpop.f32.mrb[0].mxu0
  %v111 = vpop.f32.mrb[0].mxu0
  %v112 = vadd.f32 0.0, %v111
  %v113 = vpop.f32.mrb[0].mxu0
  %114 = vmatprep.mubr.bf16.mxu0 0
  %115 = vmatmul.mubr.bf16.gmra.mrb[0].mxu0 %v69
  %v116 = vpop.f32.mrb[0].mxu0
  %v117 = vadd.f32 0.0, %v116
  %v118 = vpop.f32.mrb[0].mxu0
  %v119 = vpop.f32.mrb[0].mxu0
  %v120 = vadd.f32 0.0, %v119
  %v121 = vpop.f32.mrb[0].mxu0
  %122 = vmatprep.mubr.bf16.mxu0 0
  %123 = vmatmul.mubr.bf16.gmra.mrb[0].mxu0 %v72
  %v124 = vpop.f32.mrb[0].mxu0
  %v125 = vadd.f32 0.0, %v124
  %v126 = vpop.f32.mrb[0].mxu0
  %v127 = vpop.f32.mrb[0].mxu0
  %v128 = vpop.f32.mrb[0].mxu0
  %129 = vdwg.mxu0
  %v130 = vadd.f32 %v25, %v109
  %v131 = vadd.f32 %v26, %v112
  %v132 = vadd.f32 %v27, %v117
  %v133 = vadd.f32 %v28, %v120
  %v134 = vadd.f32 %v29, %v125
  %vm135 = vcmask 785408
  %136 = vst.msk [vmem:[#allocation2] sm:$0xff] %vm135, %v130
  %137 = vst.msk [vmem:[#allocation2 + $0x8] sm:$0xff] %vm135, %v131
  %138 = vst.msk [vmem:[#allocation2 + $0x10] sm:$0xff] %vm135, %v132
  %139 = vst.msk [vmem:[#allocation2 + $0x18] sm:$0xff] %vm135, %v133
  %140 = vst.msk [vmem:[#allocation2 + $0x20] sm:$0xff] %vm135, %v134
  // Predicated region
  $region18: #{_lambda_.14} parent=0 // pred_check
    %p141 = pneg %p15
  $region19: #{_lambda_.14} parent=0 // pred_check_branch
    %143 = sbr.rel (%p141) target = $region21
  $region20: #{_lambda_.14} parent=0 // pred_region
    %v144 = vld [vmem:[#allocation2] sm:$0xff]
    %v145 = vld [vmem:[#allocation2 + $0x8] sm:$0xff]
    %v146 = vld [vmem:[#allocation2 + $0x10] sm:$0xff]
    %v147 = vld [vmem:[#allocation2 + $0x18] sm:$0xff]
    %v148 = vld [vmem:[#allocation2 + $0x20] sm:$0xff]
    %v149 = vld [vmem:[%s2] sm:$0x1]
    %v151 = vlaneseq
    %v152 = vshrl.u32 %v151, 7
    %v153 = vsub.s32 0, %v152
    %v154 = vrot.slane %v149, %v153
    %v156 = vadd.f32 %v144, %v154
    %v157 = vadd.f32 %v145, %v154
    %v158 = vadd.f32 %v146, %v154
    %v159 = vadd.f32 %v147, %v154
    %v160 = vadd.f32 %v148, %v154
    %v161 = vpack.c.bf16 %v157, %v156
    %v162 = vpack.c.bf16 %v159, %v158
    %v163 = vpack.c.bf16 %v160, %v160
    %v167 = vunpack.c.l.b16 %v161
    %v168 = vunpack.c.h.b16 %v161
    %v169 = vunpack.c.l.b16 %v162
    %v170 = vunpack.c.h.b16 %v162
    %v171 = vunpack.c.l.b16 %v163
    %v172 = vpack.c.b16 %v167, %v167
    %v173 = vpack.c.b16 %v168, %v168
    %v174 = vpack.c.b16 %v169, %v169
    %v175 = vpack.c.b16 %v170, %v170
    %v176 = vpack.c.b16 %v171, %v171
    %vm182 = vcmask 781312
    %183 = vst.msk [vmem:[%s3] sm:$0xf] %vm182, %v172
    %184 = vst.msk [vmem:[%s3 + $0x4] sm:$0xf] %vm182, %v173
    %185 = vst.msk [vmem:[%s3 + $0x8] sm:$0xf] %vm182, %v174
    %186 = vst.msk [vmem:[%s3 + $0xc] sm:$0xf] %vm182, %v175
    %187 = vst.msk [vmem:[%s3 + $0x10] sm:$0xf] %vm182, %v176
  $region21: #{_lambda_.14} parent=0 // pred_fallthru
    _
  // Predicated region
  $region22: #{_lambda_.14} parent=0 // pred_check
    _
  $region23: #{_lambda_.14} parent=0 // pred_check_branch
    %189 = sbr.rel (0) target = $region25
  $region24: #{_lambda_.14} parent=0 // pred_region
    _
  $region25: #{_lambda_.14} parent=0 // pred_fallthru
    _
  // Predicated region
  $region26: #{_lambda_.14} parent=0 // pred_check
    _
  $region27: #{_lambda_.14} parent=0 // pred_check_branch
    %191 = sbr.rel (0) target = $region29
  $region28: #{_lambda_.14} parent=0 // pred_region
    _
  $region29: #{_lambda_.14} parent=0 // pred_fallthru
    _

// kernel: _lambda_.13
$region0: #{_lambda_.13}
  #allocation0 [shape = 'u32[]', space=smem, size = 0x4, offset = 0x4, fixed_abs, tag = 'smem constant byte address 0x4 - core index']
  #allocation1 [shape = 'u32[144,128]{1,0:T(1,128)}', space=vmem, size = 0x12000, scoped, tag = 'internal scratch']
  #allocation2 [shape = 'f32[32,32]{1,0:T(8,128)}', space=vmem, size = 0x4000, scoped, tag = 'scratch operand']
  %s0 = inlined_call_operand.vmem [shape: bf16[32,12], index: 0, kind: input, shape index: {}]
  %s1 = inlined_call_operand.vmem [shape: bf16[12,32], index: 1, kind: input, shape index: {}]
  %s2 = inlined_call_operand.vmem [shape: f32[1,32], index: 2, kind: input, shape index: {}]
  %s3 = inlined_call_operand.vmem [shape: f32[32,32], index: 3, kind: output, shape index: {}]
  %s4 = sld [smem:[#allocation0]]
  $region30: #{_lambda_.13} parent=0
    _
  %s6 = ssub.s32 1, %s4
  %s7 = scalar_select 0, %s6, %s4
  // Predicated region
  $region2: #{_lambda_.13} parent=0 // pred_check
    _
  $region3: #{_lambda_.13} parent=0 // pred_check_branch
    %9 = sbr.rel (0) target = $region5
  $region4: #{_lambda_.13} parent=0 // pred_region
    _
  $region5: #{_lambda_.13} parent=0 // pred_fallthru
    _
  // Predicated region
  $region6: #{_lambda_.13} parent=0 // pred_check
    _
  $region7: #{_lambda_.13} parent=0 // pred_check_branch
    %11 = sbr.rel (0) target = $region9
  $region8: #{_lambda_.13} parent=0 // pred_region
    _
  $region9: #{_lambda_.13} parent=0 // pred_fallthru
    _
  // Predicated region
  $region10: #{_lambda_.13} parent=0 // pred_check
    _
  $region11: #{_lambda_.13} parent=0 // pred_check_branch
    %13 = sbr.rel (0) target = $region13
  $region12: #{_lambda_.13} parent=0 // pred_region
    _
  $region13: #{_lambda_.13} parent=0 // pred_fallthru
    _
  %p15 = scmp.eq.s32.totalorder 0, 0
  // Predicated region
  $region14: #{_lambda_.13} parent=0 // pred_check
    %p16 = pneg %p15
  $region15: #{_lambda_.13} parent=0 // pred_check_branch
    %18 = sbr.rel (%p16) target = $region17
  $region16: #{_lambda_.13} parent=0 // pred_region
    %vm19 = vcmask 261120
    %20 = vst.msk [vmem:[#allocation2] sm:$0xff] %vm19, 0.0
    %21 = vst.msk [vmem:[#allocation2 + $0x8] sm:$0xff] %vm19, 0.0
    %22 = vst.msk [vmem:[#allocation2 + $0x10] sm:$0xff] %vm19, 0.0
    %23 = vst.msk [vmem:[#allocation2 + $0x18] sm:$0xff] %vm19, 0.0
  $region17: #{_lambda_.13} parent=0 // pred_fallthru
    _
  %v24 = vld [vmem:[#allocation2] sm:$0xff]
  %v25 = vld [vmem:[#allocation2 + $0x8] sm:$0xff]
  %v26 = vld [vmem:[#allocation2 + $0x10] sm:$0xff]
  %v27 = vld [vmem:[#allocation2 + $0x18] sm:$0xff]
  %v28 = vld [vmem:[%s0] sm:$0xf]
  %v29 = vld [vmem:[%s0 + $0x4] sm:$0xf]
  %v30 = vld [vmem:[%s0 + $0x8] sm:$0xf]
  %v31 = vld [vmem:[%s0 + $0xc] sm:$0xf]
  %v32 = vld [vmem:[%s1] sm:$0xf]
  %v33 = vld [vmem:[%s1 + $0x4] sm:$0x3]
  %v38 = vunpack.c.l.b16 %v28
  %v39 = vunpack.c.l.b16 %v29
  %v40 = vunpack.c.l.b16 %v30
  %v41 = vunpack.c.l.b16 %v31
  %v42 = vpack.c.b16 %v39, %v38
  %v43 = vpack.c.b16 %v41, %v40
  %v46 = vunpack.c.l.b16 %v32
  %v47 = vunpack.c.l.b16 %v33
  %v48 = vpack.c.b16 %v47, %v46
  %vm49 = vcmask 97280
  %v51 = vsel %vm49, %v42, 0
  %v54 = vsel %vm49, %v43, 0
  %vm56 = vcmask 1045504
  %v58 = vsel %vm56, %v48, 0
  %60 = vmatprep.subr.bf16.mxu0 0
  %61 = vmatpush1.bf16.msra.mxu0 %v58
  %62 = vmatprep.subr.bf16.mxu0 0
  %63 = vmatpush1.bf16.msra.mxu0 0
  %64 = vmatprep.subr.bf16.mxu0 0
  %65 = vmatpush1.bf16.msra.mxu0 0
  %66 = vmatprep.subr.bf16.mxu0 0
  %67 = vmatpush1.bf16.msra.mxu0 0
  %68 = vmatprep.subr.bf16.mxu0 0
  %69 = vmatpush1.bf16.msra.mxu0 0
  %70 = vmatprep.subr.bf16.mxu0 0
  %71 = vmatpush1.bf16.msra.mxu0 0
  %72 = vmatprep.subr.bf16.mxu0 0
  %73 = vmatpush1.bf16.msra.mxu0 0
  %74 = vmatprep.subr.bf16.mxu0 0
  %75 = vmatpush1.bf16.msra.mxu0 0
  %76 = vmatprep.subr.bf16.mxu0 0
  %77 = vmatpush1.bf16.msra.mxu0 0
  %78 = vmatprep.subr.bf16.mxu0 0
  %79 = vmatpush1.bf16.msra.mxu0 0
  %80 = vmatprep.subr.bf16.mxu0 0
  %81 = vmatpush1.bf16.msra.mxu0 0
  %82 = vmatprep.subr.bf16.mxu0 0
  %83 = vmatpush1.bf16.msra.mxu0 0
  %84 = vmatprep.subr.bf16.mxu0 0
  %85 = vmatpush1.bf16.msra.mxu0 0
  %86 = vmatprep.subr.bf16.mxu0 0
  %87 = vmatpush1.bf16.msra.mxu0 0
  %88 = vmatprep.subr.bf16.mxu0 0
  %89 = vmatpush1.bf16.msra.mxu0 0
  %90 = vmatprep.subr.bf16.mxu0 0
  %91 = vmatpush1.bf16.msra.mxu0 0
  %92 = vmatprep.mubr.bf16.mxu0 0
  %93 = vmatmul.mubr.bf16.gmra.mrb[0].mxu0 %v51
  %v94 = vpop.f32.mrb[0].mxu0
  %v95 = vadd.f32 0.0, %v94
  %v96 = vpop.f32.mrb[0].mxu0
  %v97 = vpop.f32.mrb[0].mxu0
  %v98 = vadd.f32 0.0, %v97
  %v99 = vpop.f32.mrb[0].mxu0
  %100 = vmatprep.mubr.bf16.mxu0 0
  %101 = vmatmul.mubr.bf16.gmra.mrb[0].mxu0 %v54
  %v102 = vpop.f32.mrb[0].mxu0
  %v103 = vadd.f32 0.0, %v102
  %v104 = vpop.f32.mrb[0].mxu0
  %v105 = vpop.f32.mrb[0].mxu0
  %v106 = vadd.f32 0.0, %v105
  %v107 = vpop.f32.mrb[0].mxu0
  %108 = vdwg.mxu0
  %v109 = vadd.f32 %v24, %v95
  %v110 = vadd.f32 %v25, %v98
  %v111 = vadd.f32 %v26, %v103
  %v112 = vadd.f32 %v27, %v106
  %vm113 = vcmask 261120
  %114 = vst.msk [vmem:[#allocation2] sm:$0xff] %vm113, %v109
  %115 = vst.msk [vmem:[#allocation2 + $0x8] sm:$0xff] %vm113, %v110
  %116 = vst.msk [vmem:[#allocation2 + $0x10] sm:$0xff] %vm113, %v111
  %117 = vst.msk [vmem:[#allocation2 + $0x18] sm:$0xff] %vm113, %v112
  // Predicated region
  $region18: #{_lambda_.13} parent=0 // pred_check
    %p118 = pneg %p15
  $region19: #{_lambda_.13} parent=0 // pred_check_branch
    %120 = sbr.rel (%p118) target = $region21
  $region20: #{_lambda_.13} parent=0 // pred_region
    %v121 = vld [vmem:[#allocation2] sm:$0xff]
    %v122 = vld [vmem:[#allocation2 + $0x8] sm:$0xff]
    %v123 = vld [vmem:[#allocation2 + $0x10] sm:$0xff]
    %v124 = vld [vmem:[#allocation2 + $0x18] sm:$0xff]
    %v125 = vld [vmem:[%s2] sm:$0x1]
    %v127 = vlaneseq
    %v128 = vshrl.u32 %v127, 7
    %v129 = vsub.s32 0, %v128
    %v130 = vrot.slane %v125, %v129
    %v132 = vadd.f32 %v121, %v130
    %v133 = vadd.f32 %v122, %v130
    %v134 = vadd.f32 %v123, %v130
    %v135 = vadd.f32 %v124, %v130
    %136 = vst.msk [vmem:[%s3] sm:$0xff] %vm113, %v132
    %137 = vst.msk [vmem:[%s3 + $0x8] sm:$0xff] %vm113, %v133
    %138 = vst.msk [vmem:[%s3 + $0x10] sm:$0xff] %vm113, %v134
    %139 = vst.msk [vmem:[%s3 + $0x18] sm:$0xff] %vm113, %v135
  $region21: #{_lambda_.13} parent=0 // pred_fallthru
    _
  // Predicated region
  $region22: #{_lambda_.13} parent=0 // pred_check
    _
  $region23: #{_lambda_.13} parent=0 // pred_check_branch
    %141 = sbr.rel (0) target = $region25
  $region24: #{_lambda_.13} parent=0 // pred_region
    _
  $region25: #{_lambda_.13} parent=0 // pred_fallthru
    _
  // Predicated region
  $region26: #{_lambda_.13} parent=0 // pred_check
    _
  $region27: #{_lambda_.13} parent=0 // pred_check_branch
    %143 = sbr.rel (0) target = $region29
  $region28: #{_lambda_.13} parent=0 // pred_region
    _
  $region29: #{_lambda_.13} parent=0 // pred_fallthru
    _

// kernel: _lambda_.16
$region0: #{_lambda_.16}
  #allocation0 [shape = 'u32[]', space=smem, size = 0x4, offset = 0x4, fixed_abs, tag = 'smem constant byte address 0x4 - core index']
  #allocation1 [shape = 'u32[144,128]{1,0:T(1,128)}', space=vmem, size = 0x12000, scoped, tag = 'internal scratch']
  #allocation2 [shape = 'f32[40,32]{1,0:T(8,128)}', space=vmem, size = 0x5000, scoped, tag = 'scratch operand']
  %s0 = inlined_call_operand.vmem [shape: bf16[40,32], index: 0, kind: input, shape index: {}]
  %s1 = inlined_call_operand.vmem [shape: bf16[32,32], index: 1, kind: input, shape index: {}]
  %s2 = inlined_call_operand.vmem [shape: f32[1,32], index: 2, kind: input, shape index: {}]
  %s3 = inlined_call_operand.vmem [shape: f32[40,32], index: 3, kind: input, shape index: {}]
  %s4 = inlined_call_operand.vmem [shape: f32[1,32], index: 4, kind: input, shape index: {}]
  %s5 = inlined_call_operand.vmem [shape: f32[1,32], index: 5, kind: input, shape index: {}]
  %s6 = inlined_call_operand.vmem [shape: f32[40,32], index: 6, kind: output, shape index: {}]
  %s7 = sld [smem:[#allocation0]]
  $region42: #{_lambda_.16} parent=0
    _
  %s9 = ssub.s32 1, %s7
  %s10 = scalar_select 0, %s9, %s7
  // Predicated region
  $region2: #{_lambda_.16} parent=0 // pred_check
    _
  $region3: #{_lambda_.16} parent=0 // pred_check_branch
    %12 = sbr.rel (0) target = $region5
  $region4: #{_lambda_.16} parent=0 // pred_region
    _
  $region5: #{_lambda_.16} parent=0 // pred_fallthru
    _
  // Predicated region
  $region6: #{_lambda_.16} parent=0 // pred_check
    _
  $region7: #{_lambda_.16} parent=0 // pred_check_branch
    %14 = sbr.rel (0) target = $region9
  $region8: #{_lambda_.16} parent=0 // pred_region
    _
  $region9: #{_lambda_.16} parent=0 // pred_fallthru
    _
  // Predicated region
  $region10: #{_lambda_.16} parent=0 // pred_check
    _
  $region11: #{_lambda_.16} parent=0 // pred_check_branch
    %16 = sbr.rel (0) target = $region13
  $region12: #{_lambda_.16} parent=0 // pred_region
    _
  $region13: #{_lambda_.16} parent=0 // pred_fallthru
    _
  // Predicated region
  $region14: #{_lambda_.16} parent=0 // pred_check
    _
  $region15: #{_lambda_.16} parent=0 // pred_check_branch
    %18 = sbr.rel (0) target = $region17
  $region16: #{_lambda_.16} parent=0 // pred_region
    _
  $region17: #{_lambda_.16} parent=0 // pred_fallthru
    _
  // Predicated region
  $region18: #{_lambda_.16} parent=0 // pred_check
    _
  $region19: #{_lambda_.16} parent=0 // pred_check_branch
    %20 = sbr.rel (0) target = $region21
  $region20: #{_lambda_.16} parent=0 // pred_region
    _
  $region21: #{_lambda_.16} parent=0 // pred_fallthru
    _
  // Predicated region
  $region22: #{_lambda_.16} parent=0 // pred_check
    _
  $region23: #{_lambda_.16} parent=0 // pred_check_branch
    %22 = sbr.rel (0) target = $region25
  $region24: #{_lambda_.16} parent=0 // pred_region
    _
  $region25: #{_lambda_.16} parent=0 // pred_fallthru
    _
  %p24 = scmp.eq.s32.totalorder 0, 0
  // Predicated region
  $region26: #{_lambda_.16} parent=0 // pred_check
    %p25 = pneg %p24
  $region27: #{_lambda_.16} parent=0 // pred_check_branch
    %27 = sbr.rel (%p25) target = $region29
  $region28: #{_lambda_.16} parent=0 // pred_region
    %vm28 = vcmask 261120
    %29 = vst.msk [vmem:[#allocation2] sm:$0xff] %vm28, 0.0
    %30 = vst.msk [vmem:[#allocation2 + $0x8] sm:$0xff] %vm28, 0.0
    %31 = vst.msk [vmem:[#allocation2 + $0x10] sm:$0xff] %vm28, 0.0
    %32 = vst.msk [vmem:[#allocation2 + $0x18] sm:$0xff] %vm28, 0.0
    %33 = vst.msk [vmem:[#allocation2 + $0x20] sm:$0xff] %vm28, 0.0
  $region29: #{_lambda_.16} parent=0 // pred_fallthru
    _
  %v34 = vld [vmem:[#allocation2] sm:$0xff]
  %v35 = vld [vmem:[#allocation2 + $0x8] sm:$0xff]
  %v36 = vld [vmem:[#allocation2 + $0x10] sm:$0xff]
  %v37 = vld [vmem:[#allocation2 + $0x18] sm:$0xff]
  %v38 = vld [vmem:[#allocation2 + $0x20] sm:$0xff]
  %v39 = vld [vmem:[%s0] sm:$0xf]
  %v40 = vld [vmem:[%s0 + $0x4] sm:$0xf]
  %v41 = vld [vmem:[%s0 + $0x8] sm:$0xf]
  %v42 = vld [vmem:[%s0 + $0xc] sm:$0xf]
  %v43 = vld [vmem:[%s0 + $0x10] sm:$0xf]
  %v44 = vld [vmem:[%s1] sm:$0xf]
  %v45 = vld [vmem:[%s1 + $0x4] sm:$0xf]
  %v46 = vld [vmem:[%s1 + $0x8] sm:$0xf]
  %v47 = vld [vmem:[%s1 + $0xc] sm:$0xf]
  %v53 = vunpack.c.l.b16 %v39
  %v54 = vunpack.c.l.b16 %v40
  %v55 = vunpack.c.l.b16 %v41
  %v56 = vunpack.c.l.b16 %v42
  %v57 = vunpack.c.l.b16 %v43
  %v58 = vpack.c.b16 %v54, %v53
  %v59 = vpack.c.b16 %v56, %v55
  %v60 = vpack.c.b16 %v57, %v57
  %v65 = vunpack.c.l.b16 %v44
  %v66 = vunpack.c.l.b16 %v45
  %v67 = vunpack.c.l.b16 %v46
  %v68 = vunpack.c.l.b16 %v47
  %v69 = vpack.c.b16 %v66, %v65
  %v70 = vpack.c.b16 %v68, %v67
  %vm73 = vcmask 261120
  %v75 = vsel %vm73, %v58, 0
  %v78 = vsel %vm73, %v59, 0
  %v81 = vsel %vm73, %v60, 0
  %83 = vmatprep.subr.bf16.mxu0 0
  %84 = vmatpush1.bf16.msra.mxu0 %v69
  %85 = vmatprep.subr.bf16.mxu0 0
  %86 = vmatpush1.bf16.msra.mxu0 %v70
  %87 = vmatprep.subr.bf16.mxu0 0
  %88 = vmatpush1.bf16.msra.mxu0 0
  %89 = vmatprep.subr.bf16.mxu0 0
  %90 = vmatpush1.bf16.msra.mxu0 0
  %91 = vmatprep.subr.bf16.mxu0 0
  %92 = vmatpush1.bf16.msra.mxu0 0
  %93 = vmatprep.subr.bf16.mxu0 0
  %94 = vmatpush1.bf16.msra.mxu0 0
  %95 = vmatprep.subr.bf16.mxu0 0
  %96 = vmatpush1.bf16.msra.mxu0 0
  %97 = vmatprep.subr.bf16.mxu0 0
  %98 = vmatpush1.bf16.msra.mxu0 0
  %99 = vmatprep.subr.bf16.mxu0 0
  %100 = vmatpush1.bf16.msra.mxu0 0
  %101 = vmatprep.subr.bf16.mxu0 0
  %102 = vmatpush1.bf16.msra.mxu0 0
  %103 = vmatprep.subr.bf16.mxu0 0
  %104 = vmatpush1.bf16.msra.mxu0 0
  %105 = vmatprep.subr.bf16.mxu0 0
  %106 = vmatpush1.bf16.msra.mxu0 0
  %107 = vmatprep.subr.bf16.mxu0 0
  %108 = vmatpush1.bf16.msra.mxu0 0
  %109 = vmatprep.subr.bf16.mxu0 0
  %110 = vmatpush1.bf16.msra.mxu0 0
  %111 = vmatprep.subr.bf16.mxu0 0
  %112 = vmatpush1.bf16.msra.mxu0 0
  %113 = vmatprep.subr.bf16.mxu0 0
  %114 = vmatpush1.bf16.msra.mxu0 0
  %115 = vmatprep.mubr.bf16.mxu0 0
  %116 = vmatmul.mubr.bf16.gmra.mrb[0].mxu0 %v75
  %v117 = vpop.f32.mrb[0].mxu0
  %v118 = vadd.f32 0.0, %v117
  %v119 = vpop.f32.mrb[0].mxu0
  %v120 = vpop.f32.mrb[0].mxu0
  %v121 = vadd.f32 0.0, %v120
  %v122 = vpop.f32.mrb[0].mxu0
  %123 = vmatprep.mubr.bf16.mxu0 0
  %124 = vmatmul.mubr.bf16.gmra.mrb[0].mxu0 %v78
  %v125 = vpop.f32.mrb[0].mxu0
  %v126 = vadd.f32 0.0, %v125
  %v127 = vpop.f32.mrb[0].mxu0
  %v128 = vpop.f32.mrb[0].mxu0
  %v129 = vadd.f32 0.0, %v128
  %v130 = vpop.f32.mrb[0].mxu0
  %131 = vmatprep.mubr.bf16.mxu0 0
  %132 = vmatmul.mubr.bf16.gmra.mrb[0].mxu0 %v81
  %v133 = vpop.f32.mrb[0].mxu0
  %v134 = vadd.f32 0.0, %v133
  %v135 = vpop.f32.mrb[0].mxu0
  %v136 = vpop.f32.mrb[0].mxu0
  %v137 = vpop.f32.mrb[0].mxu0
  %138 = vdwg.mxu0
  %v139 = vadd.f32 %v34, %v118
  %v140 = vadd.f32 %v35, %v121
  %v141 = vadd.f32 %v36, %v126
  %v142 = vadd.f32 %v37, %v129
  %v143 = vadd.f32 %v38, %v134
  %144 = vst.msk [vmem:[#allocation2] sm:$0xff] %vm73, %v139
  %145 = vst.msk [vmem:[#allocation2 + $0x8] sm:$0xff] %vm73, %v140
  %146 = vst.msk [vmem:[#allocation2 + $0x10] sm:$0xff] %vm73, %v141
  %147 = vst.msk [vmem:[#allocation2 + $0x18] sm:$0xff] %vm73, %v142
  %148 = vst.msk [vmem:[#allocation2 + $0x20] sm:$0xff] %vm73, %v143
  // Predicated region
  $region30: #{_lambda_.16} parent=0 // pred_check
    %p149 = pneg %p24
  $region31: #{_lambda_.16} parent=0 // pred_check_branch
    %151 = sbr.rel (%p149) target = $region33
  $region32: #{_lambda_.16} parent=0 // pred_region
    %v152 = vld [vmem:[#allocation2] sm:$0xff]
    %v153 = vld [vmem:[#allocation2 + $0x8] sm:$0xff]
    %v154 = vld [vmem:[#allocation2 + $0x10] sm:$0xff]
    %v155 = vld [vmem:[#allocation2 + $0x18] sm:$0xff]
    %v156 = vld [vmem:[#allocation2 + $0x20] sm:$0xff]
    %v157 = vld [vmem:[%s2] sm:$0x1]
    %v159 = vlaneseq
    %v160 = vshrl.u32 %v159, 7
    %v161 = vsub.s32 0, %v160
    %v162 = vrot.slane %v157, %v161
    %v164 = vadd.f32 %v152, %v162
    %v165 = vadd.f32 %v153, %v162
    %v166 = vadd.f32 %v154, %v162
    %v167 = vadd.f32 %v155, %v162
    %v168 = vadd.f32 %v156, %v162
    %v169 = vld [vmem:[%s3] sm:$0xff]
    %v170 = vld [vmem:[%s3 + $0x8] sm:$0xff]
    %v171 = vld [vmem:[%s3 + $0x10] sm:$0xff]
    %v172 = vld [vmem:[%s3 + $0x18] sm:$0xff]
    %v173 = vld [vmem:[%s3 + $0x20] sm:$0xff]
    %v174 = vadd.f32 %v164, %v169
    %v175 = vadd.f32 %v165, %v170
    %v176 = vadd.f32 %v166, %v171
    %v177 = vadd.f32 %v167, %v172
    %v178 = vadd.f32 %v168, %v173
    %v179 = vsel %vm73, %v174, 0.0
    %180 = vadd.xlane.f32.xlu0 %v179
    %v181 = vpop.xlane.xlu0 %180
    %v182 = vsel %vm73, %v175, 0.0
    %183 = vadd.xlane.f32.xlu0 %v182
    %v184 = vpop.xlane.xlu0 %183
    %v185 = vsel %vm73, %v176, 0.0
    %186 = vadd.xlane.f32.xlu0 %v185
    %v187 = vpop.xlane.xlu0 %186
    %v188 = vsel %vm73, %v177, 0.0
    %189 = vadd.xlane.f32.xlu0 %v188
    %v190 = vpop.xlane.xlu0 %189
    %v191 = vsel %vm73, %v178, 0.0
    %192 = vadd.xlane.f32.xlu0 %v191
    %v193 = vpop.xlane.xlu0 %192
    %v194 = vrcp.pop 32.0
    %v195 = vmul.f32 %v181, %v194
    %v196 = vmul.f32 %v184, %v194
    %v197 = vmul.f32 %v187, %v194
    %v198 = vmul.f32 %v190, %v194
    %v199 = vmul.f32 %v193, %v194
    %v200 = vsub.f32 %v174, %v195
    %v201 = vsub.f32 %v175, %v196
    %v202 = vsub.f32 %v176, %v197
    %v203 = vsub.f32 %v177, %v198
    %v204 = vsub.f32 %v178, %v199
    %v205 = vmul.f32 %v200, %v200
    %v206 = vmul.f32 %v201, %v201
    %v207 = vmul.f32 %v202, %v202
    %v208 = vmul.f32 %v203, %v203
    %v209 = vmul.f32 %v204, %v204
    %v210 = vsel %vm73, %v205, 0.0
    %211 = vadd.xlane.f32.xlu0 %v210
    %v212 = vpop.xlane.xlu0 %211
    %v213 = vsel %vm73, %v206, 0.0
    %214 = vadd.xlane.f32.xlu0 %v213
    %v215 = vpop.xlane.xlu0 %214
    %v216 = vsel %vm73, %v207, 0.0
    %217 = vadd.xlane.f32.xlu0 %v216
    %v218 = vpop.xlane.xlu0 %217
    %v219 = vsel %vm73, %v208, 0.0
    %220 = vadd.xlane.f32.xlu0 %v219
    %v221 = vpop.xlane.xlu0 %220
    %v222 = vsel %vm73, %v209, 0.0
    %223 = vadd.xlane.f32.xlu0 %v222
    %v224 = vpop.xlane.xlu0 %223
    %v225 = vmul.f32 %v212, %v194
    %v226 = vmul.f32 %v215, %v194
    %v227 = vmul.f32 %v218, %v194
    %v228 = vmul.f32 %v221, %v194
    %v229 = vmul.f32 %v224, %v194
    %v230 = vadd.f32 %v225, 1e-05
    %v231 = vadd.f32 %v226, 1e-05
    %v232 = vadd.f32 %v227, 1e-05
    %v233 = vadd.f32 %v228, 1e-05
    %v234 = vadd.f32 %v229, 1e-05
    %v235 = vrsqrt.pop %v230
    %v236 = vrsqrt.pop %v231
    %v237 = vrsqrt.pop %v232
    %v238 = vrsqrt.pop %v233
    %v239 = vrsqrt.pop %v234
    %v240 = vmul.f32 %v200, %v235
    %v241 = vmul.f32 %v201, %v236
    %v242 = vmul.f32 %v202, %v237
    %v243 = vmul.f32 %v203, %v238
    %v244 = vmul.f32 %v204, %v239
    %v245 = vld [vmem:[%s4] sm:$0x1]
    %v247 = vlaneseq
    %v248 = vshrl.u32 %v247, 7
    %v249 = vsub.s32 0, %v248
    %v250 = vrot.slane %v245, %v249
    %v252 = vmul.f32 %v240, %v250
    %v253 = vmul.f32 %v241, %v250
    %v254 = vmul.f32 %v242, %v250
    %v255 = vmul.f32 %v243, %v250
    %v256 = vmul.f32 %v244, %v250
    %v257 = vld [vmem:[%s5] sm:$0x1]
    %v259 = vlaneseq
    %v260 = vshrl.u32 %v259, 7
    %v261 = vsub.s32 0, %v260
    %v262 = vrot.slane %v257, %v261
    %v264 = vadd.f32 %v252, %v262
    %v265 = vadd.f32 %v253, %v262
    %v266 = vadd.f32 %v254, %v262
    %v267 = vadd.f32 %v255, %v262
    %v268 = vadd.f32 %v256, %v262
    %269 = vst.msk [vmem:[%s6] sm:$0xff] %vm73, %v264
    %270 = vst.msk [vmem:[%s6 + $0x8] sm:$0xff] %vm73, %v265
    %271 = vst.msk [vmem:[%s6 + $0x10] sm:$0xff] %vm73, %v266
    %272 = vst.msk [vmem:[%s6 + $0x18] sm:$0xff] %vm73, %v267
    %273 = vst.msk [vmem:[%s6 + $0x20] sm:$0xff] %vm73, %v268
  $region33: #{_lambda_.16} parent=0 // pred_fallthru
    _
  // Predicated region
  $region34: #{_lambda_.16} parent=0 // pred_check
    _
  $region35: #{_lambda_.16} parent=0 // pred_check_branch
    %275 = sbr.rel (0) target = $region37
  $region36: #{_lambda_.16} parent=0 // pred_region
    _
  $region37: #{_lambda_.16} parent=0 // pred_fallthru
    _
  // Predicated region
  $region38: #{_lambda_.16} parent=0 // pred_check
    _
  $region39: #{_lambda_.16} parent=0 // pred_check_branch
    %277 = sbr.rel (0) target = $region41
  $region40: #{_lambda_.16} parent=0 // pred_region
    _
  $region41: #{_lambda_.16} parent=0 // pred_fallthru
    _

// kernel: _lambda_.17
$region0: #{_lambda_.17}
  #allocation0 [shape = 'u32[]', space=smem, size = 0x4, offset = 0x4, fixed_abs, tag = 'smem constant byte address 0x4 - core index']
  #allocation1 [shape = 'u32[144,128]{1,0:T(1,128)}', space=vmem, size = 0x12000, scoped, tag = 'internal scratch']
  #allocation2 [shape = 'f32[40,64]{1,0:T(8,128)}', space=vmem, size = 0x5000, scoped, tag = 'scratch operand']
  %s0 = inlined_call_operand.vmem [shape: bf16[40,32], index: 0, kind: input, shape index: {}]
  %s1 = inlined_call_operand.vmem [shape: bf16[32,64], index: 1, kind: input, shape index: {}]
  %s2 = inlined_call_operand.vmem [shape: f32[1,64], index: 2, kind: input, shape index: {}]
  %s3 = inlined_call_operand.vmem [shape: bf16[40,64], index: 3, kind: output, shape index: {}]
  %s4 = sld [smem:[#allocation0]]
  $region30: #{_lambda_.17} parent=0
    _
  %s6 = ssub.s32 1, %s4
  %s7 = scalar_select 0, %s6, %s4
  // Predicated region
  $region2: #{_lambda_.17} parent=0 // pred_check
    _
  $region3: #{_lambda_.17} parent=0 // pred_check_branch
    %9 = sbr.rel (0) target = $region5
  $region4: #{_lambda_.17} parent=0 // pred_region
    _
  $region5: #{_lambda_.17} parent=0 // pred_fallthru
    _
  // Predicated region
  $region6: #{_lambda_.17} parent=0 // pred_check
    _
  $region7: #{_lambda_.17} parent=0 // pred_check_branch
    %11 = sbr.rel (0) target = $region9
  $region8: #{_lambda_.17} parent=0 // pred_region
    _
  $region9: #{_lambda_.17} parent=0 // pred_fallthru
    _
  // Predicated region
  $region10: #{_lambda_.17} parent=0 // pred_check
    _
  $region11: #{_lambda_.17} parent=0 // pred_check_branch
    %13 = sbr.rel (0) target = $region13
  $region12: #{_lambda_.17} parent=0 // pred_region
    _
  $region13: #{_lambda_.17} parent=0 // pred_fallthru
    _
  %p15 = scmp.eq.s32.totalorder 0, 0
  // Predicated region
  $region14: #{_lambda_.17} parent=0 // pred_check
    %p16 = pneg %p15
  $region15: #{_lambda_.17} parent=0 // pred_check_branch
    %18 = sbr.rel (%p16) target = $region17
  $region16: #{_lambda_.17} parent=0 // pred_region
    %vm19 = vcmask 523264
    %20 = vst.msk [vmem:[#allocation2] sm:$0xff] %vm19, 0.0
    %21 = vst.msk [vmem:[#allocation2 + $0x8] sm:$0xff] %vm19, 0.0
    %22 = vst.msk [vmem:[#allocation2 + $0x10] sm:$0xff] %vm19, 0.0
    %23 = vst.msk [vmem:[#allocation2 + $0x18] sm:$0xff] %vm19, 0.0
    %24 = vst.msk [vmem:[#allocation2 + $0x20] sm:$0xff] %vm19, 0.0
  $region17: #{_lambda_.17} parent=0 // pred_fallthru
    _
  %v25 = vld [vmem:[#allocation2] sm:$0xff]
  %v26 = vld [vmem:[#allocation2 + $0x8] sm:$0xff]
  %v27 = vld [vmem:[#allocation2 + $0x10] sm:$0xff]
  %v28 = vld [vmem:[#allocation2 + $0x18] sm:$0xff]
  %v29 = vld [vmem:[#allocation2 + $0x20] sm:$0xff]
  %v30 = vld [vmem:[%s0] sm:$0xf]
  %v31 = vld [vmem:[%s0 + $0x4] sm:$0xf]
  %v32 = vld [vmem:[%s0 + $0x8] sm:$0xf]
  %v33 = vld [vmem:[%s0 + $0xc] sm:$0xf]
  %v34 = vld [vmem:[%s0 + $0x10] sm:$0xf]
  %v35 = vld [vmem:[%s1] sm:$0xf]
  %v36 = vld [vmem:[%s1 + $0x4] sm:$0xf]
  %v37 = vld [vmem:[%s1 + $0x8] sm:$0xf]
  %v38 = vld [vmem:[%s1 + $0xc] sm:$0xf]
  %v44 = vunpack.c.l.b16 %v30
  %v45 = vunpack.c.l.b16 %v31
  %v46 = vunpack.c.l.b16 %v32
  %v47 = vunpack.c.l.b16 %v33
  %v48 = vunpack.c.l.b16 %v34
  %v49 = vpack.c.b16 %v45, %v44
  %v50 = vpack.c.b16 %v47, %v46
  %v51 = vpack.c.b16 %v48, %v48
  %v56 = vunpack.c.l.b16 %v35
  %v57 = vunpack.c.l.b16 %v36
  %v58 = vunpack.c.l.b16 %v37
  %v59 = vunpack.c.l.b16 %v38
  %v60 = vpack.c.b16 %v57, %v56
  %v61 = vpack.c.b16 %v59, %v58
  %vm64 = vcmask 261120
  %v66 = vsel %vm64, %v49, 0
  %v69 = vsel %vm64, %v50, 0
  %v72 = vsel %vm64, %v51, 0
  %74 = vmatprep.subr.bf16.mxu0 0
  %75 = vmatpush1.bf16.msra.mxu0 %v60
  %76 = vmatprep.subr.bf16.mxu0 0
  %77 = vmatpush1.bf16.msra.mxu0 %v61
  %78 = vmatprep.subr.bf16.mxu0 0
  %79 = vmatpush1.bf16.msra.mxu0 0
  %80 = vmatprep.subr.bf16.mxu0 0
  %81 = vmatpush1.bf16.msra.mxu0 0
  %82 = vmatprep.subr.bf16.mxu0 0
  %83 = vmatpush1.bf16.msra.mxu0 0
  %84 = vmatprep.subr.bf16.mxu0 0
  %85 = vmatpush1.bf16.msra.mxu0 0
  %86 = vmatprep.subr.bf16.mxu0 0
  %87 = vmatpush1.bf16.msra.mxu0 0
  %88 = vmatprep.subr.bf16.mxu0 0
  %89 = vmatpush1.bf16.msra.mxu0 0
  %90 = vmatprep.subr.bf16.mxu0 0
  %91 = vmatpush1.bf16.msra.mxu0 0
  %92 = vmatprep.subr.bf16.mxu0 0
  %93 = vmatpush1.bf16.msra.mxu0 0
  %94 = vmatprep.subr.bf16.mxu0 0
  %95 = vmatpush1.bf16.msra.mxu0 0
  %96 = vmatprep.subr.bf16.mxu0 0
  %97 = vmatpush1.bf16.msra.mxu0 0
  %98 = vmatprep.subr.bf16.mxu0 0
  %99 = vmatpush1.bf16.msra.mxu0 0
  %100 = vmatprep.subr.bf16.mxu0 0
  %101 = vmatpush1.bf16.msra.mxu0 0
  %102 = vmatprep.subr.bf16.mxu0 0
  %103 = vmatpush1.bf16.msra.mxu0 0
  %104 = vmatprep.subr.bf16.mxu0 0
  %105 = vmatpush1.bf16.msra.mxu0 0
  %106 = vmatprep.mubr.bf16.mxu0 0
  %107 = vmatmul.mubr.bf16.gmra.mrb[0].mxu0 %v66
  %v108 = vpop.f32.mrb[0].mxu0
  %v109 = vadd.f32 0.0, %v108
  %v110 = vpop.f32.mrb[0].mxu0
  %v111 = vpop.f32.mrb[0].mxu0
  %v112 = vadd.f32 0.0, %v111
  %v113 = vpop.f32.mrb[0].mxu0
  %114 = vmatprep.mubr.bf16.mxu0 0
  %115 = vmatmul.mubr.bf16.gmra.mrb[0].mxu0 %v69
  %v116 = vpop.f32.mrb[0].mxu0
  %v117 = vadd.f32 0.0, %v116
  %v118 = vpop.f32.mrb[0].mxu0
  %v119 = vpop.f32.mrb[0].mxu0
  %v120 = vadd.f32 0.0, %v119
  %v121 = vpop.f32.mrb[0].mxu0
  %122 = vmatprep.mubr.bf16.mxu0 0
  %123 = vmatmul.mubr.bf16.gmra.mrb[0].mxu0 %v72
  %v124 = vpop.f32.mrb[0].mxu0
  %v125 = vadd.f32 0.0, %v124
  %v126 = vpop.f32.mrb[0].mxu0
  %v127 = vpop.f32.mrb[0].mxu0
  %v128 = vpop.f32.mrb[0].mxu0
  %129 = vdwg.mxu0
  %v130 = vadd.f32 %v25, %v109
  %v131 = vadd.f32 %v26, %v112
  %v132 = vadd.f32 %v27, %v117
  %v133 = vadd.f32 %v28, %v120
  %v134 = vadd.f32 %v29, %v125
  %vm135 = vcmask 523264
  %136 = vst.msk [vmem:[#allocation2] sm:$0xff] %vm135, %v130
  %137 = vst.msk [vmem:[#allocation2 + $0x8] sm:$0xff] %vm135, %v131
  %138 = vst.msk [vmem:[#allocation2 + $0x10] sm:$0xff] %vm135, %v132
  %139 = vst.msk [vmem:[#allocation2 + $0x18] sm:$0xff] %vm135, %v133
  %140 = vst.msk [vmem:[#allocation2 + $0x20] sm:$0xff] %vm135, %v134
  // Predicated region
  $region18: #{_lambda_.17} parent=0 // pred_check
    %p141 = pneg %p15
  $region19: #{_lambda_.17} parent=0 // pred_check_branch
    %143 = sbr.rel (%p141) target = $region21
  $region20: #{_lambda_.17} parent=0 // pred_region
    %v144 = vld [vmem:[#allocation2] sm:$0xff]
    %v145 = vld [vmem:[#allocation2 + $0x8] sm:$0xff]
    %v146 = vld [vmem:[#allocation2 + $0x10] sm:$0xff]
    %v147 = vld [vmem:[#allocation2 + $0x18] sm:$0xff]
    %v148 = vld [vmem:[#allocation2 + $0x20] sm:$0xff]
    %v149 = vld [vmem:[%s2] sm:$0x1]
    %v151 = vlaneseq
    %v152 = vshrl.u32 %v151, 7
    %v153 = vsub.s32 0, %v152
    %v154 = vrot.slane %v149, %v153
    %v156 = vadd.f32 %v144, %v154
    %v157 = vadd.f32 %v145, %v154
    %v158 = vadd.f32 %v146, %v154
    %v159 = vadd.f32 %v147, %v154
    %v160 = vadd.f32 %v148, %v154
    %v161 = vmul.f32 %v156, %v156
    %v162 = vmul.f32 %v157, %v157
    %v163 = vmul.f32 %v158, %v158
    %v164 = vmul.f32 %v159, %v159
    %v165 = vmul.f32 %v160, %v160
    %v166 = vmul.f32 %v156, %v161
    %v167 = vmul.f32 %v157, %v162
    %v168 = vmul.f32 %v158, %v163
    %v169 = vmul.f32 %v159, %v164
    %v170 = vmul.f32 %v160, %v165
    %v171 = vmul.f32 %v166, 0.044715
    %v172 = vmul.f32 %v167, 0.044715
    %v173 = vmul.f32 %v168, 0.044715
    %v174 = vmul.f32 %v169, 0.044715
    %v175 = vmul.f32 %v170, 0.044715
    %v176 = vadd.f32 %v156, %v171
    %v177 = vadd.f32 %v157, %v172
    %v178 = vadd.f32 %v158, %v173
    %v179 = vadd.f32 %v159, %v174
    %v180 = vadd.f32 %v160, %v175
    %v181 = vmul.f32 %v176, 0.7978846
    %v182 = vmul.f32 %v177, 0.7978846
    %v183 = vmul.f32 %v178, 0.7978846
    %v184 = vmul.f32 %v179, 0.7978846
    %v185 = vmul.f32 %v180, 0.7978846
    %v186 = vtanh.pop %v181
    %v187 = vtanh.pop %v182
    %v188 = vtanh.pop %v183
    %v189 = vtanh.pop %v184
    %v190 = vtanh.pop %v185
    %v191 = vadd.f32 %v186, 1.0
    %v192 = vadd.f32 %v187, 1.0
    %v193 = vadd.f32 %v188, 1.0
    %v194 = vadd.f32 %v189, 1.0
    %v195 = vadd.f32 %v190, 1.0
    %v196 = vmul.f32 %v191, 0.5
    %v197 = vmul.f32 %v192, 0.5
    %v198 = vmul.f32 %v193, 0.5
    %v199 = vmul.f32 %v194, 0.5
    %v200 = vmul.f32 %v195, 0.5
    %v201 = vmul.f32 %v156, %v196
    %v202 = vmul.f32 %v157, %v197
    %v203 = vmul.f32 %v158, %v198
    %v204 = vmul.f32 %v159, %v199
    %v205 = vmul.f32 %v160, %v200
    %v206 = vpack.c.bf16 %v202, %v201
    %v207 = vpack.c.bf16 %v204, %v203
    %v208 = vpack.c.bf16 %v205, %v205
    %v212 = vunpack.c.l.b16 %v206
    %v213 = vunpack.c.h.b16 %v206
    %v214 = vunpack.c.l.b16 %v207
    %v215 = vunpack.c.h.b16 %v207
    %v216 = vunpack.c.l.b16 %v208
    %v217 = vpack.c.b16 %v212, %v212
    %v218 = vpack.c.b16 %v213, %v213
    %v219 = vpack.c.b16 %v214, %v214
    %v220 = vpack.c.b16 %v215, %v215
    %v221 = vpack.c.b16 %v216, %v216
    %vm227 = vcmask 519168
    %228 = vst.msk [vmem:[%s3] sm:$0xf] %vm227, %v217
    %229 = vst.msk [vmem:[%s3 + $0x4] sm:$0xf] %vm227, %v218
    %230 = vst.msk [vmem:[%s3 + $0x8] sm:$0xf] %vm227, %v219
    %231 = vst.msk [vmem:[%s3 + $0xc] sm:$0xf] %vm227, %v220
    %232 = vst.msk [vmem:[%s3 + $0x10] sm:$0xf] %vm227, %v221
  $region21: #{_lambda_.17} parent=0 // pred_fallthru
    _
  // Predicated region
  $region22: #{_lambda_.17} parent=0 // pred_check
    _
  $region23: #{_lambda_.17} parent=0 // pred_check_branch
    %234 = sbr.rel (0) target = $region25
  $region24: #{_lambda_.17} parent=0 // pred_region
    _
  $region25: #{_lambda_.17} parent=0 // pred_fallthru
    _
  // Predicated region
  $region26: #{_lambda_.17} parent=0 // pred_check
    _
  $region27: #{_lambda_.17} parent=0 // pred_check_branch
    %236 = sbr.rel (0) target = $region29
  $region28: #{_lambda_.17} parent=0 // pred_region
    _
  $region29: #{_lambda_.17} parent=0 // pred_fallthru
    _

// kernel: _lambda_.15
$region0: #{_lambda_.15}
  #allocation0 [shape = 'u32[]', space=smem, size = 0x4, offset = 0x4, fixed_abs, tag = 'smem constant byte address 0x4 - core index']
  #allocation1 [shape = 'u32[144,128]{1,0:T(1,128)}', space=vmem, size = 0x12000, scoped, tag = 'internal scratch']
  #allocation2 [shape = 'f32[24,4]{1,0:T(8,128)}', space=vmem, size = 0x3000, scoped, tag = 'scratch operand']
  #allocation3 [shape = 'f32[24,4]{1,0:T(8,128)}', space=vmem, size = 0x3000, scoped, tag = 'scratch operand']
  #allocation4 [shape = 'f32[24,32]{1,0:T(8,128)}', space=vmem, size = 0x3000, scoped, tag = 'scratch operand']
  %s0 = inlined_call_operand.vmem [shape: bf16[2,24,96], index: 0, kind: input, shape index: {}, may-alias: {0,1}]
  %s1 = inlined_call_operand.vmem [shape: bf16[2,24,96], index: 1, kind: input, shape index: {}, may-alias: {0,1}]
  %s2 = inlined_call_operand.vmem [shape: bf16[2,24,32], index: 2, kind: output, shape index: {}]
  %s3 = sld [smem:[#allocation0]]
  $region49: #{_lambda_.15} parent=0
    _
  %s5 = ssub.s32 1, %s3
  %s6 = scalar_select 0, %s5, %s3
  loop: start=0, step=1, limit=4
  $region2: #{_lambda_.15} parent=0 // loop_pre_header
    _
  $region3: #{_lambda_.15} parent=0 // loop_header
    %s8 = sphi 0, %s12
    %p9 = scmp.ge.s32.totalorder %s8, 4
    %s15 = sphi 0, %s34
    %s16 = sphi 0, %s30
    %s17 = sphi 0, %s26
    %s18 = sphi 0, %s15
    %s19 = sphi 0, %s16
    %s20 = sphi 0, %s17
    %s21 = sphi 0, %s18
    %s22 = sphi 0, %s19
    %s23 = sphi 0, %s20
    %s39 = sphi 0, %s41
    %s42 = sphi 0, %s39
    %s43 = sphi 0, %s42
    %s59 = sphi 0, %s43
    %s67 = sphi 0, %s69
    %s70 = sphi 0, %s67
    %s71 = sphi 0, %s70
    %s87 = sphi 0, %s71
    %s95 = sphi 0, %s97
    %s98 = sphi 0, %s95
    %s99 = sphi 0, %s98
    %s115 = sphi 0, %s99
  $region4: #{_lambda_.15} parent=0 // loop_header_branch
    %11 = sbr.rel (%p9) target = $region8
  $region5: #{_lambda_.15} parent=0 // loop_body
    %s13 = ssub.s32 %s8, 1
    %s14 = ssub.s32 %s8, 2
    %s24 = sadd.s32 1, %s17
    %p25 = scmp.ge.s32.totalorder %s24, 1
    %s26 = scalar_select %p25, 0, %s24
    %s27 = sadd.s32 1, %s16
    %s28 = scalar_select %p25, %s27, %s16
    %p29 = scmp.ge.s32.totalorder %s28, 1
    %s30 = scalar_select %p29, 0, %s28
    %s31 = sadd.s32 1, %s15
    %s32 = scalar_select %p29, %s31, %s15
    %p33 = scmp.ge.s32.totalorder %s32, 2
    %s34 = scalar_select %p33, 0, %s32
    %s35 = ssub.s32 %s15, %s34
    %s36 = ssub.s32 %s16, %s30
    %s37 = sor.u32 %s35, %s36
    %p38 = scmp.eq.s32.totalorder %s37, 0
    %s40 = sadd.s32 %s39, 1
    %s41 = scalar_select %p38, %s39, %s40
    %p44 = pneg %p38
    %p45 = scmp.eq.s32.totalorder %s8, 1
    %p46 = por %p44, %p45
    %p47 = scmp.ne.s32.totalorder %s39, %s42
    %p48 = scmp.eq.s32.totalorder %s8, 0
    %p49 = por %p47, %p48
    %p50 = scmp.ne.s32.totalorder %s39, %s42
    %p51 = scmp.eq.s32.totalorder %s13, 1
    %p52 = por %p50, %p51
    %p53 = scmp.ne.s32.totalorder %s42, %s43
    %p54 = scmp.eq.s32.totalorder %s13, 0
    %p55 = por %p53, %p54
    %p56 = scmp.ne.s32.totalorder %s42, %s43
    %p57 = scmp.eq.s32.totalorder %s14, 1
    %p58 = por %p56, %p57
    %p60 = scmp.ne.s32.totalorder %s43, %s59
    %p61 = scmp.eq.s32.totalorder %s14, 0
    %p62 = por %p60, %p61
    %s63 = ssub.s32 %s15, %s34
    %s64 = ssub.s32 %s17, %s26
    %s65 = sor.u32 %s63, %s64
    %p66 = scmp.eq.s32.totalorder %s65, 0
    %s68 = sadd.s32 %s67, 1
    %s69 = scalar_select %p66, %s67, %s68
    %p72 = pneg %p66
    %p73 = scmp.eq.s32.totalorder %s8, 1
    %p74 = por %p72, %p73
    %p75 = scmp.ne.s32.totalorder %s67, %s70
    %p76 = scmp.eq.s32.totalorder %s8, 0
    %p77 = por %p75, %p76
    %p78 = scmp.ne.s32.totalorder %s67, %s70
    %p79 = scmp.eq.s32.totalorder %s13, 1
    %p80 = por %p78, %p79
    %p81 = scmp.ne.s32.totalorder %s70, %s71
    %p82 = scmp.eq.s32.totalorder %s13, 0
    %p83 = por %p81, %p82
    %p84 = scmp.ne.s32.totalorder %s70, %s71
    %p85 = scmp.eq.s32.totalorder %s14, 1
    %p86 = por %p84, %p85
    %p88 = scmp.ne.s32.totalorder %s71, %s87
    %p89 = scmp.eq.s32.totalorder %s14, 0
    %p90 = por %p88, %p89
    %s91 = ssub.s32 %s15, %s34
    %s92 = ssub.s32 %s16, %s30
    %s93 = sor.u32 %s91, %s92
    %p94 = scmp.eq.s32.totalorder %s93, 0
    %s96 = sadd.s32 %s95, 1
    %s97 = scalar_select %p94, %s95, %s96
    %p100 = pneg %p94
    %p101 = scmp.eq.s32.totalorder %s8, 1
    %p102 = por %p100, %p101
    %p103 = scmp.ne.s32.totalorder %s95, %s98
    %p104 = scmp.eq.s32.totalorder %s8, 0
    %p105 = por %p103, %p104
    %p106 = scmp.ne.s32.totalorder %s95, %s98
    %p107 = scmp.eq.s32.totalorder %s13, 1
    %p108 = por %p106, %p107
    %p109 = scmp.ne.s32.totalorder %s98, %s99
    %p110 = scmp.eq.s32.totalorder %s13, 0
    %p111 = por %p109, %p110
    %p112 = scmp.ne.s32.totalorder %s98, %s99
    %p113 = scmp.eq.s32.totalorder %s14, 1
    %p114 = por %p112, %p113
    %p116 = scmp.ne.s32.totalorder %s99, %s115
    %p117 = scmp.eq.s32.totalorder %s14, 0
    %p118 = por %p116, %p117
    %p119 = scmp.le.s32.totalorder 1, %s8
    %p120 = scmp.lt.s32.totalorder %s8, 3
    %p121 = pnand %p119, %p120
    %p122 = pneg %p121
    // Predicated region
    $region9: #{_lambda_.15} parent=5 // pred_check
      _
    $region10: #{_lambda_.15} parent=5 // pred_check_branch
      %124 = sbr.rel (%p121) target = $region12
    $region11: #{_lambda_.15} parent=5 // pred_region
      %s125 = ssub.s32 %s8, 1
    $region12: #{_lambda_.15} parent=5 // pred_fallthru
      _
    %p126 = scmp.lt.s32.totalorder %s8, 2
    // Predicated region
    $region13: #{_lambda_.15} parent=5 // pred_check
      %p127 = pneg %p126
    $region14: #{_lambda_.15} parent=5 // pred_check_branch
      %129 = sbr.rel (%p127) target = $region16
    $region15: #{_lambda_.15} parent=5 // pred_region
      // Predicated region
      $region17: #{_lambda_.15} parent=15 // pred_check
        %p130 = pneg %p49
      $region18: #{_lambda_.15} parent=15 // pred_check_branch
        %132 = sbr.rel (%p130) target = $region20
      $region19: #{_lambda_.15} parent=15 // pred_region
        %s133 = smul.u32 3, %s16
        %p134 = scmp.lt.s32.totalorder %s15, 1
        %s135 = scalar_select %p134, %s15, 1
        %p136 = scmp.lt.s32.totalorder %s133, 2
        %s137 = scalar_select %p136, %s133, 2
        %s138 = smul.addr %s135, 3
        %s139 = sadd.s32 %s137, %s138
        %s140 = smul.addr %s139, 4
        %s141 = scalar_lea.vmem %s0, %s140
        %s142 = smul.u32 3, %s16
      $region20: #{_lambda_.15} parent=15 // pred_fallthru
        _
      // Predicated region
      $region21: #{_lambda_.15} parent=15 // pred_check
        %p143 = pneg %p77
      $region22: #{_lambda_.15} parent=15 // pred_check_branch
        %145 = sbr.rel (%p143) target = $region24
      $region23: #{_lambda_.15} parent=15 // pred_region
        %s146 = smul.u32 3, %s17
        %p147 = scmp.lt.s32.totalorder %s15, 1
        %s148 = scalar_select %p147, %s15, 1
        %p149 = scmp.lt.s32.totalorder %s146, 2
        %s150 = scalar_select %p149, %s146, 2
        %s151 = smul.addr %s148, 3
        %s152 = sadd.s32 %s150, %s151
        %s153 = smul.addr %s152, 4
        %s154 = scalar_lea.vmem %s1, %s153
        %s155 = smul.u32 3, %s17
      $region24: #{_lambda_.15} parent=15 // pred_fallthru
        _
    $region16: #{_lambda_.15} parent=5 // pred_fallthru
      _
    %p156 = scmp.le.s32.totalorder 1, %s8
    %p157 = scmp.lt.s32.totalorder %s8, 3
    %p158 = pnand %p156, %p157
    %p159 = pneg %p158
    // Predicated region
    $region25: #{_lambda_.15} parent=5 // pred_check
      _
    $region26: #{_lambda_.15} parent=5 // pred_check_branch
      %161 = sbr.rel (%p158) target = $region28
    $region27: #{_lambda_.15} parent=5 // pred_region
      %s162 = ssub.s32 %s8, 1
      %s163 = smul.u32 3, %s19
      %p164 = scmp.lt.s32.totalorder %s18, 1
      %s165 = scalar_select %p164, %s18, 1
      %p166 = scmp.lt.s32.totalorder %s163, 2
      %s167 = scalar_select %p166, %s163, 2
      %s168 = smul.addr %s165, 3
      %s169 = sadd.s32 %s167, %s168
      %s170 = smul.addr %s169, 4
      %s171 = scalar_lea.vmem %s0, %s170
      %p172 = pneg %p55
      %p173 = pneg %p52
      %s174 = smul.u32 3, %s20
      %p175 = scmp.lt.s32.totalorder %s18, 1
      %s176 = scalar_select %p175, %s18, 1
      %p177 = scmp.lt.s32.totalorder %s174, 2
      %s178 = scalar_select %p177, %s174, 2
      %s179 = smul.addr %s176, 3
      %s180 = sadd.s32 %s178, %s179
      %s181 = smul.addr %s180, 4
      %s182 = scalar_lea.vmem %s1, %s181
      %p183 = pneg %p83
      %p184 = pneg %p80
      %p185 = pneg %p111
      %p186 = pneg %p108
      %s187 = smul.u32 3, %s19
      %p188 = scmp.lt.s32.totalorder %s18, 1
      %s189 = scalar_select %p188, %s18, 1
      %p190 = scmp.lt.s32.totalorder %s187, 2
      %s191 = scalar_select %p190, %s187, 2
      %s192 = smul.addr %s189, 3
      %s193 = sadd.s32 %s191, %s192
      %s194 = smul.addr %s193, 4
      %s195 = scalar_lea.vmem %s2, %s194
      %s196 = smul.u32 3, %s19
      %p197 = scmp.lt.s32.totalorder %s18, 1
      %s198 = scalar_select %p197, %s18, 1
      %p199 = scmp.lt.s32.totalorder %s196, 2
      %s200 = scalar_select %p199, %s196, 2
      %s201 = smul.addr %s198, 3
      %s202 = sadd.s32 %s200, %s201
      %s203 = smul.addr %s202, 4
      %s204 = scalar_lea.vmem %s0, %s203
      %s205 = smul.u32 3, %s19
      %s206 = smul.u32 3, %s20
      %p207 = scmp.lt.s32.totalorder %s18, 1
      %s208 = scalar_select %p207, %s18, 1
      %p209 = scmp.lt.s32.totalorder %s206, 2
      %s210 = scalar_select %p209, %s206, 2
      %s211 = smul.addr %s208, 3
      %s212 = sadd.s32 %s210, %s211
      %s213 = smul.addr %s212, 4
      %s214 = scalar_lea.vmem %s1, %s213
      %s215 = smul.u32 3, %s20
      %s216 = smul.u32 3, %s19
      %p217 = scmp.lt.s32.totalorder %s18, 1
      %s218 = scalar_select %p217, %s18, 1
      %p219 = scmp.lt.s32.totalorder %s216, 2
      %s220 = scalar_select %p219, %s216, 2
      %s221 = smul.addr %s218, 3
      %s222 = sadd.s32 %s220, %s221
      %s223 = smul.addr %s222, 4
      %s224 = scalar_lea.vmem %s2, %s223
      %s225 = smul.u32 3, %s19
      %p227 = scmp.eq.s32.totalorder %s20, 0
      // Predicated region
      $region29: #{_lambda_.15} parent=27 // pred_check
        %p228 = pneg %p227
      $region30: #{_lambda_.15} parent=27 // pred_check_branch
        %230 = sbr.rel (%p228) target = $region32
      $region31: #{_lambda_.15} parent=27 // pred_region
        %vm231 = vcmask 31744
        %232 = vst.msk [vmem:[#allocation2] sm:$0xff] %vm231, -1e+30
        %233 = vst.msk [vmem:[#allocation2 + $0x8] sm:$0xff] %vm231, -1e+30
        %234 = vst.msk [vmem:[#allocation2 + $0x10] sm:$0xff] %vm231, -1e+30
        %235 = vst.msk [vmem:[#allocation3] sm:$0xff] %vm231, 0.0
        %236 = vst.msk [vmem:[#allocation3 + $0x8] sm:$0xff] %vm231, 0.0
        %237 = vst.msk [vmem:[#allocation3 + $0x10] sm:$0xff] %vm231, 0.0
        %vm238 = vcmask 261120
        %239 = vst.msk [vmem:[#allocation4] sm:$0xff] %vm238, 0.0
        %240 = vst.msk [vmem:[#allocation4 + $0x8] sm:$0xff] %vm238, 0.0
        %241 = vst.msk [vmem:[#allocation4 + $0x10] sm:$0xff] %vm238, 0.0
      $region32: #{_lambda_.15} parent=27 // pred_fallthru
        _
      %v242 = vlaneseq
      %v243 = vand.u32 %v242, 127
      %s244 = smul.u32 %s20, 24
      %v245 = vstv %s244
      %v246 = vadd.s32 %v243, %v245
      %vm247 = vcmp.lt.s32.totalorder %v246, 17
      %v248 = vld [vmem:[%s204] sm:$0xf]
      %v249 = vld [vmem:[%s204 + $0x4] sm:$0xf]
      %v250 = vld [vmem:[%s204 + $0x8] sm:$0xf]
      %v251 = vld [vmem:[%s214] sm:$0xf]
      %v252 = vld [vmem:[%s214 + $0x4] sm:$0xf]
      %v253 = vld [vmem:[%s214 + $0x8] sm:$0xf]
      %v257 = vunpack.c.l.b16 %v248
      %v258 = vunpack.c.l.b16 %v249
      %v259 = vunpack.c.l.b16 %v250
      %v260 = vpack.c.b16 %v258, %v257
      %v261 = vpack.c.b16 %v259, %v259
      %v265 = vunpack.c.l.b16 %v251
      %v266 = vunpack.c.l.b16 %v252
      %v267 = vunpack.c.l.b16 %v253
      %v268 = vpack.c.b16 %v266, %v265
      %v269 = vpack.c.b16 %v267, %v267
      %270 = vrot.lane.b32.xlu0 %v268, 96
      %v271 = vpop.permute.xlu0 %270
      %272 = vrot.lane.b32.xlu0 %v269, 96
      %v273 = vpop.permute.xlu0 %272
      %vm274 = vcmask 64512
      %v276 = vsel %vm274, %v260, 0
      %v279 = vsel %vm274, %v261, 0
      %v282 = vsel %vm274, %v271, 0
      %v285 = vsel %vm274, %v273, 0
      %287 = vmatprep.subr.bf16.mxu0 0
      %288 = vmatpush1.bf16.xpose.msra.mxu0 %v282
      %289 = vmatprep.subr.bf16.mxu0 0
      %290 = vmatpush1.bf16.xpose.msra.mxu0 %v285
      %291 = vmatprep.subr.bf16.mxu0 0
      %292 = vmatpush1.bf16.xpose.msra.mxu0 0
      %293 = vmatprep.subr.bf16.mxu0 0
      %294 = vmatpush1.bf16.xpose.msra.mxu0 0
      %295 = vmatprep.subr.bf16.mxu0 0
      %296 = vmatpush1.bf16.xpose.msra.mxu0 0
      %297 = vmatprep.subr.bf16.mxu0 0
      %298 = vmatpush1.bf16.xpose.msra.mxu0 0
      %299 = vmatprep.subr.bf16.mxu0 0
      %300 = vmatpush1.bf16.xpose.msra.mxu0 0
      %301 = vmatprep.subr.bf16.mxu0 0
      %302 = vmatpush1.bf16.xpose.msra.mxu0 0
      %303 = vmatprep.subr.bf16.mxu0 0
      %304 = vmatpush1.bf16.xpose.msra.mxu0 0
      %305 = vmatprep.subr.bf16.mxu0 0
      %306 = vmatpush1.bf16.xpose.msra.mxu0 0
      %307 = vmatprep.subr.bf16.mxu0 0
      %308 = vmatpush1.bf16.xpose.msra.mxu0 0
      %309 = vmatprep.subr.bf16.mxu0 0
      %310 = vmatpush1.bf16.xpose.msra.mxu0 0
      %311 = vmatprep.subr.bf16.mxu0 0
      %312 = vmatpush1.bf16.xpose.msra.mxu0 0
      %313 = vmatprep.subr.bf16.mxu0 0
      %314 = vmatpush1.bf16.xpose.msra.mxu0 0
      %315 = vmatprep.subr.bf16.mxu0 0
      %316 = vmatpush1.bf16.xpose.msra.mxu0 0
      %317 = vmatprep.subr.bf16.mxu0 0
      %318 = vmatpush1.bf16.xpose.msra.mxu0 0
      %319 = vmatprep.mubr.bf16.mxu0 0
      %320 = vmatmul.mubr.bf16.gmra.mrb[0].mxu0 %v276
      %v321 = vpop.f32.mrb[0].mxu0
      %v322 = vadd.f32 0.0, %v321
      %v323 = vpop.f32.mrb[0].mxu0
      %v324 = vpop.f32.mrb[0].mxu0
      %v325 = vadd.f32 0.0, %v324
      %v326 = vpop.f32.mrb[0].mxu0
      %327 = vmatprep.mubr.bf16.mxu0 0
      %328 = vmatmul.mubr.bf16.gmra.mrb[0].mxu0 %v279
      %v329 = vpop.f32.mrb[0].mxu0
      %v330 = vadd.f32 0.0, %v329
      %v331 = vpop.f32.mrb[0].mxu0
      %v332 = vpop.f32.mrb[0].mxu0
      %v333 = vpop.f32.mrb[0].mxu0
      %334 = vdwg.mxu0
      %v335 = vmul.f32 %v322, 0.35355338
      %v336 = vmul.f32 %v325, 0.35355338
      %v337 = vmul.f32 %v330, 0.35355338
      %v338 = vsel %vm247, 1, 0
      %vm339 = vcmp.eq.s32.totalorder %v338, 1
      %v340 = vsel %vm339, %v335, -1e+30
      %v341 = vsel %vm339, %v336, -1e+30
      %v342 = vsel %vm339, %v337, -1e+30
      %v343 = vld [vmem:[#allocation2] sm:$0xff]
      %v344 = vld [vmem:[#allocation2 + $0x8] sm:$0xff]
      %v345 = vld [vmem:[#allocation2 + $0x10] sm:$0xff]
      %vm346 = vcmask 195584
      %v347 = vsel %vm346, %v340, -inf
      %348 = vmax.xlane.f32.xlu0 %v347
      %v349 = vpop.xlane.xlu0 %348
      %v350 = vsel %vm346, %v341, -inf
      %351 = vmax.xlane.f32.xlu0 %v350
      %v352 = vpop.xlane.xlu0 %351
      %v353 = vsel %vm346, %v342, -inf
      %354 = vmax.xlane.f32.xlu0 %v353
      %v355 = vpop.xlane.xlu0 %354
      %v356 = vmax.f32 %v343, %v349
      %v357 = vmax.f32 %v344, %v352
      %v358 = vmax.f32 %v345, %v355
      %v359 = vsub.f32 %v343, %v356
      %v360 = vsub.f32 %v344, %v357
      %v361 = vsub.f32 %v345, %v358
      %v362 = vmul.f32 %v359, 1.442695
      %v363 = vpow.pop %v362
      %v364 = vmul.f32 %v360, 1.442695
      %v365 = vpow.pop %v364
      %v366 = vmul.f32 %v361, 1.442695
      %v367 = vpow.pop %v366
      %369 = vset.pattern.permute.xlu0 0
      %370 = vperm.xlu0 %369, %v356
      %v371 = vpop.permute.xlu0 %370
      %374 = vset.pattern.permute.xlu0 0
      %375 = vperm.xlu0 %374, %v357
      %v376 = vpop.permute.xlu0 %375
      %379 = vset.pattern.permute.xlu0 0
      %380 = vperm.xlu0 %379, %v358
      %v381 = vpop.permute.xlu0 %380
      %v383 = vsub.f32 %v340, %v371
      %v384 = vsub.f32 %v341, %v376
      %v385 = vsub.f32 %v342, %v381
      %v386 = vmul.f32 %v383, 1.442695
      %v387 = vpow.pop %v386
      %v388 = vmul.f32 %v384, 1.442695
      %v389 = vpow.pop %v388
      %v390 = vmul.f32 %v385, 1.442695
      %v391 = vpow.pop %v390
      %v392 = vld [vmem:[#allocation3] sm:$0xff]
      %v393 = vld [vmem:[#allocation3 + $0x8] sm:$0xff]
      %v394 = vld [vmem:[#allocation3 + $0x10] sm:$0xff]
      %v395 = vmul.f32 %v363, %v392
      %v396 = vmul.f32 %v365, %v393
      %v397 = vmul.f32 %v367, %v394
      %v398 = vsel %vm346, %v387, 0.0
      %399 = vadd.xlane.f32.xlu0 %v398
      %v400 = vpop.xlane.xlu0 %399
      %v401 = vsel %vm346, %v389, 0.0
      %402 = vadd.xlane.f32.xlu0 %v401
      %v403 = vpop.xlane.xlu0 %402
      %v404 = vsel %vm346, %v391, 0.0
      %405 = vadd.xlane.f32.xlu0 %v404
      %v406 = vpop.xlane.xlu0 %405
      %v407 = vadd.f32 %v395, %v400
      %v408 = vadd.f32 %v396, %v403
      %v409 = vadd.f32 %v397, %v406
      %vm410 = vcmask 7168
      %411 = vst.msk [vmem:[#allocation3] sm:$0xff] %vm410, %v407
      %412 = vst.msk [vmem:[#allocation3 + $0x8] sm:$0xff] %vm410, %v408
      %413 = vst.msk [vmem:[#allocation3 + $0x10] sm:$0xff] %vm410, %v409
      %v414 = vld [vmem:[#allocation4] sm:$0xff]
      %v415 = vld [vmem:[#allocation4 + $0x8] sm:$0xff]
      %v416 = vld [vmem:[#allocation4 + $0x10] sm:$0xff]
      %418 = vset.pattern.permute.xlu0 0
      %419 = vperm.xlu0 %418, %v363
      %v420 = vpop.permute.xlu0 %419
      %423 = vset.pattern.permute.xlu0 0
      %424 = vperm.xlu0 %423, %v365
      %v425 = vpop.permute.xlu0 %424
      %428 = vset.pattern.permute.xlu0 0
      %429 = vperm.xlu0 %428, %v367
      %v430 = vpop.permute.xlu0 %429
      %v432 = vmul.f32 %v420, %v414
      %v433 = vmul.f32 %v425, %v415
      %v434 = vmul.f32 %v430, %v416
      %v435 = vpack.c.bf16 %v389, %v387
      %v436 = vpack.c.bf16 %v391, %v391
      %437 = vrot.lane.b32.xlu0 %v268, 64
      %v438 = vpop.permute.xlu0 %437
      %439 = vrot.lane.b32.xlu0 %v269, 64
      %v440 = vpop.permute.xlu0 %439
      %v443 = vsel %vm346, %v435, 0
      %v446 = vsel %vm346, %v436, 0
      %vm448 = vcmask 1043456
      %v450 = vsel %vm448, %v440, 0
      %452 = vmatprep.subr.bf16.mxu0 0
      %453 = vmatpush1.bf16.msra.mxu0 %v438
      %454 = vmatprep.subr.bf16.mxu0 0
      %455 = vmatpush1.bf16.msra.mxu0 %v450
      %456 = vmatprep.subr.bf16.mxu0 0
      %457 = vmatpush1.bf16.msra.mxu0 0
      %458 = vmatprep.subr.bf16.mxu0 0
      %459 = vmatpush1.bf16.msra.mxu0 0
      %460 = vmatprep.subr.bf16.mxu0 0
      %461 = vmatpush1.bf16.msra.mxu0 0
      %462 = vmatprep.subr.bf16.mxu0 0
      %463 = vmatpush1.bf16.msra.mxu0 0
      %464 = vmatprep.subr.bf16.mxu0 0
      %465 = vmatpush1.bf16.msra.mxu0 0
      %466 = vmatprep.subr.bf16.mxu0 0
      %467 = vmatpush1.bf16.msra.mxu0 0
      %468 = vmatprep.subr.bf16.mxu0 0
      %469 = vmatpush1.bf16.msra.mxu0 0
      %470 = vmatprep.subr.bf16.mxu0 0
      %471 = vmatpush1.bf16.msra.mxu0 0
      %472 = vmatprep.subr.bf16.mxu0 0
      %473 = vmatpush1.bf16.msra.mxu0 0
      %474 = vmatprep.subr.bf16.mxu0 0
      %475 = vmatpush1.bf16.msra.mxu0 0
      %476 = vmatprep.subr.bf16.mxu0 0
      %477 = vmatpush1.bf16.msra.mxu0 0
      %478 = vmatprep.subr.bf16.mxu0 0
      %479 = vmatpush1.bf16.msra.mxu0 0
      %480 = vmatprep.subr.bf16.mxu0 0
      %481 = vmatpush1.bf16.msra.mxu0 0
      %482 = vmatprep.subr.bf16.mxu0 0
      %483 = vmatpush1.bf16.msra.mxu0 0
      %484 = vmatprep.mubr.bf16.mxu0 0
      %485 = vmatmul.mubr.bf16.gmra.mrb[0].mxu0 %v443
      %v486 = vpop.f32.mrb[0].mxu0
      %v487 = vadd.f32 0.0, %v486
      %v488 = vpop.f32.mrb[0].mxu0
      %v489 = vpop.f32.mrb[0].mxu0
      %v490 = vadd.f32 0.0, %v489
      %v491 = vpop.f32.mrb[0].mxu0
      %492 = vmatprep.mubr.bf16.mxu0 0
      %493 = vmatmul.mubr.bf16.gmra.mrb[0].mxu0 %v446
      %v494 = vpop.f32.mrb[0].mxu0
      %v495 = vadd.f32 0.0, %v494
      %v496 = vpop.f32.mrb[0].mxu0
      %v497 = vpop.f32.mrb[0].mxu0
      %v498 = vpop.f32.mrb[0].mxu0
      %499 = vdwg.mxu0
      %v500 = vadd.f32 %v432, %v487
      %v501 = vadd.f32 %v433, %v490
      %v502 = vadd.f32 %v434, %v495
      %503 = vst.msk [vmem:[#allocation4] sm:$0xff] %vm274, %v500
      %504 = vst.msk [vmem:[#allocation4 + $0x8] sm:$0xff] %vm274, %v501
      %505 = vst.msk [vmem:[#allocation4 + $0x10] sm:$0xff] %vm274, %v502
      %506 = vst.msk [vmem:[#allocation2] sm:$0xff] %vm410, %v356
      %507 = vst.msk [vmem:[#allocation2 + $0x8] sm:$0xff] %vm410, %v357
      %508 = vst.msk [vmem:[#allocation2 + $0x10] sm:$0xff] %vm410, %v358
      %v509 = vld [vmem:[%s204] sm:$0xf]
      %v510 = vld [vmem:[%s204 + $0x4] sm:$0xf]
      %v511 = vld [vmem:[%s204 + $0x8] sm:$0xf]
      %v512 = vld [vmem:[%s214] sm:$0xf]
      %v513 = vld [vmem:[%s214 + $0x4] sm:$0xf]
      %v514 = vld [vmem:[%s214 + $0x8] sm:$0xf]
      %v518 = vunpack.c.l.b16 %v509
      %v519 = vunpack.c.l.b16 %v510
      %v520 = vunpack.c.l.b16 %v511
      %v521 = vpack.c.b16 %v519, %v518
      %v522 = vpack.c.b16 %v520, %v520
      %523 = vrot.lane.b32.xlu0 %v521, 120
      %v524 = vpop.permute.xlu0 %523
      %525 = vrot.lane.b32.xlu0 %v522, 120
      %v526 = vpop.permute.xlu0 %525
      %v530 = vunpack.c.l.b16 %v512
      %v531 = vunpack.c.l.b16 %v513
      %v532 = vunpack.c.l.b16 %v514
      %v533 = vpack.c.b16 %v531, %v530
      %v534 = vpack.c.b16 %v532, %v532
      %535 = vrot.lane.b32.xlu0 %v533, 88
      %v536 = vpop.permute.xlu0 %535
      %537 = vrot.lane.b32.xlu0 %v534, 88
      %v538 = vpop.permute.xlu0 %537
      %v540 = vsel %vm274, %v524, 0
      %v543 = vsel %vm274, %v526, 0
      %v546 = vsel %vm274, %v536, 0
      %v549 = vsel %vm274, %v538, 0
      %551 = vmatprep.subr.bf16.mxu0 0
      %552 = vmatpush1.bf16.xpose.msra.mxu0 %v546
      %553 = vmatprep.subr.bf16.mxu0 0
      %554 = vmatpush1.bf16.xpose.msra.mxu0 %v549
      %555 = vmatprep.subr.bf16.mxu0 0
      %556 = vmatpush1.bf16.xpose.msra.mxu0 0
      %557 = vmatprep.subr.bf16.mxu0 0
      %558 = vmatpush1.bf16.xpose.msra.mxu0 0
      %559 = vmatprep.subr.bf16.mxu0 0
      %560 = vmatpush1.bf16.xpose.msra.mxu0 0
      %561 = vmatprep.subr.bf16.mxu0 0
      %562 = vmatpush1.bf16.xpose.msra.mxu0 0
      %563 = vmatprep.subr.bf16.mxu0 0
      %564 = vmatpush1.bf16.xpose.msra.mxu0 0
      %565 = vmatprep.subr.bf16.mxu0 0
      %566 = vmatpush1.bf16.xpose.msra.mxu0 0
      %567 = vmatprep.subr.bf16.mxu0 0
      %568 = vmatpush1.bf16.xpose.msra.mxu0 0
      %569 = vmatprep.subr.bf16.mxu0 0
      %570 = vmatpush1.bf16.xpose.msra.mxu0 0
      %571 = vmatprep.subr.bf16.mxu0 0
      %572 = vmatpush1.bf16.xpose.msra.mxu0 0
      %573 = vmatprep.subr.bf16.mxu0 0
      %574 = vmatpush1.bf16.xpose.msra.mxu0 0
      %575 = vmatprep.subr.bf16.mxu0 0
      %576 = vmatpush1.bf16.xpose.msra.mxu0 0
      %577 = vmatprep.subr.bf16.mxu0 0
      %578 = vmatpush1.bf16.xpose.msra.mxu0 0
      %579 = vmatprep.subr.bf16.mxu0 0
      %580 = vmatpush1.bf16.xpose.msra.mxu0 0
      %581 = vmatprep.subr.bf16.mxu0 0
      %582 = vmatpush1.bf16.xpose.msra.mxu0 0
      %583 = vmatprep.mubr.bf16.mxu0 0
      %584 = vmatmul.mubr.bf16.gmra.mrb[0].mxu0 %v540
      %v585 = vpop.f32.mrb[0].mxu0
      %v586 = vadd.f32 0.0, %v585
      %v587 = vpop.f32.mrb[0].mxu0
      %v588 = vpop.f32.mrb[0].mxu0
      %v589 = vadd.f32 0.0, %v588
      %v590 = vpop.f32.mrb[0].mxu0
      %591 = vmatprep.mubr.bf16.mxu0 0
      %592 = vmatmul.mubr.bf16.gmra.mrb[0].mxu0 %v543
      %v593 = vpop.f32.mrb[0].mxu0
      %v594 = vadd.f32 0.0, %v593
      %v595 = vpop.f32.mrb[0].mxu0
      %v596 = vpop.f32.mrb[0].mxu0
      %v597 = vpop.f32.mrb[0].mxu0
      %598 = vdwg.mxu0
      %v599 = vmul.f32 %v586, 0.35355338
      %v600 = vmul.f32 %v589, 0.35355338
      %v601 = vmul.f32 %v594, 0.35355338
      %v602 = vsel %vm339, %v599, -1e+30
      %v603 = vsel %vm339, %v600, -1e+30
      %v604 = vsel %vm339, %v601, -1e+30
      %v605 = vld [vmem:[#allocation2] sm:$0xff]
      %v606 = vld [vmem:[#allocation2 + $0x8] sm:$0xff]
      %v607 = vld [vmem:[#allocation2 + $0x10] sm:$0xff]
      %v608 = vsel %vm346, %v602, -inf
      %609 = vmax.xlane.f32.xlu0 %v608
      %v610 = vpop.xlane.xlu0 %609
      %v611 = vsel %vm346, %v603, -inf
      %612 = vmax.xlane.f32.xlu0 %v611
      %v613 = vpop.xlane.xlu0 %612
      %v614 = vsel %vm346, %v604, -inf
      %615 = vmax.xlane.f32.xlu0 %v614
      %v616 = vpop.xlane.xlu0 %615
      %v617 = vmax.f32 %v605, %v610
      %v618 = vmax.f32 %v606, %v613
      %v619 = vmax.f32 %v607, %v616
      %v620 = vsub.f32 %v605, %v617
      %v621 = vsub.f32 %v606, %v618
      %v622 = vsub.f32 %v607, %v619
      %v623 = vmul.f32 %v620, 1.442695
      %v624 = vpow.pop %v623
      %v625 = vmul.f32 %v621, 1.442695
      %v626 = vpow.pop %v625
      %v627 = vmul.f32 %v622, 1.442695
      %v628 = vpow.pop %v627
      %630 = vset.pattern.permute.xlu0 1
      %631 = vperm.xlu0 %630, %v617
      %v632 = vpop.permute.xlu0 %631
      %635 = vset.pattern.permute.xlu0 1
      %636 = vperm.xlu0 %635, %v618
      %v637 = vpop.permute.xlu0 %636
      %640 = vset.pattern.permute.xlu0 1
      %641 = vperm.xlu0 %640, %v619
      %v642 = vpop.permute.xlu0 %641
      %v644 = vsub.f32 %v602, %v632
      %v645 = vsub.f32 %v603, %v637
      %v646 = vsub.f32 %v604, %v642
      %v647 = vmul.f32 %v644, 1.442695
      %v648 = vpow.pop %v647
      %v649 = vmul.f32 %v645, 1.442695
      %v650 = vpow.pop %v649
      %v651 = vmul.f32 %v646, 1.442695
      %v652 = vpow.pop %v651
      %v653 = vld [vmem:[#allocation3] sm:$0xff]
      %v654 = vld [vmem:[#allocation3 + $0x8] sm:$0xff]
      %v655 = vld [vmem:[#allocation3 + $0x10] sm:$0xff]
      %v656 = vmul.f32 %v624, %v653
      %v657 = vmul.f32 %v626, %v654
      %v658 = vmul.f32 %v628, %v655
      %v659 = vsel %vm346, %v648, 0.0
      %660 = vadd.xlane.f32.xlu0 %v659
      %v661 = vpop.xlane.xlu0 %660
      %v662 = vsel %vm346, %v650, 0.0
      %663 = vadd.xlane.f32.xlu0 %v662
      %v664 = vpop.xlane.xlu0 %663
      %v665 = vsel %vm346, %v652, 0.0
      %666 = vadd.xlane.f32.xlu0 %v665
      %v667 = vpop.xlane.xlu0 %666
      %v668 = vadd.f32 %v656, %v661
      %v669 = vadd.f32 %v657, %v664
      %v670 = vadd.f32 %v658, %v667
      %vm671 = vcmask 15368
      %672 = vst.msk [vmem:[#allocation3] sm:$0xff] %vm671, %v668
      %673 = vst.msk [vmem:[#allocation3 + $0x8] sm:$0xff] %vm671, %v669
      %674 = vst.msk [vmem:[#allocation3 + $0x10] sm:$0xff] %vm671, %v670
      %v675 = vld [vmem:[#allocation4] sm:$0xff]
      %v676 = vld [vmem:[#allocation4 + $0x8] sm:$0xff]
      %v677 = vld [vmem:[#allocation4 + $0x10] sm:$0xff]
      %679 = vset.pattern.permute.xlu0 1
      %680 = vperm.xlu0 %679, %v624
      %v681 = vpop.permute.xlu0 %680
      %684 = vset.pattern.permute.xlu0 1
      %685 = vperm.xlu0 %684, %v626
      %v686 = vpop.permute.xlu0 %685
      %689 = vset.pattern.permute.xlu0 1
      %690 = vperm.xlu0 %689, %v628
      %v691 = vpop.permute.xlu0 %690
      %v693 = vmul.f32 %v681, %v675
      %v694 = vmul.f32 %v686, %v676
      %v695 = vmul.f32 %v691, %v677
      %v696 = vpack.c.bf16 %v650, %v648
      %v697 = vpack.c.bf16 %v652, %v652
      %698 = vrot.lane.b32.xlu0 %v533, 56
      %v699 = vpop.permute.xlu0 %698
      %700 = vrot.lane.b32.xlu0 %v534, 56
      %v701 = vpop.permute.xlu0 %700
      %v704 = vsel %vm346, %v696, 0
      %v707 = vsel %vm346, %v697, 0
      %v710 = vsel %vm448, %v701, 0
      %712 = vmatprep.subr.bf16.mxu0 0
      %713 = vmatpush1.bf16.msra.mxu0 %v699
      %714 = vmatprep.subr.bf16.mxu0 0
      %715 = vmatpush1.bf16.msra.mxu0 %v710
      %716 = vmatprep.subr.bf16.mxu0 0
      %717 = vmatpush1.bf16.msra.mxu0 0
      %718 = vmatprep.subr.bf16.mxu0 0
      %719 = vmatpush1.bf16.msra.mxu0 0
      %720 = vmatprep.subr.bf16.mxu0 0
      %721 = vmatpush1.bf16.msra.mxu0 0
      %722 = vmatprep.subr.bf16.mxu0 0
      %723 = vmatpush1.bf16.msra.mxu0 0
      %724 = vmatprep.subr.bf16.mxu0 0
      %725 = vmatpush1.bf16.msra.mxu0 0
      %726 = vmatprep.subr.bf16.mxu0 0
      %727 = vmatpush1.bf16.msra.mxu0 0
      %728 = vmatprep.subr.bf16.mxu0 0
      %729 = vmatpush1.bf16.msra.mxu0 0
      %730 = vmatprep.subr.bf16.mxu0 0
      %731 = vmatpush1.bf16.msra.mxu0 0
      %732 = vmatprep.subr.bf16.mxu0 0
      %733 = vmatpush1.bf16.msra.mxu0 0
      %734 = vmatprep.subr.bf16.mxu0 0
      %735 = vmatpush1.bf16.msra.mxu0 0
      %736 = vmatprep.subr.bf16.mxu0 0
      %737 = vmatpush1.bf16.msra.mxu0 0
      %738 = vmatprep.subr.bf16.mxu0 0
      %739 = vmatpush1.bf16.msra.mxu0 0
      %740 = vmatprep.subr.bf16.mxu0 0
      %741 = vmatpush1.bf16.msra.mxu0 0
      %742 = vmatprep.subr.bf16.mxu0 0
      %743 = vmatpush1.bf16.msra.mxu0 0
      %744 = vmatprep.mubr.bf16.mxu0 0
      %745 = vmatmul.mubr.bf16.gmra.mrb[0].mxu0 %v704
      %v746 = vpop.f32.mrb[0].mxu0
      %v747 = vadd.f32 0.0, %v746
      %v748 = vpop.f32.mrb[0].mxu0
      %v749 = vpop.f32.mrb[0].mxu0
      %v750 = vadd.f32 0.0, %v749
      %v751 = vpop.f32.mrb[0].mxu0
      %752 = vmatprep.mubr.bf16.mxu0 0
      %753 = vmatmul.mubr.bf16.gmra.mrb[0].mxu0 %v707
      %v754 = vpop.f32.mrb[0].mxu0
      %v755 = vadd.f32 0.0, %v754
      %v756 = vpop.f32.mrb[0].mxu0
      %v757 = vpop.f32.mrb[0].mxu0
      %v758 = vpop.f32.mrb[0].mxu0
      %759 = vdwg.mxu0
      %763 = vrot.lane.b32.xlu0 %v747, 8
      %v764 = vpop.permute.xlu0 %763
      %765 = vrot.lane.b32.xlu0 %v750, 8
      %v766 = vpop.permute.xlu0 %765
      %767 = vrot.lane.b32.xlu0 %v755, 8
      %v768 = vpop.permute.xlu0 %767
      %v772 = vadd.f32 %v693, %v764
      %v773 = vadd.f32 %v694, %v766
      %v774 = vadd.f32 %v695, %v768
      %vm775 = vcmask 130112
      %776 = vst.msk [vmem:[#allocation4] sm:$0xff] %vm775, %v772
      %777 = vst.msk [vmem:[#allocation4 + $0x8] sm:$0xff] %vm775, %v773
      %778 = vst.msk [vmem:[#allocation4 + $0x10] sm:$0xff] %vm775, %v774
      %779 = vst.msk [vmem:[#allocation2] sm:$0xff] %vm671, %v617
      %780 = vst.msk [vmem:[#allocation2 + $0x8] sm:$0xff] %vm671, %v618
      %781 = vst.msk [vmem:[#allocation2 + $0x10] sm:$0xff] %vm671, %v619
      %v782 = vld [vmem:[%s204] sm:$0xf]
      %v783 = vld [vmem:[%s204 + $0x4] sm:$0xf]
      %v784 = vld [vmem:[%s204 + $0x8] sm:$0xf]
      %v785 = vld [vmem:[%s214] sm:$0xf]
      %v786 = vld [vmem:[%s214 + $0x4] sm:$0xf]
      %v787 = vld [vmem:[%s214 + $0x8] sm:$0xf]
      %v791 = vunpack.c.l.b16 %v782
      %v792 = vunpack.c.l.b16 %v783
      %v793 = vunpack.c.l.b16 %v784
      %v794 = vpack.c.b16 %v792, %v791
      %v795 = vpack.c.b16 %v793, %v793
      %796 = vrot.lane.b32.xlu0 %v794, 112
      %v797 = vpop.permute.xlu0 %796
      %798 = vrot.lane.b32.xlu0 %v795, 112
      %v799 = vpop.permute.xlu0 %798
      %v803 = vunpack.c.l.b16 %v785
      %v804 = vunpack.c.l.b16 %v786
      %v805 = vunpack.c.l.b16 %v787
      %v806 = vpack.c.b16 %v804, %v803
      %v807 = vpack.c.b16 %v805, %v805
      %808 = vrot.lane.b32.xlu0 %v806, 80
      %v809 = vpop.permute.xlu0 %808
      %810 = vrot.lane.b32.xlu0 %v807, 80
      %v811 = vpop.permute.xlu0 %810
      %v813 = vsel %vm274, %v797, 0
      %v816 = vsel %vm274, %v799, 0
      %v819 = vsel %vm274, %v809, 0
      %v822 = vsel %vm274, %v811, 0
      %824 = vmatprep.subr.bf16.mxu0 0
      %825 = vmatpush1.bf16.xpose.msra.mxu0 %v819
      %826 = vmatprep.subr.bf16.mxu0 0
      %827 = vmatpush1.bf16.xpose.msra.mxu0 %v822
      %828 = vmatprep.subr.bf16.mxu0 0
      %829 = vmatpush1.bf16.xpose.msra.mxu0 0
      %830 = vmatprep.subr.bf16.mxu0 0
      %831 = vmatpush1.bf16.xpose.msra.mxu0 0
      %832 = vmatprep.subr.bf16.mxu0 0
      %833 = vmatpush1.bf16.xpose.msra.mxu0 0
      %834 = vmatprep.subr.bf16.mxu0 0
      %835 = vmatpush1.bf16.xpose.msra.mxu0 0
      %836 = vmatprep.subr.bf16.mxu0 0
      %837 = vmatpush1.bf16.xpose.msra.mxu0 0
      %838 = vmatprep.subr.bf16.mxu0 0
      %839 = vmatpush1.bf16.xpose.msra.mxu0 0
      %840 = vmatprep.subr.bf16.mxu0 0
      %841 = vmatpush1.bf16.xpose.msra.mxu0 0
      %842 = vmatprep.subr.bf16.mxu0 0
      %843 = vmatpush1.bf16.xpose.msra.mxu0 0
      %844 = vmatprep.subr.bf16.mxu0 0
      %845 = vmatpush1.bf16.xpose.msra.mxu0 0
      %846 = vmatprep.subr.bf16.mxu0 0
      %847 = vmatpush1.bf16.xpose.msra.mxu0 0
      %848 = vmatprep.subr.bf16.mxu0 0
      %849 = vmatpush1.bf16.xpose.msra.mxu0 0
      %850 = vmatprep.subr.bf16.mxu0 0
      %851 = vmatpush1.bf16.xpose.msra.mxu0 0
      %852 = vmatprep.subr.bf16.mxu0 0
      %853 = vmatpush1.bf16.xpose.msra.mxu0 0
      %854 = vmatprep.subr.bf16.mxu0 0
      %855 = vmatpush1.bf16.xpose.msra.mxu0 0
      %856 = vmatprep.mubr.bf16.mxu0 0
      %857 = vmatmul.mubr.bf16.gmra.mrb[0].mxu0 %v813
      %v858 = vpop.f32.mrb[0].mxu0
      %v859 = vadd.f32 0.0, %v858
      %v860 = vpop.f32.mrb[0].mxu0
      %v861 = vpop.f32.mrb[0].mxu0
      %v862 = vadd.f32 0.0, %v861
      %v863 = vpop.f32.mrb[0].mxu0
      %864 = vmatprep.mubr.bf16.mxu0 0
      %865 = vmatmul.mubr.bf16.gmra.mrb[0].mxu0 %v816
      %v866 = vpop.f32.mrb[0].mxu0
      %v867 = vadd.f32 0.0, %v866
      %v868 = vpop.f32.mrb[0].mxu0
      %v869 = vpop.f32.mrb[0].mxu0
      %v870 = vpop.f32.mrb[0].mxu0
      %871 = vdwg.mxu0
      %v872 = vmul.f32 %v859, 0.35355338
      %v873 = vmul.f32 %v862, 0.35355338
      %v874 = vmul.f32 %v867, 0.35355338
      %v875 = vsel %vm339, %v872, -1e+30
      %v876 = vsel %vm339, %v873, -1e+30
      %v877 = vsel %vm339, %v874, -1e+30
      %v878 = vld [vmem:[#allocation2] sm:$0xff]
      %v879 = vld [vmem:[#allocation2 + $0x8] sm:$0xff]
      %v880 = vld [vmem:[#allocation2 + $0x10] sm:$0xff]
      %v881 = vsel %vm346, %v875, -inf
      %882 = vmax.xlane.f32.xlu0 %v881
      %v883 = vpop.xlane.xlu0 %882
      %v884 = vsel %vm346, %v876, -inf
      %885 = vmax.xlane.f32.xlu0 %v884
      %v886 = vpop.xlane.xlu0 %885
      %v887 = vsel %vm346, %v877, -inf
      %888 = vmax.xlane.f32.xlu0 %v887
      %v889 = vpop.xlane.xlu0 %888
      %v890 = vmax.f32 %v878, %v883
      %v891 = vmax.f32 %v879, %v886
      %v892 = vmax.f32 %v880, %v889
      %v893 = vsub.f32 %v878, %v890
      %v894 = vsub.f32 %v879, %v891
      %v895 = vsub.f32 %v880, %v892
      %v896 = vmul.f32 %v893, 1.442695
      %v897 = vpow.pop %v896
      %v898 = vmul.f32 %v894, 1.442695
      %v899 = vpow.pop %v898
      %v900 = vmul.f32 %v895, 1.442695
      %v901 = vpow.pop %v900
      %903 = vset.pattern.permute.xlu0 2
      %904 = vperm.xlu0 %903, %v890
      %v905 = vpop.permute.xlu0 %904
      %908 = vset.pattern.permute.xlu0 2
      %909 = vperm.xlu0 %908, %v891
      %v910 = vpop.permute.xlu0 %909
      %913 = vset.pattern.permute.xlu0 2
      %914 = vperm.xlu0 %913, %v892
      %v915 = vpop.permute.xlu0 %914
      %v917 = vsub.f32 %v875, %v905
      %v918 = vsub.f32 %v876, %v910
      %v919 = vsub.f32 %v877, %v915
      %v920 = vmul.f32 %v917, 1.442695
      %v921 = vpow.pop %v920
      %v922 = vmul.f32 %v918, 1.442695
      %v923 = vpow.pop %v922
      %v924 = vmul.f32 %v919, 1.442695
      %v925 = vpow.pop %v924
      %v926 = vld [vmem:[#allocation3] sm:$0xff]
      %v927 = vld [vmem:[#allocation3 + $0x8] sm:$0xff]
      %v928 = vld [vmem:[#allocation3 + $0x10] sm:$0xff]
      %v929 = vmul.f32 %v897, %v926
      %v930 = vmul.f32 %v899, %v927
      %v931 = vmul.f32 %v901, %v928
      %v932 = vsel %vm346, %v921, 0.0
      %933 = vadd.xlane.f32.xlu0 %v932
      %v934 = vpop.xlane.xlu0 %933
      %v935 = vsel %vm346, %v923, 0.0
      %936 = vadd.xlane.f32.xlu0 %v935
      %v937 = vpop.xlane.xlu0 %936
      %v938 = vsel %vm346, %v925, 0.0
      %939 = vadd.xlane.f32.xlu0 %v938
      %v940 = vpop.xlane.xlu0 %939
      %v941 = vadd.f32 %v929, %v934
      %v942 = vadd.f32 %v930, %v937
      %v943 = vadd.f32 %v931, %v940
      %vm944 = vcmask 23568
      %945 = vst.msk [vmem:[#allocation3] sm:$0xff] %vm944, %v941
      %946 = vst.msk [vmem:[#allocation3 + $0x8] sm:$0xff] %vm944, %v942
      %947 = vst.msk [vmem:[#allocation3 + $0x10] sm:$0xff] %vm944, %v943
      %v948 = vld [vmem:[#allocation4] sm:$0xff]
      %v949 = vld [vmem:[#allocation4 + $0x8] sm:$0xff]
      %v950 = vld [vmem:[#allocation4 + $0x10] sm:$0xff]
      %952 = vset.pattern.permute.xlu0 2
      %953 = vperm.xlu0 %952, %v897
      %v954 = vpop.permute.xlu0 %953
      %957 = vset.pattern.permute.xlu0 2
      %958 = vperm.xlu0 %957, %v899
      %v959 = vpop.permute.xlu0 %958
      %962 = vset.pattern.permute.xlu0 2
      %963 = vperm.xlu0 %962, %v901
      %v964 = vpop.permute.xlu0 %963
      %v966 = vmul.f32 %v954, %v948
      %v967 = vmul.f32 %v959, %v949
      %v968 = vmul.f32 %v964, %v950
      %v969 = vpack.c.bf16 %v923, %v921
      %v970 = vpack.c.bf16 %v925, %v925
      %971 = vrot.lane.b32.xlu0 %v806, 48
      %v972 = vpop.permute.xlu0 %971
      %973 = vrot.lane.b32.xlu0 %v807, 48
      %v974 = vpop.permute.xlu0 %973
      %v977 = vsel %vm346, %v969, 0
      %v980 = vsel %vm346, %v970, 0
      %v983 = vsel %vm448, %v974, 0
      %985 = vmatprep.subr.bf16.mxu0 0
      %986 = vmatpush1.bf16.msra.mxu0 %v972
      %987 = vmatprep.subr.bf16.mxu0 0
      %988 = vmatpush1.bf16.msra.mxu0 %v983
      %989 = vmatprep.subr.bf16.mxu0 0
      %990 = vmatpush1.bf16.msra.mxu0 0
      %991 = vmatprep.subr.bf16.mxu0 0
      %992 = vmatpush1.bf16.msra.mxu0 0
      %993 = vmatprep.subr.bf16.mxu0 0
      %994 = vmatpush1.bf16.msra.mxu0 0
      %995 = vmatprep.subr.bf16.mxu0 0
      %996 = vmatpush1.bf16.msra.mxu0 0
      %997 = vmatprep.subr.bf16.mxu0 0
      %998 = vmatpush1.bf16.msra.mxu0 0
      %999 = vmatprep.subr.bf16.mxu0 0
      %1000 = vmatpush1.bf16.msra.mxu0 0
      %1001 = vmatprep.subr.bf16.mxu0 0
      %1002 = vmatpush1.bf16.msra.mxu0 0
      %1003 = vmatprep.subr.bf16.mxu0 0
      %1004 = vmatpush1.bf16.msra.mxu0 0
      %1005 = vmatprep.subr.bf16.mxu0 0
      %1006 = vmatpush1.bf16.msra.mxu0 0
      %1007 = vmatprep.subr.bf16.mxu0 0
      %1008 = vmatpush1.bf16.msra.mxu0 0
      %1009 = vmatprep.subr.bf16.mxu0 0
      %1010 = vmatpush1.bf16.msra.mxu0 0
      %1011 = vmatprep.subr.bf16.mxu0 0
      %1012 = vmatpush1.bf16.msra.mxu0 0
      %1013 = vmatprep.subr.bf16.mxu0 0
      %1014 = vmatpush1.bf16.msra.mxu0 0
      %1015 = vmatprep.subr.bf16.mxu0 0
      %1016 = vmatpush1.bf16.msra.mxu0 0
      %1017 = vmatprep.mubr.bf16.mxu0 0
      %1018 = vmatmul.mubr.bf16.gmra.mrb[0].mxu0 %v977
      %v1019 = vpop.f32.mrb[0].mxu0
      %v1020 = vadd.f32 0.0, %v1019
      %v1021 = vpop.f32.mrb[0].mxu0
      %v1022 = vpop.f32.mrb[0].mxu0
      %v1023 = vadd.f32 0.0, %v1022
      %v1024 = vpop.f32.mrb[0].mxu0
      %1025 = vmatprep.mubr.bf16.mxu0 0
      %1026 = vmatmul.mubr.bf16.gmra.mrb[0].mxu0 %v980
      %v1027 = vpop.f32.mrb[0].mxu0
      %v1028 = vadd.f32 0.0, %v1027
      %v1029 = vpop.f32.mrb[0].mxu0
      %v1030 = vpop.f32.mrb[0].mxu0
      %v1031 = vpop.f32.mrb[0].mxu0
      %1032 = vdwg.mxu0
      %1036 = vrot.lane.b32.xlu0 %v1020, 16
      %v1037 = vpop.permute.xlu0 %1036
      %1038 = vrot.lane.b32.xlu0 %v1023, 16
      %v1039 = vpop.permute.xlu0 %1038
      %1040 = vrot.lane.b32.xlu0 %v1028, 16
      %v1041 = vpop.permute.xlu0 %1040
      %v1045 = vadd.f32 %v966, %v1037
      %v1046 = vadd.f32 %v967, %v1039
      %v1047 = vadd.f32 %v968, %v1041
      %vm1048 = vcmask 195712
      %1049 = vst.msk [vmem:[#allocation4] sm:$0xff] %vm1048, %v1045
      %1050 = vst.msk [vmem:[#allocation4 + $0x8] sm:$0xff] %vm1048, %v1046
      %1051 = vst.msk [vmem:[#allocation4 + $0x10] sm:$0xff] %vm1048, %v1047
      %1052 = vst.msk [vmem:[#allocation2] sm:$0xff] %vm944, %v890
      %1053 = vst.msk [vmem:[#allocation2 + $0x8] sm:$0xff] %vm944, %v891
      %1054 = vst.msk [vmem:[#allocation2 + $0x10] sm:$0xff] %vm944, %v892
      %v1055 = vld [vmem:[%s204] sm:$0xf]
      %v1056 = vld [vmem:[%s204 + $0x4] sm:$0xf]
      %v1057 = vld [vmem:[%s204 + $0x8] sm:$0xf]
      %v1058 = vld [vmem:[%s214] sm:$0xf]
      %v1059 = vld [vmem:[%s214 + $0x4] sm:$0xf]
      %v1060 = vld [vmem:[%s214 + $0x8] sm:$0xf]
      %v1064 = vunpack.c.l.b16 %v1055
      %v1065 = vunpack.c.l.b16 %v1056
      %v1066 = vunpack.c.l.b16 %v1057
      %v1067 = vpack.c.b16 %v1065, %v1064
      %v1068 = vpack.c.b16 %v1066, %v1066
      %1069 = vrot.lane.b32.xlu0 %v1067, 104
      %v1070 = vpop.permute.xlu0 %1069
      %1071 = vrot.lane.b32.xlu0 %v1068, 104
      %v1072 = vpop.permute.xlu0 %1071
      %v1076 = vunpack.c.l.b16 %v1058
      %v1077 = vunpack.c.l.b16 %v1059
      %v1078 = vunpack.c.l.b16 %v1060
      %v1079 = vpack.c.b16 %v1077, %v1076
      %v1080 = vpack.c.b16 %v1078, %v1078
      %1081 = vrot.lane.b32.xlu0 %v1079, 72
      %v1082 = vpop.permute.xlu0 %1081
      %1083 = vrot.lane.b32.xlu0 %v1080, 72
      %v1084 = vpop.permute.xlu0 %1083
      %v1086 = vsel %vm274, %v1070, 0
      %v1089 = vsel %vm274, %v1072, 0
      %v1092 = vsel %vm274, %v1082, 0
      %v1095 = vsel %vm274, %v1084, 0
      %1097 = vmatprep.subr.bf16.mxu0 0
      %1098 = vmatpush1.bf16.xpose.msra.mxu0 %v1092
      %1099 = vmatprep.subr.bf16.mxu0 0
      %1100 = vmatpush1.bf16.xpose.msra.mxu0 %v1095
      %1101 = vmatprep.subr.bf16.mxu0 0
      %1102 = vmatpush1.bf16.xpose.msra.mxu0 0
      %1103 = vmatprep.subr.bf16.mxu0 0
      %1104 = vmatpush1.bf16.xpose.msra.mxu0 0
      %1105 = vmatprep.subr.bf16.mxu0 0
      %1106 = vmatpush1.bf16.xpose.msra.mxu0 0
      %1107 = vmatprep.subr.bf16.mxu0 0
      %1108 = vmatpush1.bf16.xpose.msra.mxu0 0
      %1109 = vmatprep.subr.bf16.mxu0 0
      %1110 = vmatpush1.bf16.xpose.msra.mxu0 0
      %1111 = vmatprep.subr.bf16.mxu0 0
      %1112 = vmatpush1.bf16.xpose.msra.mxu0 0
      %1113 = vmatprep.subr.bf16.mxu0 0
      %1114 = vmatpush1.bf16.xpose.msra.mxu0 0
      %1115 = vmatprep.subr.bf16.mxu0 0
      %1116 = vmatpush1.bf16.xpose.msra.mxu0 0
      %1117 = vmatprep.subr.bf16.mxu0 0
      %1118 = vmatpush1.bf16.xpose.msra.mxu0 0
      %1119 = vmatprep.subr.bf16.mxu0 0
      %1120 = vmatpush1.bf16.xpose.msra.mxu0 0
      %1121 = vmatprep.subr.bf16.mxu0 0
      %1122 = vmatpush1.bf16.xpose.msra.mxu0 0
      %1123 = vmatprep.subr.bf16.mxu0 0
      %1124 = vmatpush1.bf16.xpose.msra.mxu0 0
      %1125 = vmatprep.subr.bf16.mxu0 0
      %1126 = vmatpush1.bf16.xpose.msra.mxu0 0
      %1127 = vmatprep.subr.bf16.mxu0 0
      %1128 = vmatpush1.bf16.xpose.msra.mxu0 0
      %1129 = vmatprep.mubr.bf16.mxu0 0
      %1130 = vmatmul.mubr.bf16.gmra.mrb[0].mxu0 %v1086
      %v1131 = vpop.f32.mrb[0].mxu0
      %v1132 = vadd.f32 0.0, %v1131
      %v1133 = vpop.f32.mrb[0].mxu0
      %v1134 = vpop.f32.mrb[0].mxu0
      %v1135 = vadd.f32 0.0, %v1134
      %v1136 = vpop.f32.mrb[0].mxu0
      %1137 = vmatprep.mubr.bf16.mxu0 0
      %1138 = vmatmul.mubr.bf16.gmra.mrb[0].mxu0 %v1089
      %v1139 = vpop.f32.mrb[0].mxu0
      %v1140 = vadd.f32 0.0, %v1139
      %v1141 = vpop.f32.mrb[0].mxu0
      %v1142 = vpop.f32.mrb[0].mxu0
      %v1143 = vpop.f32.mrb[0].mxu0
      %1144 = vdwg.mxu0
      %v1145 = vmul.f32 %v1132, 0.35355338
      %v1146 = vmul.f32 %v1135, 0.35355338
      %v1147 = vmul.f32 %v1140, 0.35355338
      %v1148 = vsel %vm339, %v1145, -1e+30
      %v1149 = vsel %vm339, %v1146, -1e+30
      %v1150 = vsel %vm339, %v1147, -1e+30
      %v1151 = vld [vmem:[#allocation2] sm:$0xff]
      %v1152 = vld [vmem:[#allocation2 + $0x8] sm:$0xff]
      %v1153 = vld [vmem:[#allocation2 + $0x10] sm:$0xff]
      %v1154 = vsel %vm346, %v1148, -inf
      %1155 = vmax.xlane.f32.xlu0 %v1154
      %v1156 = vpop.xlane.xlu0 %1155
      %v1157 = vsel %vm346, %v1149, -inf
      %1158 = vmax.xlane.f32.xlu0 %v1157
      %v1159 = vpop.xlane.xlu0 %1158
      %v1160 = vsel %vm346, %v1150, -inf
      %1161 = vmax.xlane.f32.xlu0 %v1160
      %v1162 = vpop.xlane.xlu0 %1161
      %v1163 = vmax.f32 %v1151, %v1156
      %v1164 = vmax.f32 %v1152, %v1159
      %v1165 = vmax.f32 %v1153, %v1162
      %v1166 = vsub.f32 %v1151, %v1163
      %v1167 = vsub.f32 %v1152, %v1164
      %v1168 = vsub.f32 %v1153, %v1165
      %v1169 = vmul.f32 %v1166, 1.442695
      %v1170 = vpow.pop %v1169
      %v1171 = vmul.f32 %v1167, 1.442695
      %v1172 = vpow.pop %v1171
      %v1173 = vmul.f32 %v1168, 1.442695
      %v1174 = vpow.pop %v1173
      %1176 = vset.pattern.permute.xlu0 3
      %1177 = vperm.xlu0 %1176, %v1163
      %v1178 = vpop.permute.xlu0 %1177
      %1181 = vset.pattern.permute.xlu0 3
      %1182 = vperm.xlu0 %1181, %v1164
      %v1183 = vpop.permute.xlu0 %1182
      %1186 = vset.pattern.permute.xlu0 3
      %1187 = vperm.xlu0 %1186, %v1165
      %v1188 = vpop.permute.xlu0 %1187
      %v1190 = vsub.f32 %v1148, %v1178
      %v1191 = vsub.f32 %v1149, %v1183
      %v1192 = vsub.f32 %v1150, %v1188
      %v1193 = vmul.f32 %v1190, 1.442695
      %v1194 = vpow.pop %v1193
      %v1195 = vmul.f32 %v1191, 1.442695
      %v1196 = vpow.pop %v1195
      %v1197 = vmul.f32 %v1192, 1.442695
      %v1198 = vpow.pop %v1197
      %v1199 = vld [vmem:[#allocation3] sm:$0xff]
      %v1200 = vld [vmem:[#allocation3 + $0x8] sm:$0xff]
      %v1201 = vld [vmem:[#allocation3 + $0x10] sm:$0xff]
      %v1202 = vmul.f32 %v1170, %v1199
      %v1203 = vmul.f32 %v1172, %v1200
      %v1204 = vmul.f32 %v1174, %v1201
      %v1205 = vsel %vm346, %v1194, 0.0
      %1206 = vadd.xlane.f32.xlu0 %v1205
      %v1207 = vpop.xlane.xlu0 %1206
      %v1208 = vsel %vm346, %v1196, 0.0
      %1209 = vadd.xlane.f32.xlu0 %v1208
      %v1210 = vpop.xlane.xlu0 %1209
      %v1211 = vsel %vm346, %v1198, 0.0
      %1212 = vadd.xlane.f32.xlu0 %v1211
      %v1213 = vpop.xlane.xlu0 %1212
      %v1214 = vadd.f32 %v1202, %v1207
      %v1215 = vadd.f32 %v1203, %v1210
      %v1216 = vadd.f32 %v1204, %v1213
      %vm1217 = vcmask 31768
      %1218 = vst.msk [vmem:[#allocation3] sm:$0xff] %vm1217, %v1214
      %1219 = vst.msk [vmem:[#allocation3 + $0x8] sm:$0xff] %vm1217, %v1215
      %1220 = vst.msk [vmem:[#allocation3 + $0x10] sm:$0xff] %vm1217, %v1216
      %v1221 = vld [vmem:[#allocation4] sm:$0xff]
      %v1222 = vld [vmem:[#allocation4 + $0x8] sm:$0xff]
      %v1223 = vld [vmem:[#allocation4 + $0x10] sm:$0xff]
      %1225 = vset.pattern.permute.xlu0 3
      %1226 = vperm.xlu0 %1225, %v1170
      %v1227 = vpop.permute.xlu0 %1226
      %1230 = vset.pattern.permute.xlu0 3
      %1231 = vperm.xlu0 %1230, %v1172
      %v1232 = vpop.permute.xlu0 %1231
      %1235 = vset.pattern.permute.xlu0 3
      %1236 = vperm.xlu0 %1235, %v1174
      %v1237 = vpop.permute.xlu0 %1236
      %v1239 = vmul.f32 %v1227, %v1221
      %v1240 = vmul.f32 %v1232, %v1222
      %v1241 = vmul.f32 %v1237, %v1223
      %v1242 = vpack.c.bf16 %v1196, %v1194
      %v1243 = vpack.c.bf16 %v1198, %v1198
      %1244 = vrot.lane.b32.xlu0 %v1079, 40
      %v1245 = vpop.permute.xlu0 %1244
      %1246 = vrot.lane.b32.xlu0 %v1080, 40
      %v1247 = vpop.permute.xlu0 %1246
      %v1250 = vsel %vm346, %v1242, 0
      %v1253 = vsel %vm346, %v1243, 0
      %v1256 = vsel %vm448, %v1247, 0
      %1258 = vmatprep.subr.bf16.mxu0 0
      %1259 = vmatpush1.bf16.msra.mxu0 %v1245
      %1260 = vmatprep.subr.bf16.mxu0 0
      %1261 = vmatpush1.bf16.msra.mxu0 %v1256
      %1262 = vmatprep.subr.bf16.mxu0 0
      %1263 = vmatpush1.bf16.msra.mxu0 0
      %1264 = vmatprep.subr.bf16.mxu0 0
      %1265 = vmatpush1.bf16.msra.mxu0 0
      %1266 = vmatprep.subr.bf16.mxu0 0
      %1267 = vmatpush1.bf16.msra.mxu0 0
      %1268 = vmatprep.subr.bf16.mxu0 0
      %1269 = vmatpush1.bf16.msra.mxu0 0
      %1270 = vmatprep.subr.bf16.mxu0 0
      %1271 = vmatpush1.bf16.msra.mxu0 0
      %1272 = vmatprep.subr.bf16.mxu0 0
      %1273 = vmatpush1.bf16.msra.mxu0 0
      %1274 = vmatprep.subr.bf16.mxu0 0
      %1275 = vmatpush1.bf16.msra.mxu0 0
      %1276 = vmatprep.subr.bf16.mxu0 0
      %1277 = vmatpush1.bf16.msra.mxu0 0
      %1278 = vmatprep.subr.bf16.mxu0 0
      %1279 = vmatpush1.bf16.msra.mxu0 0
      %1280 = vmatprep.subr.bf16.mxu0 0
      %1281 = vmatpush1.bf16.msra.mxu0 0
      %1282 = vmatprep.subr.bf16.mxu0 0
      %1283 = vmatpush1.bf16.msra.mxu0 0
      %1284 = vmatprep.subr.bf16.mxu0 0
      %1285 = vmatpush1.bf16.msra.mxu0 0
      %1286 = vmatprep.subr.bf16.mxu0 0
      %1287 = vmatpush1.bf16.msra.mxu0 0
      %1288 = vmatprep.subr.bf16.mxu0 0
      %1289 = vmatpush1.bf16.msra.mxu0 0
      %1290 = vmatprep.mubr.bf16.mxu0 0
      %1291 = vmatmul.mubr.bf16.gmra.mrb[0].mxu0 %v1250
      %v1292 = vpop.f32.mrb[0].mxu0
      %v1293 = vadd.f32 0.0, %v1292
      %v1294 = vpop.f32.mrb[0].mxu0
      %v1295 = vpop.f32.mrb[0].mxu0
      %v1296 = vadd.f32 0.0, %v1295
      %v1297 = vpop.f32.mrb[0].mxu0
      %1298 = vmatprep.mubr.bf16.mxu0 0
      %1299 = vmatmul.mubr.bf16.gmra.mrb[0].mxu0 %v1253
      %v1300 = vpop.f32.mrb[0].mxu0
      %v1301 = vadd.f32 0.0, %v1300
      %v1302 = vpop.f32.mrb[0].mxu0
      %v1303 = vpop.f32.mrb[0].mxu0
      %v1304 = vpop.f32.mrb[0].mxu0
      %1305 = vdwg.mxu0
      %1309 = vrot.lane.b32.xlu0 %v1293, 24
      %v1310 = vpop.permute.xlu0 %1309
      %1311 = vrot.lane.b32.xlu0 %v1296, 24
      %v1312 = vpop.permute.xlu0 %1311
      %1313 = vrot.lane.b32.xlu0 %v1301, 24
      %v1314 = vpop.permute.xlu0 %1313
      %v1318 = vadd.f32 %v1239, %v1310
      %v1319 = vadd.f32 %v1240, %v1312
      %v1320 = vadd.f32 %v1241, %v1314
      %vm1321 = vcmask 261312
      %1322 = vst.msk [vmem:[#allocation4] sm:$0xff] %vm1321, %v1318
      %1323 = vst.msk [vmem:[#allocation4 + $0x8] sm:$0xff] %vm1321, %v1319
      %1324 = vst.msk [vmem:[#allocation4 + $0x10] sm:$0xff] %vm1321, %v1320
      %1325 = vst.msk [vmem:[#allocation2] sm:$0xff] %vm1217, %v1163
      %1326 = vst.msk [vmem:[#allocation2 + $0x8] sm:$0xff] %vm1217, %v1164
      %1327 = vst.msk [vmem:[#allocation2 + $0x10] sm:$0xff] %vm1217, %v1165
      // Predicated region
      $region33: #{_lambda_.15} parent=27 // pred_check
        %p1328 = pneg %p227
      $region34: #{_lambda_.15} parent=27 // pred_check_branch
        %1330 = sbr.rel (%p1328) target = $region36
      $region35: #{_lambda_.15} parent=27 // pred_region
        %v1331 = vld [vmem:[#allocation3] sm:$0xff]
        %v1332 = vld [vmem:[#allocation3 + $0x8] sm:$0xff]
        %v1333 = vld [vmem:[#allocation3 + $0x10] sm:$0xff]
        %v1334 = vrcp.pop %v1331
        %v1335 = vrcp.pop %v1332
        %v1336 = vrcp.pop %v1333
        %v1337 = vld [vmem:[#allocation4] sm:$0xff]
        %v1338 = vld [vmem:[#allocation4 + $0x8] sm:$0xff]
        %v1339 = vld [vmem:[#allocation4 + $0x10] sm:$0xff]
        %1341 = vset.pattern.permute.xlu0 0
        %1342 = vperm.xlu0 %1341, %v1334
        %v1343 = vpop.permute.xlu0 %1342
        %1346 = vset.pattern.permute.xlu0 0
        %1347 = vperm.xlu0 %1346, %v1335
        %v1348 = vpop.permute.xlu0 %1347
        %1351 = vset.pattern.permute.xlu0 0
        %1352 = vperm.xlu0 %1351, %v1336
        %v1353 = vpop.permute.xlu0 %1352
        %v1355 = vmul.f32 %v1337, %v1343
        %v1356 = vmul.f32 %v1338, %v1348
        %v1357 = vmul.f32 %v1339, %v1353
        %v1358 = vpack.c.bf16 %v1356, %v1355
        %v1359 = vpack.c.bf16 %v1357, %v1357
        %v1362 = vunpack.c.l.b16 %v1358
        %v1363 = vunpack.c.h.b16 %v1358
        %v1364 = vunpack.c.l.b16 %v1359
        %v1365 = vpack.c.b16 %v1362, %v1362
        %v1366 = vpack.c.b16 %v1363, %v1363
        %v1367 = vpack.c.b16 %v1364, %v1364
        %vm1371 = vcmask 60416
        %1372 = vst.msk [vmem:[%s224] sm:$0xf] %vm1371, %v1365
        %1373 = vst.msk [vmem:[%s224 + $0x4] sm:$0xf] %vm1371, %v1366
        %1374 = vst.msk [vmem:[%s224 + $0x8] sm:$0xf] %vm1371, %v1367
        %v1375 = vld [vmem:[#allocation4] sm:$0xff]
        %v1376 = vld [vmem:[#allocation4 + $0x8] sm:$0xff]
        %v1377 = vld [vmem:[#allocation4 + $0x10] sm:$0xff]
        %1378 = vset.pattern.permute.xlu0 1
        %1379 = vperm.xlu0 %1378, %v1334
        %v1380 = vpop.permute.xlu0 %1379
        %1382 = vset.pattern.permute.xlu0 1
        %1383 = vperm.xlu0 %1382, %v1335
        %v1384 = vpop.permute.xlu0 %1383
        %1386 = vset.pattern.permute.xlu0 1
        %1387 = vperm.xlu0 %1386, %v1336
        %v1388 = vpop.permute.xlu0 %1387
        %v1390 = vmul.f32 %v1375, %v1380
        %v1391 = vmul.f32 %v1376, %v1384
        %v1392 = vmul.f32 %v1377, %v1388
        %v1393 = vpack.c.bf16 %v1391, %v1390
        %v1394 = vpack.c.bf16 %v1392, %v1392
        %v1397 = vunpack.c.l.b16 %v1393
        %v1398 = vunpack.c.h.b16 %v1393
        %v1399 = vunpack.c.l.b16 %v1394
        %v1400 = vpack.c.b16 %v1397, %v1397
        %v1401 = vpack.c.b16 %v1398, %v1398
        %v1402 = vpack.c.b16 %v1399, %v1399
        %vm1406 = vcmask 126016
        %1407 = vst.msk [vmem:[%s224] sm:$0xf] %vm1406, %v1400
        %1408 = vst.msk [vmem:[%s224 + $0x4] sm:$0xf] %vm1406, %v1401
        %1409 = vst.msk [vmem:[%s224 + $0x8] sm:$0xf] %vm1406, %v1402
        %v1410 = vld [vmem:[#allocation4] sm:$0xff]
        %v1411 = vld [vmem:[#allocation4 + $0x8] sm:$0xff]
        %v1412 = vld [vmem:[#allocation4 + $0x10] sm:$0xff]
        %1413 = vset.pattern.permute.xlu0 2
        %1414 = vperm.xlu0 %1413, %v1334
        %v1415 = vpop.permute.xlu0 %1414
        %1417 = vset.pattern.permute.xlu0 2
        %1418 = vperm.xlu0 %1417, %v1335
        %v1419 = vpop.permute.xlu0 %1418
        %1421 = vset.pattern.permute.xlu0 2
        %1422 = vperm.xlu0 %1421, %v1336
        %v1423 = vpop.permute.xlu0 %1422
        %v1425 = vmul.f32 %v1410, %v1415
        %v1426 = vmul.f32 %v1411, %v1419
        %v1427 = vmul.f32 %v1412, %v1423
        %v1428 = vpack.c.bf16 %v1426, %v1425
        %v1429 = vpack.c.bf16 %v1427, %v1427
        %v1432 = vunpack.c.l.b16 %v1428
        %v1433 = vunpack.c.h.b16 %v1428
        %v1434 = vunpack.c.l.b16 %v1429
        %v1435 = vpack.c.b16 %v1432, %v1432
        %v1436 = vpack.c.b16 %v1433, %v1433
        %v1437 = vpack.c.b16 %v1434, %v1434
        %vm1441 = vcmask 191616
        %1442 = vst.msk [vmem:[%s224] sm:$0xf] %vm1441, %v1435
        %1443 = vst.msk [vmem:[%s224 + $0x4] sm:$0xf] %vm1441, %v1436
        %1444 = vst.msk [vmem:[%s224 + $0x8] sm:$0xf] %vm1441, %v1437
        %v1445 = vld [vmem:[#allocation4] sm:$0xff]
        %v1446 = vld [vmem:[#allocation4 + $0x8] sm:$0xff]
        %v1447 = vld [vmem:[#allocation4 + $0x10] sm:$0xff]
        %1448 = vset.pattern.permute.xlu0 3
        %1449 = vperm.xlu0 %1448, %v1334
        %v1450 = vpop.permute.xlu0 %1449
        %1452 = vset.pattern.permute.xlu0 3
        %1453 = vperm.xlu0 %1452, %v1335
        %v1454 = vpop.permute.xlu0 %1453
        %1456 = vset.pattern.permute.xlu0 3
        %1457 = vperm.xlu0 %1456, %v1336
        %v1458 = vpop.permute.xlu0 %1457
        %v1460 = vmul.f32 %v1445, %v1450
        %v1461 = vmul.f32 %v1446, %v1454
        %v1462 = vmul.f32 %v1447, %v1458
        %v1463 = vpack.c.bf16 %v1461, %v1460
        %v1464 = vpack.c.bf16 %v1462, %v1462
        %v1467 = vunpack.c.l.b16 %v1463
        %v1468 = vunpack.c.h.b16 %v1463
        %v1469 = vunpack.c.l.b16 %v1464
        %v1470 = vpack.c.b16 %v1467, %v1467
        %v1471 = vpack.c.b16 %v1468, %v1468
        %v1472 = vpack.c.b16 %v1469, %v1469
        %vm1476 = vcmask 257216
        %1477 = vst.msk [vmem:[%s224] sm:$0xf] %vm1476, %v1470
        %1478 = vst.msk [vmem:[%s224 + $0x4] sm:$0xf] %vm1476, %v1471
        %1479 = vst.msk [vmem:[%s224 + $0x8] sm:$0xf] %vm1476, %v1472
      $region36: #{_lambda_.15} parent=27 // pred_fallthru
        _
      %s1480 = smul.u32 3, %s19
      %p1481 = scmp.lt.s32.totalorder %s18, 1
      %s1482 = scalar_select %p1481, %s18, 1
      %p1483 = scmp.lt.s32.totalorder %s1480, 2
      %s1484 = scalar_select %p1483, %s1480, 2
      %s1485 = smul.addr %s1482, 3
      %s1486 = sadd.s32 %s1484, %s1485
      %s1487 = smul.addr %s1486, 4
      %s1488 = scalar_lea.vmem %s2, %s1487
      // Predicated region
      $region37: #{_lambda_.15} parent=27 // pred_check
        %p1489 = pneg %p108
      $region38: #{_lambda_.15} parent=27 // pred_check_branch
        %1491 = sbr.rel (%p1489) target = $region40
      $region39: #{_lambda_.15} parent=27 // pred_region
        %s1492 = smul.u32 3, %s19
      $region40: #{_lambda_.15} parent=27 // pred_fallthru
        _
    $region28: #{_lambda_.15} parent=5 // pred_fallthru
      _
    %p1493 = scmp.le.s32.totalorder 2, %s8
    // Predicated region
    $region41: #{_lambda_.15} parent=5 // pred_check
      %p1494 = pneg %p1493
    $region42: #{_lambda_.15} parent=5 // pred_check_branch
      %1496 = sbr.rel (%p1494) target = $region44
    $region43: #{_lambda_.15} parent=5 // pred_region
      %s1497 = ssub.s32 %s8, 2
      // Predicated region
      $region45: #{_lambda_.15} parent=43 // pred_check
        %p1498 = pneg %p114
      $region46: #{_lambda_.15} parent=43 // pred_check_branch
        %1500 = sbr.rel (%p1498) target = $region48
      $region47: #{_lambda_.15} parent=43 // pred_region
        %s1501 = smul.u32 3, %s22
        %p1502 = scmp.lt.s32.totalorder %s21, 1
        %s1503 = scalar_select %p1502, %s21, 1
        %p1504 = scmp.lt.s32.totalorder %s1501, 2
        %s1505 = scalar_select %p1504, %s1501, 2
        %s1506 = smul.addr %s1503, 3
        %s1507 = sadd.s32 %s1505, %s1506
        %s1508 = smul.addr %s1507, 4
        %s1509 = scalar_lea.vmem %s2, %s1508
      $region48: #{_lambda_.15} parent=43 // pred_fallthru
        _
    $region44: #{_lambda_.15} parent=5 // pred_fallthru
      _
  $region6: #{_lambda_.15} parent=0 // loop_footer
    %s12 = sadd.s32 1, %s8
  $region7: #{_lambda_.15} parent=0 // loop_footer_branch
    %7 = sbr.rel target = $region3
  $region8: #{_lambda_.15} parent=0 // loop_exit
    _

// kernel: _lambda_.24
$region0: #{_lambda_.24}
  #allocation0 [shape = 'u32[]', space=smem, size = 0x4, offset = 0x4, fixed_abs, tag = 'smem constant byte address 0x4 - core index']
  #allocation1 [shape = 'u32[144,128]{1,0:T(1,128)}', space=vmem, size = 0x12000, scoped, tag = 'internal scratch']
  %s0 = inlined_call_operand.vmem [shape: f32[40,32], index: 0, kind: input, shape index: {}]
  %s1 = inlined_call_operand.vmem [shape: f32[1,32], index: 1, kind: input, shape index: {}]
  %s2 = inlined_call_operand.vmem [shape: f32[1,32], index: 2, kind: input, shape index: {}]
  %s3 = inlined_call_operand.vmem [shape: f32[40,32], index: 3, kind: output, shape index: {}]
  %s4 = sld [smem:[#allocation0]]
  $region22: #{_lambda_.24} parent=0
    _
  %s6 = ssub.s32 1, %s4
  %s7 = scalar_select 0, %s6, %s4
  // Predicated region
  $region2: #{_lambda_.24} parent=0 // pred_check
    _
  $region3: #{_lambda_.24} parent=0 // pred_check_branch
    %9 = sbr.rel (0) target = $region5
  $region4: #{_lambda_.24} parent=0 // pred_region
    _
  $region5: #{_lambda_.24} parent=0 // pred_fallthru
    _
  // Predicated region
  $region6: #{_lambda_.24} parent=0 // pred_check
    _
  $region7: #{_lambda_.24} parent=0 // pred_check_branch
    %11 = sbr.rel (0) target = $region9
  $region8: #{_lambda_.24} parent=0 // pred_region
    _
  $region9: #{_lambda_.24} parent=0 // pred_fallthru
    _
  // Predicated region
  $region10: #{_lambda_.24} parent=0 // pred_check
    _
  $region11: #{_lambda_.24} parent=0 // pred_check_branch
    %13 = sbr.rel (0) target = $region13
  $region12: #{_lambda_.24} parent=0 // pred_region
    _
  $region13: #{_lambda_.24} parent=0 // pred_fallthru
    _
  %v14 = vld [vmem:[%s0] sm:$0xff]
  %v15 = vld [vmem:[%s0 + $0x8] sm:$0xff]
  %v16 = vld [vmem:[%s0 + $0x10] sm:$0xff]
  %v17 = vld [vmem:[%s0 + $0x18] sm:$0xff]
  %v18 = vld [vmem:[%s0 + $0x20] sm:$0xff]
  %vm19 = vcmask 261120
  %v20 = vsel %vm19, %v14, 0.0
  %21 = vadd.xlane.f32.xlu0 %v20
  %v22 = vpop.xlane.xlu0 %21
  %v23 = vsel %vm19, %v15, 0.0
  %24 = vadd.xlane.f32.xlu0 %v23
  %v25 = vpop.xlane.xlu0 %24
  %v26 = vsel %vm19, %v16, 0.0
  %27 = vadd.xlane.f32.xlu0 %v26
  %v28 = vpop.xlane.xlu0 %27
  %v29 = vsel %vm19, %v17, 0.0
  %30 = vadd.xlane.f32.xlu0 %v29
  %v31 = vpop.xlane.xlu0 %30
  %v32 = vsel %vm19, %v18, 0.0
  %33 = vadd.xlane.f32.xlu0 %v32
  %v34 = vpop.xlane.xlu0 %33
  %v35 = vrcp.pop 32.0
  %v36 = vmul.f32 %v22, %v35
  %v37 = vmul.f32 %v25, %v35
  %v38 = vmul.f32 %v28, %v35
  %v39 = vmul.f32 %v31, %v35
  %v40 = vmul.f32 %v34, %v35
  %v41 = vsub.f32 %v14, %v36
  %v42 = vsub.f32 %v15, %v37
  %v43 = vsub.f32 %v16, %v38
  %v44 = vsub.f32 %v17, %v39
  %v45 = vsub.f32 %v18, %v40
  %v46 = vmul.f32 %v41, %v41
  %v47 = vmul.f32 %v42, %v42
  %v48 = vmul.f32 %v43, %v43
  %v49 = vmul.f32 %v44, %v44
  %v50 = vmul.f32 %v45, %v45
  %v51 = vsel %vm19, %v46, 0.0
  %52 = vadd.xlane.f32.xlu0 %v51
  %v53 = vpop.xlane.xlu0 %52
  %v54 = vsel %vm19, %v47, 0.0
  %55 = vadd.xlane.f32.xlu0 %v54
  %v56 = vpop.xlane.xlu0 %55
  %v57 = vsel %vm19, %v48, 0.0
  %58 = vadd.xlane.f32.xlu0 %v57
  %v59 = vpop.xlane.xlu0 %58
  %v60 = vsel %vm19, %v49, 0.0
  %61 = vadd.xlane.f32.xlu0 %v60
  %v62 = vpop.xlane.xlu0 %61
  %v63 = vsel %vm19, %v50, 0.0
  %64 = vadd.xlane.f32.xlu0 %v63
  %v65 = vpop.xlane.xlu0 %64
  %v66 = vmul.f32 %v53, %v35
  %v67 = vmul.f32 %v56, %v35
  %v68 = vmul.f32 %v59, %v35
  %v69 = vmul.f32 %v62, %v35
  %v70 = vmul.f32 %v65, %v35
  %v71 = vadd.f32 %v66, 1e-05
  %v72 = vadd.f32 %v67, 1e-05
  %v73 = vadd.f32 %v68, 1e-05
  %v74 = vadd.f32 %v69, 1e-05
  %v75 = vadd.f32 %v70, 1e-05
  %v76 = vrsqrt.pop %v71
  %v77 = vrsqrt.pop %v72
  %v78 = vrsqrt.pop %v73
  %v79 = vrsqrt.pop %v74
  %v80 = vrsqrt.pop %v75
  %v81 = vmul.f32 %v41, %v76
  %v82 = vmul.f32 %v42, %v77
  %v83 = vmul.f32 %v43, %v78
  %v84 = vmul.f32 %v44, %v79
  %v85 = vmul.f32 %v45, %v80
  %v86 = vld [vmem:[%s1] sm:$0x1]
  %v88 = vlaneseq
  %v89 = vshrl.u32 %v88, 7
  %v90 = vsub.s32 0, %v89
  %v91 = vrot.slane %v86, %v90
  %v93 = vmul.f32 %v81, %v91
  %v94 = vmul.f32 %v82, %v91
  %v95 = vmul.f32 %v83, %v91
  %v96 = vmul.f32 %v84, %v91
  %v97 = vmul.f32 %v85, %v91
  %v98 = vld [vmem:[%s2] sm:$0x1]
  %v100 = vlaneseq
  %v101 = vshrl.u32 %v100, 7
  %v102 = vsub.s32 0, %v101
  %v103 = vrot.slane %v98, %v102
  %v105 = vadd.f32 %v93, %v103
  %v106 = vadd.f32 %v94, %v103
  %v107 = vadd.f32 %v95, %v103
  %v108 = vadd.f32 %v96, %v103
  %v109 = vadd.f32 %v97, %v103
  %110 = vst.msk [vmem:[%s3] sm:$0xff] %vm19, %v105
  %111 = vst.msk [vmem:[%s3 + $0x8] sm:$0xff] %vm19, %v106
  %112 = vst.msk [vmem:[%s3 + $0x10] sm:$0xff] %vm19, %v107
  %113 = vst.msk [vmem:[%s3 + $0x18] sm:$0xff] %vm19, %v108
  %114 = vst.msk [vmem:[%s3 + $0x20] sm:$0xff] %vm19, %v109
  // Predicated region
  $region14: #{_lambda_.24} parent=0 // pred_check
    _
  $region15: #{_lambda_.24} parent=0 // pred_check_branch
    %116 = sbr.rel (0) target = $region17
  $region16: #{_lambda_.24} parent=0 // pred_region
    _
  $region17: #{_lambda_.24} parent=0 // pred_fallthru
    _
  // Predicated region
  $region18: #{_lambda_.24} parent=0 // pred_check
    _
  $region19: #{_lambda_.24} parent=0 // pred_check_branch
    %118 = sbr.rel (0) target = $region21
  $region20: #{_lambda_.24} parent=0 // pred_region
    _
  $region21: #{_lambda_.24} parent=0 // pred_fallthru
    _

// kernel: _lambda_.18
$region0: #{_lambda_.18}
  #allocation0 [shape = 'u32[]', space=smem, size = 0x4, offset = 0x4, fixed_abs, tag = 'smem constant byte address 0x4 - core index']
  #allocation1 [shape = 'u32[144,128]{1,0:T(1,128)}', space=vmem, size = 0x12000, scoped, tag = 'internal scratch']
  #allocation2 [shape = 'f32[40,32]{1,0:T(8,128)}', space=vmem, size = 0x5000, scoped, tag = 'scratch operand']
  %s0 = inlined_call_operand.vmem [shape: bf16[40,64], index: 0, kind: input, shape index: {}]
  %s1 = inlined_call_operand.vmem [shape: bf16[64,32], index: 1, kind: input, shape index: {}]
  %s2 = inlined_call_operand.vmem [shape: f32[1,32], index: 2, kind: input, shape index: {}]
  %s3 = inlined_call_operand.vmem [shape: f32[40,32], index: 3, kind: input, shape index: {}]
  %s4 = inlined_call_operand.vmem [shape: f32[1,32], index: 4, kind: input, shape index: {}]
  %s5 = inlined_call_operand.vmem [shape: f32[1,32], index: 5, kind: input, shape index: {}]
  %s6 = inlined_call_operand.vmem [shape: f32[40,32], index: 6, kind: output, shape index: {}]
  %s7 = sld [smem:[#allocation0]]
  $region42: #{_lambda_.18} parent=0
    _
  %s9 = ssub.s32 1, %s7
  %s10 = scalar_select 0, %s9, %s7
  // Predicated region
  $region2: #{_lambda_.18} parent=0 // pred_check
    _
  $region3: #{_lambda_.18} parent=0 // pred_check_branch
    %12 = sbr.rel (0) target = $region5
  $region4: #{_lambda_.18} parent=0 // pred_region
    _
  $region5: #{_lambda_.18} parent=0 // pred_fallthru
    _
  // Predicated region
  $region6: #{_lambda_.18} parent=0 // pred_check
    _
  $region7: #{_lambda_.18} parent=0 // pred_check_branch
    %14 = sbr.rel (0) target = $region9
  $region8: #{_lambda_.18} parent=0 // pred_region
    _
  $region9: #{_lambda_.18} parent=0 // pred_fallthru
    _
  // Predicated region
  $region10: #{_lambda_.18} parent=0 // pred_check
    _
  $region11: #{_lambda_.18} parent=0 // pred_check_branch
    %16 = sbr.rel (0) target = $region13
  $region12: #{_lambda_.18} parent=0 // pred_region
    _
  $region13: #{_lambda_.18} parent=0 // pred_fallthru
    _
  // Predicated region
  $region14: #{_lambda_.18} parent=0 // pred_check
    _
  $region15: #{_lambda_.18} parent=0 // pred_check_branch
    %18 = sbr.rel (0) target = $region17
  $region16: #{_lambda_.18} parent=0 // pred_region
    _
  $region17: #{_lambda_.18} parent=0 // pred_fallthru
    _
  // Predicated region
  $region18: #{_lambda_.18} parent=0 // pred_check
    _
  $region19: #{_lambda_.18} parent=0 // pred_check_branch
    %20 = sbr.rel (0) target = $region21
  $region20: #{_lambda_.18} parent=0 // pred_region
    _
  $region21: #{_lambda_.18} parent=0 // pred_fallthru
    _
  // Predicated region
  $region22: #{_lambda_.18} parent=0 // pred_check
    _
  $region23: #{_lambda_.18} parent=0 // pred_check_branch
    %22 = sbr.rel (0) target = $region25
  $region24: #{_lambda_.18} parent=0 // pred_region
    _
  $region25: #{_lambda_.18} parent=0 // pred_fallthru
    _
  %p24 = scmp.eq.s32.totalorder 0, 0
  // Predicated region
  $region26: #{_lambda_.18} parent=0 // pred_check
    %p25 = pneg %p24
  $region27: #{_lambda_.18} parent=0 // pred_check_branch
    %27 = sbr.rel (%p25) target = $region29
  $region28: #{_lambda_.18} parent=0 // pred_region
    %vm28 = vcmask 261120
    %29 = vst.msk [vmem:[#allocation2] sm:$0xff] %vm28, 0.0
    %30 = vst.msk [vmem:[#allocation2 + $0x8] sm:$0xff] %vm28, 0.0
    %31 = vst.msk [vmem:[#allocation2 + $0x10] sm:$0xff] %vm28, 0.0
    %32 = vst.msk [vmem:[#allocation2 + $0x18] sm:$0xff] %vm28, 0.0
    %33 = vst.msk [vmem:[#allocation2 + $0x20] sm:$0xff] %vm28, 0.0
  $region29: #{_lambda_.18} parent=0 // pred_fallthru
    _
  %v34 = vld [vmem:[#allocation2] sm:$0xff]
  %v35 = vld [vmem:[#allocation2 + $0x8] sm:$0xff]
  %v36 = vld [vmem:[#allocation2 + $0x10] sm:$0xff]
  %v37 = vld [vmem:[#allocation2 + $0x18] sm:$0xff]
  %v38 = vld [vmem:[#allocation2 + $0x20] sm:$0xff]
  %v39 = vld [vmem:[%s0] sm:$0xf]
  %v40 = vld [vmem:[%s0 + $0x4] sm:$0xf]
  %v41 = vld [vmem:[%s0 + $0x8] sm:$0xf]
  %v42 = vld [vmem:[%s0 + $0xc] sm:$0xf]
  %v43 = vld [vmem:[%s0 + $0x10] sm:$0xf]
  %v44 = vld [vmem:[%s1] sm:$0xf]
  %v45 = vld [vmem:[%s1 + $0x4] sm:$0xf]
  %v46 = vld [vmem:[%s1 + $0x8] sm:$0xf]
  %v47 = vld [vmem:[%s1 + $0xc] sm:$0xf]
  %v48 = vld [vmem:[%s1 + $0x10] sm:$0xf]
  %v49 = vld [vmem:[%s1 + $0x14] sm:$0xf]
  %v50 = vld [vmem:[%s1 + $0x18] sm:$0xf]
  %v51 = vld [vmem:[%s1 + $0x1c] sm:$0xf]
  %v57 = vunpack.c.l.b16 %v39
  %v58 = vunpack.c.l.b16 %v40
  %v59 = vunpack.c.l.b16 %v41
  %v60 = vunpack.c.l.b16 %v42
  %v61 = vunpack.c.l.b16 %v43
  %v62 = vpack.c.b16 %v58, %v57
  %v63 = vpack.c.b16 %v60, %v59
  %v64 = vpack.c.b16 %v61, %v61
  %v73 = vunpack.c.l.b16 %v44
  %v74 = vunpack.c.l.b16 %v45
  %v75 = vunpack.c.l.b16 %v46
  %v76 = vunpack.c.l.b16 %v47
  %v77 = vunpack.c.l.b16 %v48
  %v78 = vunpack.c.l.b16 %v49
  %v79 = vunpack.c.l.b16 %v50
  %v80 = vunpack.c.l.b16 %v51
  %v81 = vpack.c.b16 %v74, %v73
  %v82 = vpack.c.b16 %v76, %v75
  %v83 = vpack.c.b16 %v78, %v77
  %v84 = vpack.c.b16 %v80, %v79
  %vm89 = vcmask 523264
  %v91 = vsel %vm89, %v62, 0
  %v94 = vsel %vm89, %v63, 0
  %v97 = vsel %vm89, %v64, 0
  %99 = vmatprep.subr.bf16.mxu0 0
  %100 = vmatpush1.bf16.msra.mxu0 %v81
  %101 = vmatprep.subr.bf16.mxu0 0
  %102 = vmatpush1.bf16.msra.mxu0 %v82
  %103 = vmatprep.subr.bf16.mxu0 0
  %104 = vmatpush1.bf16.msra.mxu0 %v83
  %105 = vmatprep.subr.bf16.mxu0 0
  %106 = vmatpush1.bf16.msra.mxu0 %v84
  %107 = vmatprep.subr.bf16.mxu0 0
  %108 = vmatpush1.bf16.msra.mxu0 0
  %109 = vmatprep.subr.bf16.mxu0 0
  %110 = vmatpush1.bf16.msra.mxu0 0
  %111 = vmatprep.subr.bf16.mxu0 0
  %112 = vmatpush1.bf16.msra.mxu0 0
  %113 = vmatprep.subr.bf16.mxu0 0
  %114 = vmatpush1.bf16.msra.mxu0 0
  %115 = vmatprep.subr.bf16.mxu0 0
  %116 = vmatpush1.bf16.msra.mxu0 0
  %117 = vmatprep.subr.bf16.mxu0 0
  %118 = vmatpush1.bf16.msra.mxu0 0
  %119 = vmatprep.subr.bf16.mxu0 0
  %120 = vmatpush1.bf16.msra.mxu0 0
  %121 = vmatprep.subr.bf16.mxu0 0
  %122 = vmatpush1.bf16.msra.mxu0 0
  %123 = vmatprep.subr.bf16.mxu0 0
  %124 = vmatpush1.bf16.msra.mxu0 0
  %125 = vmatprep.subr.bf16.mxu0 0
  %126 = vmatpush1.bf16.msra.mxu0 0
  %127 = vmatprep.subr.bf16.mxu0 0
  %128 = vmatpush1.bf16.msra.mxu0 0
  %129 = vmatprep.subr.bf16.mxu0 0
  %130 = vmatpush1.bf16.msra.mxu0 0
  %131 = vmatprep.mubr.bf16.mxu0 0
  %132 = vmatmul.mubr.bf16.gmra.mrb[0].mxu0 %v91
  %v133 = vpop.f32.mrb[0].mxu0
  %v134 = vadd.f32 0.0, %v133
  %v135 = vpop.f32.mrb[0].mxu0
  %v136 = vpop.f32.mrb[0].mxu0
  %v137 = vadd.f32 0.0, %v136
  %v138 = vpop.f32.mrb[0].mxu0
  %139 = vmatprep.mubr.bf16.mxu0 0
  %140 = vmatmul.mubr.bf16.gmra.mrb[0].mxu0 %v94
  %v141 = vpop.f32.mrb[0].mxu0
  %v142 = vadd.f32 0.0, %v141
  %v143 = vpop.f32.mrb[0].mxu0
  %v144 = vpop.f32.mrb[0].mxu0
  %v145 = vadd.f32 0.0, %v144
  %v146 = vpop.f32.mrb[0].mxu0
  %147 = vmatprep.mubr.bf16.mxu0 0
  %148 = vmatmul.mubr.bf16.gmra.mrb[0].mxu0 %v97
  %v149 = vpop.f32.mrb[0].mxu0
  %v150 = vadd.f32 0.0, %v149
  %v151 = vpop.f32.mrb[0].mxu0
  %v152 = vpop.f32.mrb[0].mxu0
  %v153 = vpop.f32.mrb[0].mxu0
  %154 = vdwg.mxu0
  %v155 = vadd.f32 %v34, %v134
  %v156 = vadd.f32 %v35, %v137
  %v157 = vadd.f32 %v36, %v142
  %v158 = vadd.f32 %v37, %v145
  %v159 = vadd.f32 %v38, %v150
  %vm160 = vcmask 261120
  %161 = vst.msk [vmem:[#allocation2] sm:$0xff] %vm160, %v155
  %162 = vst.msk [vmem:[#allocation2 + $0x8] sm:$0xff] %vm160, %v156
  %163 = vst.msk [vmem:[#allocation2 + $0x10] sm:$0xff] %vm160, %v157
  %164 = vst.msk [vmem:[#allocation2 + $0x18] sm:$0xff] %vm160, %v158
  %165 = vst.msk [vmem:[#allocation2 + $0x20] sm:$0xff] %vm160, %v159
  // Predicated region
  $region30: #{_lambda_.18} parent=0 // pred_check
    %p166 = pneg %p24
  $region31: #{_lambda_.18} parent=0 // pred_check_branch
    %168 = sbr.rel (%p166) target = $region33
  $region32: #{_lambda_.18} parent=0 // pred_region
    %v169 = vld [vmem:[#allocation2] sm:$0xff]
    %v170 = vld [vmem:[#allocation2 + $0x8] sm:$0xff]
    %v171 = vld [vmem:[#allocation2 + $0x10] sm:$0xff]
    %v172 = vld [vmem:[#allocation2 + $0x18] sm:$0xff]
    %v173 = vld [vmem:[#allocation2 + $0x20] sm:$0xff]
    %v174 = vld [vmem:[%s2] sm:$0x1]
    %v176 = vlaneseq
    %v177 = vshrl.u32 %v176, 7
    %v178 = vsub.s32 0, %v177
    %v179 = vrot.slane %v174, %v178
    %v181 = vadd.f32 %v169, %v179
    %v182 = vadd.f32 %v170, %v179
    %v183 = vadd.f32 %v171, %v179
    %v184 = vadd.f32 %v172, %v179
    %v185 = vadd.f32 %v173, %v179
    %v186 = vld [vmem:[%s3] sm:$0xff]
    %v187 = vld [vmem:[%s3 + $0x8] sm:$0xff]
    %v188 = vld [vmem:[%s3 + $0x10] sm:$0xff]
    %v189 = vld [vmem:[%s3 + $0x18] sm:$0xff]
    %v190 = vld [vmem:[%s3 + $0x20] sm:$0xff]
    %v191 = vadd.f32 %v181, %v186
    %v192 = vadd.f32 %v182, %v187
    %v193 = vadd.f32 %v183, %v188
    %v194 = vadd.f32 %v184, %v189
    %v195 = vadd.f32 %v185, %v190
    %v196 = vsel %vm160, %v191, 0.0
    %197 = vadd.xlane.f32.xlu0 %v196
    %v198 = vpop.xlane.xlu0 %197
    %v199 = vsel %vm160, %v192, 0.0
    %200 = vadd.xlane.f32.xlu0 %v199
    %v201 = vpop.xlane.xlu0 %200
    %v202 = vsel %vm160, %v193, 0.0
    %203 = vadd.xlane.f32.xlu0 %v202
    %v204 = vpop.xlane.xlu0 %203
    %v205 = vsel %vm160, %v194, 0.0
    %206 = vadd.xlane.f32.xlu0 %v205
    %v207 = vpop.xlane.xlu0 %206
    %v208 = vsel %vm160, %v195, 0.0
    %209 = vadd.xlane.f32.xlu0 %v208
    %v210 = vpop.xlane.xlu0 %209
    %v211 = vrcp.pop 32.0
    %v212 = vmul.f32 %v198, %v211
    %v213 = vmul.f32 %v201, %v211
    %v214 = vmul.f32 %v204, %v211
    %v215 = vmul.f32 %v207, %v211
    %v216 = vmul.f32 %v210, %v211
    %v217 = vsub.f32 %v191, %v212
    %v218 = vsub.f32 %v192, %v213
    %v219 = vsub.f32 %v193, %v214
    %v220 = vsub.f32 %v194, %v215
    %v221 = vsub.f32 %v195, %v216
    %v222 = vmul.f32 %v217, %v217
    %v223 = vmul.f32 %v218, %v218
    %v224 = vmul.f32 %v219, %v219
    %v225 = vmul.f32 %v220, %v220
    %v226 = vmul.f32 %v221, %v221
    %v227 = vsel %vm160, %v222, 0.0
    %228 = vadd.xlane.f32.xlu0 %v227
    %v229 = vpop.xlane.xlu0 %228
    %v230 = vsel %vm160, %v223, 0.0
    %231 = vadd.xlane.f32.xlu0 %v230
    %v232 = vpop.xlane.xlu0 %231
    %v233 = vsel %vm160, %v224, 0.0
    %234 = vadd.xlane.f32.xlu0 %v233
    %v235 = vpop.xlane.xlu0 %234
    %v236 = vsel %vm160, %v225, 0.0
    %237 = vadd.xlane.f32.xlu0 %v236
    %v238 = vpop.xlane.xlu0 %237
    %v239 = vsel %vm160, %v226, 0.0
    %240 = vadd.xlane.f32.xlu0 %v239
    %v241 = vpop.xlane.xlu0 %240
    %v242 = vmul.f32 %v229, %v211
    %v243 = vmul.f32 %v232, %v211
    %v244 = vmul.f32 %v235, %v211
    %v245 = vmul.f32 %v238, %v211
    %v246 = vmul.f32 %v241, %v211
    %v247 = vadd.f32 %v242, 1e-05
    %v248 = vadd.f32 %v243, 1e-05
    %v249 = vadd.f32 %v244, 1e-05
    %v250 = vadd.f32 %v245, 1e-05
    %v251 = vadd.f32 %v246, 1e-05
    %v252 = vrsqrt.pop %v247
    %v253 = vrsqrt.pop %v248
    %v254 = vrsqrt.pop %v249
    %v255 = vrsqrt.pop %v250
    %v256 = vrsqrt.pop %v251
    %v257 = vmul.f32 %v217, %v252
    %v258 = vmul.f32 %v218, %v253
    %v259 = vmul.f32 %v219, %v254
    %v260 = vmul.f32 %v220, %v255
    %v261 = vmul.f32 %v221, %v256
    %v262 = vld [vmem:[%s4] sm:$0x1]
    %v264 = vlaneseq
    %v265 = vshrl.u32 %v264, 7
    %v266 = vsub.s32 0, %v265
    %v267 = vrot.slane %v262, %v266
    %v269 = vmul.f32 %v257, %v267
    %v270 = vmul.f32 %v258, %v267
    %v271 = vmul.f32 %v259, %v267
    %v272 = vmul.f32 %v260, %v267
    %v273 = vmul.f32 %v261, %v267
    %v274 = vld [vmem:[%s5] sm:$0x1]
    %v276 = vlaneseq
    %v277 = vshrl.u32 %v276, 7
    %v278 = vsub.s32 0, %v277
    %v279 = vrot.slane %v274, %v278
    %v281 = vadd.f32 %v269, %v279
    %v282 = vadd.f32 %v270, %v279
    %v283 = vadd.f32 %v271, %v279
    %v284 = vadd.f32 %v272, %v279
    %v285 = vadd.f32 %v273, %v279
    %286 = vst.msk [vmem:[%s6] sm:$0xff] %vm160, %v281
    %287 = vst.msk [vmem:[%s6 + $0x8] sm:$0xff] %vm160, %v282
    %288 = vst.msk [vmem:[%s6 + $0x10] sm:$0xff] %vm160, %v283
    %289 = vst.msk [vmem:[%s6 + $0x18] sm:$0xff] %vm160, %v284
    %290 = vst.msk [vmem:[%s6 + $0x20] sm:$0xff] %vm160, %v285
  $region33: #{_lambda_.18} parent=0 // pred_fallthru
    _
  // Predicated region
  $region34: #{_lambda_.18} parent=0 // pred_check
    _
  $region35: #{_lambda_.18} parent=0 // pred_check_branch
    %292 = sbr.rel (0) target = $region37
  $region36: #{_lambda_.18} parent=0 // pred_region
    _
  $region37: #{_lambda_.18} parent=0 // pred_fallthru
    _
  // Predicated region
  $region38: #{_lambda_.18} parent=0 // pred_check
    _
  $region39: #{_lambda_.18} parent=0 // pred_check_branch
    %294 = sbr.rel (0) target = $region41
  $region40: #{_lambda_.18} parent=0 // pred_region
    _
  $region41: #{_lambda_.18} parent=0 // pred_fallthru
    _

// kernel: _lambda_.25
$region0: #{_lambda_.25}
  #allocation0 [shape = 'u32[]', space=smem, size = 0x4, offset = 0x4, fixed_abs, tag = 'smem constant byte address 0x4 - core index']
  #allocation1 [shape = 'u32[144,128]{1,0:T(1,128)}', space=vmem, size = 0x12000, scoped, tag = 'internal scratch']
  #allocation2 [shape = 'f32[32,4]{1,0:T(8,128)}', space=vmem, size = 0x4000, scoped, tag = 'scratch operand']
  %s0 = inlined_call_operand.vmem [shape: f32[32,32], index: 0, kind: input, shape index: {}]
  %s1 = inlined_call_operand.vmem [shape: f32[32,4], index: 1, kind: input, shape index: {}]
  %s2 = inlined_call_operand.vmem [shape: f32[1,4], index: 2, kind: input, shape index: {}]
  %s3 = inlined_call_operand.vmem [shape: f32[32,4], index: 3, kind: output, shape index: {}]
  %s4 = sld [smem:[#allocation0]]
  $region30: #{_lambda_.25} parent=0
    _
  %s6 = ssub.s32 1, %s4
  %s7 = scalar_select 0, %s6, %s4
  // Predicated region
  $region2: #{_lambda_.25} parent=0 // pred_check
    _
  $region3: #{_lambda_.25} parent=0 // pred_check_branch
    %9 = sbr.rel (0) target = $region5
  $region4: #{_lambda_.25} parent=0 // pred_region
    _
  $region5: #{_lambda_.25} parent=0 // pred_fallthru
    _
  // Predicated region
  $region6: #{_lambda_.25} parent=0 // pred_check
    _
  $region7: #{_lambda_.25} parent=0 // pred_check_branch
    %11 = sbr.rel (0) target = $region9
  $region8: #{_lambda_.25} parent=0 // pred_region
    _
  $region9: #{_lambda_.25} parent=0 // pred_fallthru
    _
  // Predicated region
  $region10: #{_lambda_.25} parent=0 // pred_check
    _
  $region11: #{_lambda_.25} parent=0 // pred_check_branch
    %13 = sbr.rel (0) target = $region13
  $region12: #{_lambda_.25} parent=0 // pred_region
    _
  $region13: #{_lambda_.25} parent=0 // pred_fallthru
    _
  %p14 = scmp.eq.s32.totalorder 0, 0
  // Predicated region
  $region14: #{_lambda_.25} parent=0 // pred_check
    %p15 = pneg %p14
  $region15: #{_lambda_.25} parent=0 // pred_check_branch
    %17 = sbr.rel (%p15) target = $region17
  $region16: #{_lambda_.25} parent=0 // pred_region
    %vm18 = vcmask 31744
    %19 = vst.msk [vmem:[#allocation2] sm:$0xff] %vm18, 0.0
    %20 = vst.msk [vmem:[#allocation2 + $0x8] sm:$0xff] %vm18, 0.0
    %21 = vst.msk [vmem:[#allocation2 + $0x10] sm:$0xff] %vm18, 0.0
    %22 = vst.msk [vmem:[#allocation2 + $0x18] sm:$0xff] %vm18, 0.0
  $region17: #{_lambda_.25} parent=0 // pred_fallthru
    _
  %v23 = vld [vmem:[#allocation2] sm:$0xff]
  %v24 = vld [vmem:[#allocation2 + $0x8] sm:$0xff]
  %v25 = vld [vmem:[#allocation2 + $0x10] sm:$0xff]
  %v26 = vld [vmem:[#allocation2 + $0x18] sm:$0xff]
  %v27 = vld [vmem:[%s0] sm:$0xff]
  %v28 = vld [vmem:[%s0 + $0x8] sm:$0xff]
  %v29 = vld [vmem:[%s0 + $0x10] sm:$0xff]
  %v30 = vld [vmem:[%s0 + $0x18] sm:$0xff]
  %v31 = vld [vmem:[%s1] sm:$0xff]
  %v32 = vld [vmem:[%s1 + $0x8] sm:$0xff]
  %v33 = vld [vmem:[%s1 + $0x10] sm:$0xff]
  %v34 = vld [vmem:[%s1 + $0x18] sm:$0xff]
  %vm35 = vcmask 261120
  %v37 = vsel %vm35, %v27, 0
  %v40 = vsel %vm35, %v28, 0
  %v43 = vsel %vm35, %v29, 0
  %v46 = vsel %vm35, %v30, 0
  %48 = vmatprep.subr.mxu0 0.0
  %49 = vmatpush1.msra.mxu0 %v31
  %50 = vmatprep.subr.mxu0 0.0
  %51 = vmatpush1.msra.mxu0 %v32
  %52 = vmatprep.subr.mxu0 0.0
  %53 = vmatpush1.msra.mxu0 %v33
  %54 = vmatprep.subr.mxu0 0.0
  %55 = vmatpush1.msra.mxu0 %v34
  %56 = vmatprep.subr.mxu0 0.0
  %57 = vmatpush1.msra.mxu0 0.0
  %58 = vmatprep.subr.mxu0 0.0
  %59 = vmatpush1.msra.mxu0 0.0
  %60 = vmatprep.subr.mxu0 0.0
  %61 = vmatpush1.msra.mxu0 0.0
  %62 = vmatprep.subr.mxu0 0.0
  %63 = vmatpush1.msra.mxu0 0.0
  %64 = vmatprep.subr.mxu0 0.0
  %65 = vmatpush1.msra.mxu0 0.0
  %66 = vmatprep.subr.mxu0 0.0
  %67 = vmatpush1.msra.mxu0 0.0
  %68 = vmatprep.subr.mxu0 0.0
  %69 = vmatpush1.msra.mxu0 0.0
  %70 = vmatprep.subr.mxu0 0.0
  %71 = vmatpush1.msra.mxu0 0.0
  %72 = vmatprep.subr.mxu0 0.0
  %73 = vmatpush1.msra.mxu0 0.0
  %74 = vmatprep.subr.mxu0 0.0
  %75 = vmatpush1.msra.mxu0 0.0
  %76 = vmatprep.subr.mxu0 0.0
  %77 = vmatpush1.msra.mxu0 0.0
  %78 = vmatprep.subr.mxu0 0.0
  %79 = vmatpush1.msra.mxu0 0.0
  %80 = vmatprep.subr.mxu0 0.0
  %81 = vmatpush1.msra.mxu0 0.0
  %82 = vmatprep.subr.mxu0 0.0
  %83 = vmatpush1.msra.mxu0 0.0
  %84 = vmatprep.subr.mxu0 0.0
  %85 = vmatpush1.msra.mxu0 0.0
  %86 = vmatprep.subr.mxu0 0.0
  %87 = vmatpush1.msra.mxu0 0.0
  %88 = vmatprep.subr.mxu0 0.0
  %89 = vmatpush1.msra.mxu0 0.0
  %90 = vmatprep.subr.mxu0 0.0
  %91 = vmatpush1.msra.mxu0 0.0
  %92 = vmatprep.subr.mxu0 0.0
  %93 = vmatpush1.msra.mxu0 0.0
  %94 = vmatprep.subr.mxu0 0.0
  %95 = vmatpush1.msra.mxu0 0.0
  %96 = vmatprep.subr.mxu0 0.0
  %97 = vmatpush1.msra.mxu0 0.0
  %98 = vmatprep.subr.mxu0 0.0
  %99 = vmatpush1.msra.mxu0 0.0
  %100 = vmatprep.subr.mxu0 0.0
  %101 = vmatpush1.msra.mxu0 0.0
  %102 = vmatprep.subr.mxu0 0.0
  %103 = vmatpush1.msra.mxu0 0.0
  %104 = vmatprep.subr.mxu0 0.0
  %105 = vmatpush1.msra.mxu0 0.0
  %106 = vmatprep.subr.mxu0 0.0
  %107 = vmatpush1.msra.mxu0 0.0
  %108 = vmatprep.subr.mxu0 0.0
  %109 = vmatpush1.msra.mxu0 0.0
  %110 = vmatprep.subr.mxu0 0.0
  %111 = vmatpush1.msra.mxu0 0.0
  %112 = vmatprep.mubr.f32.mxu0 0.0
  %113 = vmatmul.mubr.f32.gmra.mrb[0].mxu0 %v37
  %v114 = vpop.f32.mrb[0].mxu0
  %v115 = vadd.f32 0.0, %v114
  %v116 = vpop.f32.mrb[0].mxu0
  %117 = vmatprep.mubr.f32.mxu0 0.0
  %118 = vmatmul.mubr.f32.gmra.mrb[0].mxu0 %v40
  %v119 = vpop.f32.mrb[0].mxu0
  %v120 = vadd.f32 0.0, %v119
  %v121 = vpop.f32.mrb[0].mxu0
  %122 = vmatprep.mubr.f32.mxu0 0.0
  %123 = vmatmul.mubr.f32.gmra.mrb[0].mxu0 %v43
  %v124 = vpop.f32.mrb[0].mxu0
  %v125 = vadd.f32 0.0, %v124
  %v126 = vpop.f32.mrb[0].mxu0
  %127 = vmatprep.mubr.f32.mxu0 0.0
  %128 = vmatmul.mubr.f32.gmra.mrb[0].mxu0 %v46
  %v129 = vpop.f32.mrb[0].mxu0
  %v130 = vadd.f32 0.0, %v129
  %v131 = vpop.f32.mrb[0].mxu0
  %132 = vdwg.mxu0
  %v133 = vadd.f32 %v23, %v115
  %v134 = vadd.f32 %v24, %v120
  %v135 = vadd.f32 %v25, %v125
  %v136 = vadd.f32 %v26, %v130
  %vm137 = vcmask 31744
  %138 = vst.msk [vmem:[#allocation2] sm:$0xff] %vm137, %v133
  %139 = vst.msk [vmem:[#allocation2 + $0x8] sm:$0xff] %vm137, %v134
  %140 = vst.msk [vmem:[#allocation2 + $0x10] sm:$0xff] %vm137, %v135
  %141 = vst.msk [vmem:[#allocation2 + $0x18] sm:$0xff] %vm137, %v136
  // Predicated region
  $region18: #{_lambda_.25} parent=0 // pred_check
    %p142 = pneg %p14
  $region19: #{_lambda_.25} parent=0 // pred_check_branch
    %144 = sbr.rel (%p142) target = $region21
  $region20: #{_lambda_.25} parent=0 // pred_region
    %v145 = vld [vmem:[#allocation2] sm:$0xff]
    %v146 = vld [vmem:[#allocation2 + $0x8] sm:$0xff]
    %v147 = vld [vmem:[#allocation2 + $0x10] sm:$0xff]
    %v148 = vld [vmem:[#allocation2 + $0x18] sm:$0xff]
    %v149 = vld [vmem:[%s2] sm:$0x1]
    %v151 = vlaneseq
    %v152 = vshrl.u32 %v151, 7
    %v153 = vsub.s32 0, %v152
    %v154 = vrot.slane %v149, %v153
    %v156 = vadd.f32 %v145, %v154
    %v157 = vadd.f32 %v146, %v154
    %v158 = vadd.f32 %v147, %v154
    %v159 = vadd.f32 %v148, %v154
    %160 = vst.msk [vmem:[%s3] sm:$0xff] %vm137, %v156
    %161 = vst.msk [vmem:[%s3 + $0x8] sm:$0xff] %vm137, %v157
    %162 = vst.msk [vmem:[%s3 + $0x10] sm:$0xff] %vm137, %v158
    %163 = vst.msk [vmem:[%s3 + $0x18] sm:$0xff] %vm137, %v159
  $region21: #{_lambda_.25} parent=0 // pred_fallthru
    _
  // Predicated region
  $region22: #{_lambda_.25} parent=0 // pred_check
    _
  $region23: #{_lambda_.25} parent=0 // pred_check_branch
    %165 = sbr.rel (0) target = $region25
  $region24: #{_lambda_.25} parent=0 // pred_region
    _
  $region25: #{_lambda_.25} parent=0 // pred_fallthru
    _
  // Predicated region
  $region26: #{_lambda_.25} parent=0 // pred_check
    _
  $region27: #{_lambda_.25} parent=0 // pred_check_branch
    %167 = sbr.rel (0) target = $region29
  $region28: #{_lambda_.25} parent=0 // pred_region
    _
  $region29: #{_lambda_.25} parent=0 // pred_fallthru
    _

</llo_original>
